<compile_context>
chip_gen: v7x
topology: tpu7x:2x2x1
jax: 0.10.0
libtpu: 0.0.40
codegen_flags: <defaults>
</compile_context>

<pallas_src>
import jax
import jax.numpy as jnp
from jax.experimental import pallas as pl
from jax.experimental.pallas import tpu as pltpu

IN_DIM = 17          # solution_u input dim (16 spatial + 1 time)
HID = 60             # encoder hidden dim
ENC = 32             # encoder output dim
PRED_HID = 32        # predictor hidden dim
F_IN = 35            # dynamical_F input dim = 17 + 1 + 16 + 1
F_HID = 60           # args.F_hidden_dim (chosen)
TB_MAX = 512         # max batch tile (lane axis)


def pinn_kernel(x_ref,
                # --- solution_u forward weights (feature-major: h = W @ x), gates folded ---
                w0, w123, w4, wp1, wp2c,
                # --- solution_u biases as [out, 1] columns (hidden ones packed) ---
                b0, b123, b4, bp1, bp2,
                # --- solution_u backward weights (transposed, gates folded) ---
                w0t, w123t, w4t, wp1t,
                # --- dynamical_F weights / biases (gates folded) ---
                v0a, v0u, v0b, v1, v2, v3c,
                c0, c12, c3,
                # --- packed output: row 0 = u, row 1 = u_t - F ---
                out_ref):
    X = x_ref[...]                                            # [17, TB]

    def mm(w, x):
        return jnp.dot(w, x, preferred_element_type=jnp.float32)

    # ---------------- solution_u forward (attn gates folded into next layer) ----------------
    r0 = jnp.maximum(mm(w0[...], X) + b0[...], 0.0)           # [60, TB]  relu(z0)
    r1 = jnp.maximum(mm(w123[0], r0) + b123[:, 0:1], 0.0)     # relu(z1)
    r2 = jnp.maximum(mm(w123[1], r1) + b123[:, 1:2], 0.0)     # relu(z2)
    r3 = jnp.maximum(mm(w123[2], r2) + b123[:, 2:3], 0.0)     # relu(z3)
    enc = mm(w4[...], r3) + b4[...]                           # [32, TB]
    p1 = jnp.maximum(mm(wp1[...], enc) + bp1[...], 0.0)       # [32, TB]
    # M=1 head as VPU multiply + sublane reduce (no MXU push)
    u = jnp.sum(wp2c[...] * p1, axis=0, keepdims=True) + bp2[...]   # [1, TB]

    # -------------- manual reverse-mode: d(sum u)/d xt --------------
    # Folded transposed weights already carry the sigmoid gates; relu masks come
    # straight from the (un-gated) post-activation values r*.
    g_p = jnp.where(p1 > 0, wp2c[...], 0.0)                   # [32, TB]
    g_enc = mm(wp1t[...], g_p)                                # [32, TB]
    g3 = jnp.where(r3 > 0, mm(w4t[...], g_enc), 0.0)          # [60, TB]
    g2 = jnp.where(r2 > 0, mm(w123t[2], g3), 0.0)
    g1 = jnp.where(r1 > 0, mm(w123t[1], g2), 0.0)
    g0 = jnp.where(r0 > 0, mm(w123t[0], g1), 0.0)
    g_x = mm(w0t[...], g0)                                    # [17, TB] = [u_x ; u_t]
    u_t = g_x[IN_DIM - 1:IN_DIM, :]                           # [1, TB]

    # ---------------- dynamical_F forward ----------------
    # F input rows: 0:17 -> xt, 17 -> u (rank-1 VPU FMA), 18:35 -> [u_x ; u_t] = g_x
    zf0 = (mm(v0a[...], X) + mm(v0b[...], g_x)
           + v0u[...] * u + c0[...])                          # [60, TB]
    rf0 = jnp.maximum(zf0, 0.0)
    rf1 = jnp.maximum(mm(v1[...], rf0) + c12[:, 0:1], 0.0)
    rf2 = jnp.maximum(mm(v2[...], rf1) + c12[:, 1:2], 0.0)
    f = jnp.sum(v3c[...] * rf2, axis=0, keepdims=True) + c3[...]   # [1, TB]

    out_ref[...] = jnp.concatenate([u, u_t - f], axis=0)      # [2, TB]


def _choose_tiles(B, tb_max=TB_MAX):
    """Lane-aligned tile size (multiple of 128) minimizing padded rows, then
    preferring >=2 grid steps (v7x megacore), then fewer steps."""
    best = None
    tb = 128
    while True:
        n = -(-B // tb)
        waste = n * tb - B
        cand = (waste, 0 if n >= 2 else 1, n, tb)
        if best is None or cand < best:
            best = cand
        if tb >= tb_max or tb >= B:
            break
        tb *= 2
    return best[2], best[3]


def pinn_forward(xt, p, *, tb_max=TB_MAX):
    """Returns (u, u_t - F), each [B, 1] float32. `p` is the parameter dict."""
    B = xt.shape[0]
    n_tiles, tb = _choose_tiles(B, tb_max)
    b_pad = n_tiles * tb

    # Feature-major input: [17, B] (batch on the 128-lane axis), padded columns are zero.
    xt_t = jnp.transpose(xt.astype(jnp.float32))
    if b_pad != B:
        xt_t = jnp.pad(xt_t, ((0, 0), (0, b_pad - B)))

    # ---- wrapper-side prep (loop invariant): sigmoid gates folded into weights ----
    s1 = jax.nn.sigmoid(p["a1"])
    s2 = jax.nn.sigmoid(p["a2"])
    s3 = jax.nn.sigmoid(p["a3"])
    sF1 = jax.nn.sigmoid(p["af1"])
    sF2 = jax.nn.sigmoid(p["af2"])
    w2f = p["w2"] * s1           # (W diag(s)) : scale columns by the gate of the previous layer
    w3f = p["w3"] * s2
    w4f = p["w4"] * s3
    v2f = p["v2"] * sF1
    v3f = p["v3"] * sF2          # [1, 60]

    w123 = jnp.stack([p["w1"], w2f, w3f])                       # [3, 60, 60] forward
    w123t = jnp.stack([p["w1"].T, w2f.T, w3f.T])                # [3, 60, 60] backward
    b123 = jnp.concatenate([p["b1"].T, p["b2"].T, p["b3"].T], axis=1)   # [60, 3]
    c12 = jnp.concatenate([p["c1"].T, p["c2"].T], axis=1)               # [60, 2]
    v0 = p["v0"]                                                 # [60, 35]

    args = (
        p["w0"], w123, w4f, p["wp1"], p["wp2"].T,
        p["b0"].T, b123, p["b4"].T, p["bp1"].T, p["bp2"].T,
        p["w0"].T, w123t, w4f.T, p["wp1"].T,
        v0[:, :IN_DIM], v0[:, IN_DIM:IN_DIM + 1], v0[:, IN_DIM + 1:],
        p["v1"], v2f, v3f.T,
        p["c0"].T, c12, p["c3"].T,
    )

    in_specs = [pl.BlockSpec((IN_DIM, tb), lambda i: (0, i))]
    in_specs += [pl.BlockSpec(a.shape, lambda i, n=a.ndim: (0,) * n) for a in args]
    out_spec = pl.BlockSpec((2, tb), lambda i: (0, i))           # lane-dense output tile

    weight_bytes = 4 * sum(int(a.size) for a in args)
    macs_per_row = (IN_DIM * HID + 3 * HID * HID + HID * ENC + ENC * PRED_HID + PRED_HID
                    + PRED_HID * ENC + ENC * HID + 3 * HID * HID + HID * IN_DIM
                    + 2 * IN_DIM * F_HID + F_HID + 2 * F_HID * F_HID + F_HID)

    out = pl.pallas_call(
        pinn_kernel,
        grid=(n_tiles,),
        in_specs=in_specs,
        out_specs=out_spec,
        out_shape=jax.ShapeDtypeStruct((2, b_pad), jnp.float32),
        compiler_params=pltpu.CompilerParams(
            dimension_semantics=("parallel",)),
        cost_estimate=pl.CostEstimate(
            flops=2 * macs_per_row * b_pad,
            transcendentals=0,
            bytes_accessed=weight_bytes + 4 * (IN_DIM + 2) * b_pad),
    )(xt_t, *args)

    return out[0:1, :B].T, out[1:2, :B].T                       # each [B, 1]


# ----------------- deterministic parameter construction -----------------
def _xavier(key, out_d, in_d):
    std = (2.0 / (in_d + out_d)) ** 0.5
    return std * jax.random.normal(key, (out_d, in_d), jnp.float32)


def make_params(key):
    keys = iter(jax.random.split(key, 32))
    p = {}
    # solution_u encoder: Linear(17,60) + 3x [Linear(60,60)+attn] + Linear(60,32)
    p["w0"] = _xavier(next(keys), HID, IN_DIM); p["b0"] = jnp.zeros((1, HID), jnp.float32)
    for i in (1, 2, 3):
        p[f"w{i}"] = _xavier(next(keys), HID, HID)
        p[f"b{i}"] = jnp.zeros((1, HID), jnp.float32)
        p[f"a{i}"] = jax.random.normal(next(keys), (1, HID), jnp.float32)
    p["w4"] = _xavier(next(keys), ENC, HID); p["b4"] = jnp.zeros((1, ENC), jnp.float32)
    # predictor: Linear(32,32), Linear(32,1)
    p["wp1"] = _xavier(next(keys), PRED_HID, ENC); p["bp1"] = jnp.zeros((1, PRED_HID), jnp.float32)
    p["wp2"] = _xavier(next(keys), 1, PRED_HID);   p["bp2"] = jnp.zeros((1, 1), jnp.float32)
    # dynamical_F: Linear(35,60) + 2x [Linear(60,60)+attn] + Linear(60,1)
    p["v0"] = _xavier(next(keys), F_HID, F_IN); p["c0"] = jnp.zeros((1, F_HID), jnp.float32)
    for i in (1, 2):
        p[f"v{i}"] = _xavier(next(keys), F_HID, F_HID)
        p[f"c{i}"] = jnp.zeros((1, F_HID), jnp.float32)
        p[f"af{i}"] = jax.random.normal(next(keys), (1, F_HID), jnp.float32)
    p["v3"] = _xavier(next(keys), 1, F_HID); p["c3"] = jnp.zeros((1, 1), jnp.float32)
    return p


# ----------------- pure-JAX reference (uses jax autodiff) -----------------
def _ref_lin(x, w, b):
    return x @ w.T + b


def ref_forward(xt, p):
    def sol_u(z):
        h = jax.nn.relu(_ref_lin(z, p["w0"], p["b0"]))
        for i in (1, 2, 3):
            h = jax.nn.relu(_ref_lin(h, p[f"w{i}"], p[f"b{i}"]))
            h = h * jax.nn.sigmoid(p[f"a{i}"])
        h = _ref_lin(h, p["w4"], p["b4"])
        h = jax.nn.relu(_ref_lin(h, p["wp1"], p["bp1"]))
        return _ref_lin(h, p["wp2"], p["bp2"])

    u = sol_u(xt)
    g = jax.grad(lambda z: jnp.sum(sol_u(z)))(xt)
    u_x, u_t = g[:, :IN_DIM - 1], g[:, IN_DIM - 1:IN_DIM]

    z = jnp.concatenate([xt, u, u_x, u_t], axis=1)
    h = jax.nn.relu(_ref_lin(z, p["v0"], p["c0"]))
    for i in (1, 2):
        h = jax.nn.relu(_ref_lin(h, p[f"v{i}"], p[f"c{i}"]))
        h = h * jax.nn.sigmoid(p[f"af{i}"])
    F = _ref_lin(h, p["v3"], p["c3"])
    return u, u_t - F


if __name__ == "__main__":
    key = jax.random.PRNGKey(0)
    k_x, k_p, k_x2 = jax.random.split(key, 3)
    params = make_params(k_p)

    # Small primary check (B=8 -> single 128-wide tile, padded lanes sliced off).
    B = 8
    xt = jax.random.normal(k_x, (B, IN_DIM), jnp.float32)
    u, res = pinn_forward(xt, params)
    jax.block_until_ready((u, res))
    u_ref, res_ref = ref_forward(xt, params)
    assert u.shape == (B, 1) and res.shape == (B, 1)
    assert jnp.allclose(u, u_ref, atol=1e-4, rtol=1e-4)
    assert jnp.allclose(res, res_ref, atol=1e-4, rtol=1e-4)

    # Secondary check exercising a multi-step grid (B=300 -> 3 tiles of 128) and padding.
    B2 = 300
    xt2 = jax.random.normal(k_x2, (B2, IN_DIM), jnp.float32)
    u2, res2 = pinn_forward(xt2, params)
    jax.block_until_ready((u2, res2))
    u2_ref, res2_ref = ref_forward(xt2, params)
    assert u2.shape == (B2, 1) and res2.shape == (B2, 1)
    assert jnp.allclose(u2, u2_ref, atol=1e-4, rtol=1e-4)
    assert jnp.allclose(res2, res2_ref, atol=1e-4, rtol=1e-4)

    print("KERNEL_OK")
</pallas_src>

<mosaic_0001>
module attributes {stable_mosaic.version = 11 : i64} {
  func.func @pinn_kernel(%arg0: i32, %arg1: memref<17x128xf32, #tpu.memory_space<vmem>>, %arg2: memref<60x17xf32, #tpu.memory_space<vmem>>, %arg3: memref<3x60x60xf32, #tpu.memory_space<vmem>>, %arg4: memref<32x60xf32, #tpu.memory_space<vmem>>, %arg5: memref<32x32xf32, #tpu.memory_space<vmem>>, %arg6: memref<32x1xf32, #tpu.memory_space<vmem>>, %arg7: memref<60x1xf32, #tpu.memory_space<vmem>>, %arg8: memref<60x3xf32, #tpu.memory_space<vmem>>, %arg9: memref<32x1xf32, #tpu.memory_space<vmem>>, %arg10: memref<32x1xf32, #tpu.memory_space<vmem>>, %arg11: memref<1x1xf32, #tpu.memory_space<vmem>>, %arg12: memref<17x60xf32, #tpu.memory_space<vmem>>, %arg13: memref<3x60x60xf32, #tpu.memory_space<vmem>>, %arg14: memref<60x32xf32, #tpu.memory_space<vmem>>, %arg15: memref<32x32xf32, #tpu.memory_space<vmem>>, %arg16: memref<60x17xf32, #tpu.memory_space<vmem>>, %arg17: memref<60x1xf32, #tpu.memory_space<vmem>>, %arg18: memref<60x17xf32, #tpu.memory_space<vmem>>, %arg19: memref<60x60xf32, #tpu.memory_space<vmem>>, %arg20: memref<60x60xf32, #tpu.memory_space<vmem>>, %arg21: memref<60x1xf32, #tpu.memory_space<vmem>>, %arg22: memref<60x1xf32, #tpu.memory_space<vmem>>, %arg23: memref<60x2xf32, #tpu.memory_space<vmem>>, %arg24: memref<1x1xf32, #tpu.memory_space<vmem>>, %arg25: memref<2x128xf32, #tpu.memory_space<vmem>>) attributes {dimension_semantics = [#tpu.dimension_semantics<parallel>], iteration_bounds = array<i64: 1>, scalar_prefetch = 0 : i64, scratch_operands = 0 : i64, tpu.core_type = #tpu.core_type<tc>, window_params = [{transform_indices = @transform_0, window_bounds = array<i64: 17, 128>}, {pipeline_mode = #tpu.pipeline_mode<synchronous>, transform_indices = @transform_1, window_bounds = array<i64: 60, 17>}, {pipeline_mode = #tpu.pipeline_mode<synchronous>, transform_indices = @transform_2, window_bounds = array<i64: 3, 60, 60>}, {pipeline_mode = #tpu.pipeline_mode<synchronous>, transform_indices = @transform_3, window_bounds = array<i64: 32, 60>}, {pipeline_mode = #tpu.pipeline_mode<synchronous>, transform_indices = @transform_4, window_bounds = array<i64: 32, 32>}, {pipeline_mode = #tpu.pipeline_mode<synchronous>, transform_indices = @transform_5, window_bounds = array<i64: 32, 1>}, {pipeline_mode = #tpu.pipeline_mode<synchronous>, transform_indices = @transform_6, window_bounds = array<i64: 60, 1>}, {pipeline_mode = #tpu.pipeline_mode<synchronous>, transform_indices = @transform_7, window_bounds = array<i64: 60, 3>}, {pipeline_mode = #tpu.pipeline_mode<synchronous>, transform_indices = @transform_8, window_bounds = array<i64: 32, 1>}, {pipeline_mode = #tpu.pipeline_mode<synchronous>, transform_indices = @transform_9, window_bounds = array<i64: 32, 1>}, {pipeline_mode = #tpu.pipeline_mode<synchronous>, transform_indices = @transform_10, window_bounds = array<i64: 1, 1>}, {pipeline_mode = #tpu.pipeline_mode<synchronous>, transform_indices = @transform_11, window_bounds = array<i64: 17, 60>}, {pipeline_mode = #tpu.pipeline_mode<synchronous>, transform_indices = @transform_12, window_bounds = array<i64: 3, 60, 60>}, {pipeline_mode = #tpu.pipeline_mode<synchronous>, transform_indices = @transform_13, window_bounds = array<i64: 60, 32>}, {pipeline_mode = #tpu.pipeline_mode<synchronous>, transform_indices = @transform_14, window_bounds = array<i64: 32, 32>}, {pipeline_mode = #tpu.pipeline_mode<synchronous>, transform_indices = @transform_15, window_bounds = array<i64: 60, 17>}, {pipeline_mode = #tpu.pipeline_mode<synchronous>, transform_indices = @transform_16, window_bounds = array<i64: 60, 1>}, {pipeline_mode = #tpu.pipeline_mode<synchronous>, transform_indices = @transform_17, window_bounds = array<i64: 60, 17>}, {pipeline_mode = #tpu.pipeline_mode<synchronous>, transform_indices = @transform_18, window_bounds = array<i64: 60, 60>}, {pipeline_mode = #tpu.pipeline_mode<synchronous>, transform_indices = @transform_19, window_bounds = array<i64: 60, 60>}, {pipeline_mode = #tpu.pipeline_mode<synchronous>, transform_indices = @transform_20, window_bounds = array<i64: 60, 1>}, {pipeline_mode = #tpu.pipeline_mode<synchronous>, transform_indices = @transform_21, window_bounds = array<i64: 60, 1>}, {pipeline_mode = #tpu.pipeline_mode<synchronous>, transform_indices = @transform_22, window_bounds = array<i64: 60, 2>}, {pipeline_mode = #tpu.pipeline_mode<synchronous>, transform_indices = @transform_23, window_bounds = array<i64: 1, 1>}, {transform_indices = @transform_24, window_bounds = array<i64: 2, 128>}]} {
    %c0 = arith.constant 0 : index
    %c0_0 = arith.constant 0 : index
    %0 = vector.load %arg1[%c0, %c0_0] : memref<17x128xf32, #tpu.memory_space<vmem>>, vector<17x128xf32>
    %c0_1 = arith.constant 0 : index
    %c0_2 = arith.constant 0 : index
    %1 = vector.load %arg2[%c0_1, %c0_2] : memref<60x17xf32, #tpu.memory_space<vmem>>, vector<60x17xf32>
    %cst = arith.constant dense<0.000000e+00> : vector<60x128xf32>
    %2 = tpu.matmul %1, %0, %cst {dimension_numbers = #tpu.dot_dimension_numbers<[1], [0], [0], [1], [0, 0, 1, 1], [], []>} : vector<60x17xf32>, vector<17x128xf32>, vector<60x128xf32> -> vector<60x128xf32>
    %c0_3 = arith.constant 0 : index
    %c0_4 = arith.constant 0 : index
    %3 = vector.load %arg7[%c0_3, %c0_4] : memref<60x1xf32, #tpu.memory_space<vmem>>, vector<60x1xf32>
    %4 = vector.broadcast %3 : vector<60x1xf32> to vector<60x128xf32>
    %5 = arith.addf %2, %4 : vector<60x128xf32>
    %cst_5 = arith.constant 0.000000e+00 : f32
    %6 = vector.broadcast %cst_5 : f32 to vector<60x128xf32>
    %7 = arith.maximumf %5, %6 : vector<60x128xf32>
    %c0_6 = arith.constant 0 : index
    %c0_7 = arith.constant 0 : index
    %c0_8 = arith.constant 0 : index
    %8 = vector.load %arg3[%c0_6, %c0_7, %c0_8] : memref<3x60x60xf32, #tpu.memory_space<vmem>>, vector<1x60x60xf32>
    %9 = vector.shape_cast %8 : vector<1x60x60xf32> to vector<60x60xf32>
    %cst_9 = arith.constant dense<0.000000e+00> : vector<60x128xf32>
    %10 = tpu.matmul %9, %7, %cst_9 {dimension_numbers = #tpu.dot_dimension_numbers<[1], [0], [0], [1], [0, 0, 1, 1], [], []>} : vector<60x60xf32>, vector<60x128xf32>, vector<60x128xf32> -> vector<60x128xf32>
    %c0_10 = arith.constant 0 : index
    %c0_11 = arith.constant 0 : index
    %11 = vector.load %arg8[%c0_10, %c0_11] : memref<60x3xf32, #tpu.memory_space<vmem>>, vector<60x1xf32>
    %12 = vector.broadcast %11 : vector<60x1xf32> to vector<60x128xf32>
    %13 = arith.addf %10, %12 : vector<60x128xf32>
    %cst_12 = arith.constant 0.000000e+00 : f32
    %14 = vector.broadcast %cst_12 : f32 to vector<60x128xf32>
    %15 = arith.maximumf %13, %14 : vector<60x128xf32>
    %c1 = arith.constant 1 : index
    %c0_13 = arith.constant 0 : index
    %c0_14 = arith.constant 0 : index
    %16 = vector.load %arg3[%c1, %c0_13, %c0_14] : memref<3x60x60xf32, #tpu.memory_space<vmem>>, vector<1x60x60xf32>
    %17 = vector.shape_cast %16 : vector<1x60x60xf32> to vector<60x60xf32>
    %cst_15 = arith.constant dense<0.000000e+00> : vector<60x128xf32>
    %18 = tpu.matmul %17, %15, %cst_15 {dimension_numbers = #tpu.dot_dimension_numbers<[1], [0], [0], [1], [0, 0, 1, 1], [], []>} : vector<60x60xf32>, vector<60x128xf32>, vector<60x128xf32> -> vector<60x128xf32>
    %c0_16 = arith.constant 0 : index
    %c1_17 = arith.constant 1 : index
    %19 = vector.load %arg8[%c0_16, %c1_17] : memref<60x3xf32, #tpu.memory_space<vmem>>, vector<60x1xf32>
    %20 = vector.broadcast %19 : vector<60x1xf32> to vector<60x128xf32>
    %21 = arith.addf %18, %20 : vector<60x128xf32>
    %cst_18 = arith.constant 0.000000e+00 : f32
    %22 = vector.broadcast %cst_18 : f32 to vector<60x128xf32>
    %23 = arith.maximumf %21, %22 : vector<60x128xf32>
    %c2 = arith.constant 2 : index
    %c0_19 = arith.constant 0 : index
    %c0_20 = arith.constant 0 : index
    %24 = vector.load %arg3[%c2, %c0_19, %c0_20] : memref<3x60x60xf32, #tpu.memory_space<vmem>>, vector<1x60x60xf32>
    %25 = vector.shape_cast %24 : vector<1x60x60xf32> to vector<60x60xf32>
    %cst_21 = arith.constant dense<0.000000e+00> : vector<60x128xf32>
    %26 = tpu.matmul %25, %23, %cst_21 {dimension_numbers = #tpu.dot_dimension_numbers<[1], [0], [0], [1], [0, 0, 1, 1], [], []>} : vector<60x60xf32>, vector<60x128xf32>, vector<60x128xf32> -> vector<60x128xf32>
    %c0_22 = arith.constant 0 : index
    %c2_23 = arith.constant 2 : index
    %27 = vector.load %arg8[%c0_22, %c2_23] : memref<60x3xf32, #tpu.memory_space<vmem>>, vector<60x1xf32>
    %28 = vector.broadcast %27 : vector<60x1xf32> to vector<60x128xf32>
    %29 = arith.addf %26, %28 : vector<60x128xf32>
    %cst_24 = arith.constant 0.000000e+00 : f32
    %30 = vector.broadcast %cst_24 : f32 to vector<60x128xf32>
    %31 = arith.maximumf %29, %30 : vector<60x128xf32>
    %c0_25 = arith.constant 0 : index
    %c0_26 = arith.constant 0 : index
    %32 = vector.load %arg4[%c0_25, %c0_26] : memref<32x60xf32, #tpu.memory_space<vmem>>, vector<32x60xf32>
    %cst_27 = arith.constant dense<0.000000e+00> : vector<32x128xf32>
    %33 = tpu.matmul %32, %31, %cst_27 {dimension_numbers = #tpu.dot_dimension_numbers<[1], [0], [0], [1], [0, 0, 1, 1], [], []>} : vector<32x60xf32>, vector<60x128xf32>, vector<32x128xf32> -> vector<32x128xf32>
    %c0_28 = arith.constant 0 : index
    %c0_29 = arith.constant 0 : index
    %34 = vector.load %arg9[%c0_28, %c0_29] : memref<32x1xf32, #tpu.memory_space<vmem>>, vector<32x1xf32>
    %35 = vector.broadcast %34 : vector<32x1xf32> to vector<32x128xf32>
    %36 = arith.addf %33, %35 : vector<32x128xf32>
    %c0_30 = arith.constant 0 : index
    %c0_31 = arith.constant 0 : index
    %37 = vector.load %arg5[%c0_30, %c0_31] : memref<32x32xf32, #tpu.memory_space<vmem>>, vector<32x32xf32>
    %cst_32 = arith.constant dense<0.000000e+00> : vector<32x128xf32>
    %38 = tpu.matmul %37, %36, %cst_32 {dimension_numbers = #tpu.dot_dimension_numbers<[1], [0], [0], [1], [0, 0, 1, 1], [], []>} : vector<32x32xf32>, vector<32x128xf32>, vector<32x128xf32> -> vector<32x128xf32>
    %c0_33 = arith.constant 0 : index
    %c0_34 = arith.constant 0 : index
    %39 = vector.load %arg10[%c0_33, %c0_34] : memref<32x1xf32, #tpu.memory_space<vmem>>, vector<32x1xf32>
    %40 = vector.broadcast %39 : vector<32x1xf32> to vector<32x128xf32>
    %41 = arith.addf %38, %40 : vector<32x128xf32>
    %cst_35 = arith.constant 0.000000e+00 : f32
    %42 = vector.broadcast %cst_35 : f32 to vector<32x128xf32>
    %43 = arith.maximumf %41, %42 : vector<32x128xf32>
    %c0_36 = arith.constant 0 : index
    %c0_37 = arith.constant 0 : index
    %44 = vector.load %arg6[%c0_36, %c0_37] : memref<32x1xf32, #tpu.memory_space<vmem>>, vector<32x1xf32>
    %45 = vector.broadcast %44 : vector<32x1xf32> to vector<32x128xf32>
    %46 = arith.mulf %45, %43 : vector<32x128xf32>
    %cst_38 = arith.constant dense<0.000000e+00> : vector<128xf32>
    %47 = vector.multi_reduction <add>, %46, %cst_38 [0] : vector<32x128xf32> to vector<128xf32>
    %48 = vector.shape_cast %47 : vector<128xf32> to vector<1x128xf32>
    %c0_39 = arith.constant 0 : index
    %c0_40 = arith.constant 0 : index
    %49 = vector.load %arg11[%c0_39, %c0_40] : memref<1x1xf32, #tpu.memory_space<vmem>>, vector<1x1xf32>
    %50 = vector.broadcast %49 : vector<1x1xf32> to vector<1x128xf32>
    %51 = arith.addf %48, %50 : vector<1x128xf32>
    %cst_41 = arith.constant 0.000000e+00 : f32
    %52 = vector.broadcast %cst_41 : f32 to vector<32x128xf32>
    %53 = arith.cmpf ogt, %43, %52 : vector<32x128xf32>
    %c0_42 = arith.constant 0 : index
    %c0_43 = arith.constant 0 : index
    %54 = vector.load %arg6[%c0_42, %c0_43] : memref<32x1xf32, #tpu.memory_space<vmem>>, vector<32x1xf32>
    %cst_44 = arith.constant 0.000000e+00 : f32
    %55 = vector.shape_cast %54 : vector<32x1xf32> to vector<32x1xf32>
    %56 = vector.broadcast %55 : vector<32x1xf32> to vector<32x128xf32>
    %57 = vector.broadcast %cst_44 : f32 to vector<32x128xf32>
    %58 = arith.select %53, %56, %57 : vector<32x128xi1>, vector<32x128xf32>
    %c0_45 = arith.constant 0 : index
    %c0_46 = arith.constant 0 : index
    %59 = vector.load %arg15[%c0_45, %c0_46] : memref<32x32xf32, #tpu.memory_space<vmem>>, vector<32x32xf32>
    %cst_47 = arith.constant dense<0.000000e+00> : vector<32x128xf32>
    %60 = tpu.matmul %59, %58, %cst_47 {dimension_numbers = #tpu.dot_dimension_numbers<[1], [0], [0], [1], [0, 0, 1, 1], [], []>} : vector<32x32xf32>, vector<32x128xf32>, vector<32x128xf32> -> vector<32x128xf32>
    %cst_48 = arith.constant 0.000000e+00 : f32
    %61 = vector.broadcast %cst_48 : f32 to vector<60x128xf32>
    %62 = arith.cmpf ogt, %31, %61 : vector<60x128xf32>
    %c0_49 = arith.constant 0 : index
    %c0_50 = arith.constant 0 : index
    %63 = vector.load %arg14[%c0_49, %c0_50] : memref<60x32xf32, #tpu.memory_space<vmem>>, vector<60x32xf32>
    %cst_51 = arith.constant dense<0.000000e+00> : vector<60x128xf32>
    %64 = tpu.matmul %63, %60, %cst_51 {dimension_numbers = #tpu.dot_dimension_numbers<[1], [0], [0], [1], [0, 0, 1, 1], [], []>} : vector<60x32xf32>, vector<32x128xf32>, vector<60x128xf32> -> vector<60x128xf32>
    %cst_52 = arith.constant 0.000000e+00 : f32
    %65 = vector.broadcast %cst_52 : f32 to vector<60x128xf32>
    %66 = arith.select %62, %64, %65 : vector<60x128xi1>, vector<60x128xf32>
    %cst_53 = arith.constant 0.000000e+00 : f32
    %67 = vector.broadcast %cst_53 : f32 to vector<60x128xf32>
    %68 = arith.cmpf ogt, %23, %67 : vector<60x128xf32>
    %c2_54 = arith.constant 2 : index
    %c0_55 = arith.constant 0 : index
    %c0_56 = arith.constant 0 : index
    %69 = vector.load %arg13[%c2_54, %c0_55, %c0_56] : memref<3x60x60xf32, #tpu.memory_space<vmem>>, vector<1x60x60xf32>
    %70 = vector.shape_cast %69 : vector<1x60x60xf32> to vector<60x60xf32>
    %cst_57 = arith.constant dense<0.000000e+00> : vector<60x128xf32>
    %71 = tpu.matmul %70, %66, %cst_57 {dimension_numbers = #tpu.dot_dimension_numbers<[1], [0], [0], [1], [0, 0, 1, 1], [], []>} : vector<60x60xf32>, vector<60x128xf32>, vector<60x128xf32> -> vector<60x128xf32>
    %cst_58 = arith.constant 0.000000e+00 : f32
    %72 = vector.broadcast %cst_58 : f32 to vector<60x128xf32>
    %73 = arith.select %68, %71, %72 : vector<60x128xi1>, vector<60x128xf32>
    %cst_59 = arith.constant 0.000000e+00 : f32
    %74 = vector.broadcast %cst_59 : f32 to vector<60x128xf32>
    %75 = arith.cmpf ogt, %15, %74 : vector<60x128xf32>
    %c1_60 = arith.constant 1 : index
    %c0_61 = arith.constant 0 : index
    %c0_62 = arith.constant 0 : index
    %76 = vector.load %arg13[%c1_60, %c0_61, %c0_62] : memref<3x60x60xf32, #tpu.memory_space<vmem>>, vector<1x60x60xf32>
    %77 = vector.shape_cast %76 : vector<1x60x60xf32> to vector<60x60xf32>
    %cst_63 = arith.constant dense<0.000000e+00> : vector<60x128xf32>
    %78 = tpu.matmul %77, %73, %cst_63 {dimension_numbers = #tpu.dot_dimension_numbers<[1], [0], [0], [1], [0, 0, 1, 1], [], []>} : vector<60x60xf32>, vector<60x128xf32>, vector<60x128xf32> -> vector<60x128xf32>
    %cst_64 = arith.constant 0.000000e+00 : f32
    %79 = vector.broadcast %cst_64 : f32 to vector<60x128xf32>
    %80 = arith.select %75, %78, %79 : vector<60x128xi1>, vector<60x128xf32>
    %cst_65 = arith.constant 0.000000e+00 : f32
    %81 = vector.broadcast %cst_65 : f32 to vector<60x128xf32>
    %82 = arith.cmpf ogt, %7, %81 : vector<60x128xf32>
    %c0_66 = arith.constant 0 : index
    %c0_67 = arith.constant 0 : index
    %c0_68 = arith.constant 0 : index
    %83 = vector.load %arg13[%c0_66, %c0_67, %c0_68] : memref<3x60x60xf32, #tpu.memory_space<vmem>>, vector<1x60x60xf32>
    %84 = vector.shape_cast %83 : vector<1x60x60xf32> to vector<60x60xf32>
    %cst_69 = arith.constant dense<0.000000e+00> : vector<60x128xf32>
    %85 = tpu.matmul %84, %80, %cst_69 {dimension_numbers = #tpu.dot_dimension_numbers<[1], [0], [0], [1], [0, 0, 1, 1], [], []>} : vector<60x60xf32>, vector<60x128xf32>, vector<60x128xf32> -> vector<60x128xf32>
    %cst_70 = arith.constant 0.000000e+00 : f32
    %86 = vector.broadcast %cst_70 : f32 to vector<60x128xf32>
    %87 = arith.select %82, %85, %86 : vector<60x128xi1>, vector<60x128xf32>
    %c0_71 = arith.constant 0 : index
    %c0_72 = arith.constant 0 : index
    %88 = vector.load %arg12[%c0_71, %c0_72] : memref<17x60xf32, #tpu.memory_space<vmem>>, vector<17x60xf32>
    %cst_73 = arith.constant dense<0.000000e+00> : vector<17x128xf32>
    %89 = tpu.matmul %88, %87, %cst_73 {dimension_numbers = #tpu.dot_dimension_numbers<[1], [0], [0], [1], [0, 0, 1, 1], [], []>} : vector<17x60xf32>, vector<60x128xf32>, vector<17x128xf32> -> vector<17x128xf32>
    %90 = vector.extract_strided_slice %89 {offsets = [16, 0], sizes = [1, 128], strides = [1, 1]} : vector<17x128xf32> to vector<1x128xf32>
    %c0_74 = arith.constant 0 : index
    %c0_75 = arith.constant 0 : index
    %91 = vector.load %arg16[%c0_74, %c0_75] : memref<60x17xf32, #tpu.memory_space<vmem>>, vector<60x17xf32>
    %cst_76 = arith.constant dense<0.000000e+00> : vector<60x128xf32>
    %92 = tpu.matmul %91, %0, %cst_76 {dimension_numbers = #tpu.dot_dimension_numbers<[1], [0], [0], [1], [0, 0, 1, 1], [], []>} : vector<60x17xf32>, vector<17x128xf32>, vector<60x128xf32> -> vector<60x128xf32>
    %c0_77 = arith.constant 0 : index
    %c0_78 = arith.constant 0 : index
    %93 = vector.load %arg18[%c0_77, %c0_78] : memref<60x17xf32, #tpu.memory_space<vmem>>, vector<60x17xf32>
    %cst_79 = arith.constant dense<0.000000e+00> : vector<60x128xf32>
    %94 = tpu.matmul %93, %89, %cst_79 {dimension_numbers = #tpu.dot_dimension_numbers<[1], [0], [0], [1], [0, 0, 1, 1], [], []>} : vector<60x17xf32>, vector<17x128xf32>, vector<60x128xf32> -> vector<60x128xf32>
    %95 = arith.addf %92, %94 : vector<60x128xf32>
    %c0_80 = arith.constant 0 : index
    %c0_81 = arith.constant 0 : index
    %96 = vector.load %arg17[%c0_80, %c0_81] : memref<60x1xf32, #tpu.memory_space<vmem>>, vector<60x1xf32>
    %97 = vector.broadcast %96 : vector<60x1xf32> to vector<60x128xf32>
    %98 = vector.broadcast %51 : vector<1x128xf32> to vector<60x128xf32>
    %99 = arith.mulf %97, %98 : vector<60x128xf32>
    %100 = arith.addf %95, %99 : vector<60x128xf32>
    %c0_82 = arith.constant 0 : index
    %c0_83 = arith.constant 0 : index
    %101 = vector.load %arg22[%c0_82, %c0_83] : memref<60x1xf32, #tpu.memory_space<vmem>>, vector<60x1xf32>
    %102 = vector.broadcast %101 : vector<60x1xf32> to vector<60x128xf32>
    %103 = arith.addf %100, %102 : vector<60x128xf32>
    %cst_84 = arith.constant 0.000000e+00 : f32
    %104 = vector.broadcast %cst_84 : f32 to vector<60x128xf32>
    %105 = arith.maximumf %103, %104 : vector<60x128xf32>
    %c0_85 = arith.constant 0 : index
    %c0_86 = arith.constant 0 : index
    %106 = vector.load %arg19[%c0_85, %c0_86] : memref<60x60xf32, #tpu.memory_space<vmem>>, vector<60x60xf32>
    %cst_87 = arith.constant dense<0.000000e+00> : vector<60x128xf32>
    %107 = tpu.matmul %106, %105, %cst_87 {dimension_numbers = #tpu.dot_dimension_numbers<[1], [0], [0], [1], [0, 0, 1, 1], [], []>} : vector<60x60xf32>, vector<60x128xf32>, vector<60x128xf32> -> vector<60x128xf32>
    %c0_88 = arith.constant 0 : index
    %c0_89 = arith.constant 0 : index
    %108 = vector.load %arg23[%c0_88, %c0_89] : memref<60x2xf32, #tpu.memory_space<vmem>>, vector<60x1xf32>
    %109 = vector.broadcast %108 : vector<60x1xf32> to vector<60x128xf32>
    %110 = arith.addf %107, %109 : vector<60x128xf32>
    %cst_90 = arith.constant 0.000000e+00 : f32
    %111 = vector.broadcast %cst_90 : f32 to vector<60x128xf32>
    %112 = arith.maximumf %110, %111 : vector<60x128xf32>
    %c0_91 = arith.constant 0 : index
    %c0_92 = arith.constant 0 : index
    %113 = vector.load %arg20[%c0_91, %c0_92] : memref<60x60xf32, #tpu.memory_space<vmem>>, vector<60x60xf32>
    %cst_93 = arith.constant dense<0.000000e+00> : vector<60x128xf32>
    %114 = tpu.matmul %113, %112, %cst_93 {dimension_numbers = #tpu.dot_dimension_numbers<[1], [0], [0], [1], [0, 0, 1, 1], [], []>} : vector<60x60xf32>, vector<60x128xf32>, vector<60x128xf32> -> vector<60x128xf32>
    %c0_94 = arith.constant 0 : index
    %c1_95 = arith.constant 1 : index
    %115 = vector.load %arg23[%c0_94, %c1_95] : memref<60x2xf32, #tpu.memory_space<vmem>>, vector<60x1xf32>
    %116 = vector.broadcast %115 : vector<60x1xf32> to vector<60x128xf32>
    %117 = arith.addf %114, %116 : vector<60x128xf32>
    %cst_96 = arith.constant 0.000000e+00 : f32
    %118 = vector.broadcast %cst_96 : f32 to vector<60x128xf32>
    %119 = arith.maximumf %117, %118 : vector<60x128xf32>
    %c0_97 = arith.constant 0 : index
    %c0_98 = arith.constant 0 : index
    %120 = vector.load %arg21[%c0_97, %c0_98] : memref<60x1xf32, #tpu.memory_space<vmem>>, vector<60x1xf32>
    %121 = vector.broadcast %120 : vector<60x1xf32> to vector<60x128xf32>
    %122 = arith.mulf %121, %119 : vector<60x128xf32>
    %cst_99 = arith.constant dense<0.000000e+00> : vector<128xf32>
    %123 = vector.multi_reduction <add>, %122, %cst_99 [0] : vector<60x128xf32> to vector<128xf32>
    %124 = vector.shape_cast %123 : vector<128xf32> to vector<1x128xf32>
    %c0_100 = arith.constant 0 : index
    %c0_101 = arith.constant 0 : index
    %125 = vector.load %arg24[%c0_100, %c0_101] : memref<1x1xf32, #tpu.memory_space<vmem>>, vector<1x1xf32>
    %126 = vector.broadcast %125 : vector<1x1xf32> to vector<1x128xf32>
    %127 = arith.addf %124, %126 : vector<1x128xf32>
    %128 = arith.subf %90, %127 : vector<1x128xf32>
    %129 = tpu.concatenate %51, %128 in 0 : vector<1x128xf32>, vector<1x128xf32> -> vector<2x128xf32>
    %c0_102 = arith.constant 0 : index
    %c0_103 = arith.constant 0 : index
    %130 = vector.load %arg25[%c0_102, %c0_103] : memref<2x128xf32, #tpu.memory_space<vmem>>, vector<2x128xf32>
    tpu.vector_store %arg25[%c0_102, %c0_103], %129 {strides = array<i32>} : memref<2x128xf32, #tpu.memory_space<vmem>>, vector<2x128xf32>,
    return
  }
  func.func @transform_0(%arg0: i32) -> (i32, i32) {
    %c0_i32 = arith.constant 0 : i32
    %c0_i32_0 = arith.constant 0 : i32
    return %c0_i32, %arg0 : i32, i32
  }
  func.func @transform_1(%arg0: i32) -> (i32, i32) {
    %c0_i32 = arith.constant 0 : i32
    %c0_i32_0 = arith.constant 0 : i32
    %c0_i32_1 = arith.constant 0 : i32
    return %c0_i32, %c0_i32_0 : i32, i32
  }
  func.func @transform_2(%arg0: i32) -> (i32, i32, i32) {
    %c0_i32 = arith.constant 0 : i32
    %c0_i32_0 = arith.constant 0 : i32
    %c0_i32_1 = arith.constant 0 : i32
    %c0_i32_2 = arith.constant 0 : i32
    return %c0_i32, %c0_i32_0, %c0_i32_1 : i32, i32, i32
  }
  func.func @transform_3(%arg0: i32) -> (i32, i32) {
    %c0_i32 = arith.constant 0 : i32
    %c0_i32_0 = arith.constant 0 : i32
    %c0_i32_1 = arith.constant 0 : i32
    return %c0_i32, %c0_i32_0 : i32, i32
  }
  func.func @transform_4(%arg0: i32) -> (i32, i32) {
    %c0_i32 = arith.constant 0 : i32
    %c0_i32_0 = arith.constant 0 : i32
    %c0_i32_1 = arith.constant 0 : i32
    return %c0_i32, %c0_i32_0 : i32, i32
  }
  func.func @transform_5(%arg0: i32) -> (i32, i32) {
    %c0_i32 = arith.constant 0 : i32
    %c0_i32_0 = arith.constant 0 : i32
    %c0_i32_1 = arith.constant 0 : i32
    return %c0_i32, %c0_i32_0 : i32, i32
  }
  func.func @transform_6(%arg0: i32) -> (i32, i32) {
    %c0_i32 = arith.constant 0 : i32
    %c0_i32_0 = arith.constant 0 : i32
    %c0_i32_1 = arith.constant 0 : i32
    return %c0_i32, %c0_i32_0 : i32, i32
  }
  func.func @transform_7(%arg0: i32) -> (i32, i32) {
    %c0_i32 = arith.constant 0 : i32
    %c0_i32_0 = arith.constant 0 : i32
    %c0_i32_1 = arith.constant 0 : i32
    return %c0_i32, %c0_i32_0 : i32, i32
  }
  func.func @transform_8(%arg0: i32) -> (i32, i32) {
    %c0_i32 = arith.constant 0 : i32
    %c0_i32_0 = arith.constant 0 : i32
    %c0_i32_1 = arith.constant 0 : i32
    return %c0_i32, %c0_i32_0 : i32, i32
  }
  func.func @transform_9(%arg0: i32) -> (i32, i32) {
    %c0_i32 = arith.constant 0 : i32
    %c0_i32_0 = arith.constant 0 : i32
    %c0_i32_1 = arith.constant 0 : i32
    return %c0_i32, %c0_i32_0 : i32, i32
  }
  func.func @transform_10(%arg0: i32) -> (i32, i32) {
    %c0_i32 = arith.constant 0 : i32
    %c0_i32_0 = arith.constant 0 : i32
    %c0_i32_1 = arith.constant 0 : i32
    return %c0_i32, %c0_i32_0 : i32, i32
  }
  func.func @transform_11(%arg0: i32) -> (i32, i32) {
    %c0_i32 = arith.constant 0 : i32
    %c0_i32_0 = arith.constant 0 : i32
    %c0_i32_1 = arith.constant 0 : i32
    return %c0_i32, %c0_i32_0 : i32, i32
  }
  func.func @transform_12(%arg0: i32) -> (i32, i32, i32) {
    %c0_i32 = arith.constant 0 : i32
    %c0_i32_0 = arith.constant 0 : i32
    %c0_i32_1 = arith.constant 0 : i32
    %c0_i32_2 = arith.constant 0 : i32
    return %c0_i32, %c0_i32_0, %c0_i32_1 : i32, i32, i32
  }
  func.func @transform_13(%arg0: i32) -> (i32, i32) {
    %c0_i32 = arith.constant 0 : i32
    %c0_i32_0 = arith.constant 0 : i32
    %c0_i32_1 = arith.constant 0 : i32
    return %c0_i32, %c0_i32_0 : i32, i32
  }
  func.func @transform_14(%arg0: i32) -> (i32, i32) {
    %c0_i32 = arith.constant 0 : i32
    %c0_i32_0 = arith.constant 0 : i32
    %c0_i32_1 = arith.constant 0 : i32
    return %c0_i32, %c0_i32_0 : i32, i32
  }
  func.func @transform_15(%arg0: i32) -> (i32, i32) {
    %c0_i32 = arith.constant 0 : i32
    %c0_i32_0 = arith.constant 0 : i32
    %c0_i32_1 = arith.constant 0 : i32
    return %c0_i32, %c0_i32_0 : i32, i32
  }
  func.func @transform_16(%arg0: i32) -> (i32, i32) {
    %c0_i32 = arith.constant 0 : i32
    %c0_i32_0 = arith.constant 0 : i32
    %c0_i32_1 = arith.constant 0 : i32
    return %c0_i32, %c0_i32_0 : i32, i32
  }
  func.func @transform_17(%arg0: i32) -> (i32, i32) {
    %c0_i32 = arith.constant 0 : i32
    %c0_i32_0 = arith.constant 0 : i32
    %c0_i32_1 = arith.constant 0 : i32
    return %c0_i32, %c0_i32_0 : i32, i32
  }
  func.func @transform_18(%arg0: i32) -> (i32, i32) {
    %c0_i32 = arith.constant 0 : i32
    %c0_i32_0 = arith.constant 0 : i32
    %c0_i32_1 = arith.constant 0 : i32
    return %c0_i32, %c0_i32_0 : i32, i32
  }
  func.func @transform_19(%arg0: i32) -> (i32, i32) {
    %c0_i32 = arith.constant 0 : i32
    %c0_i32_0 = arith.constant 0 : i32
    %c0_i32_1 = arith.constant 0 : i32
    return %c0_i32, %c0_i32_0 : i32, i32
  }
  func.func @transform_20(%arg0: i32) -> (i32, i32) {
    %c0_i32 = arith.constant 0 : i32
    %c0_i32_0 = arith.constant 0 : i32
    %c0_i32_1 = arith.constant 0 : i32
    return %c0_i32, %c0_i32_0 : i32, i32
  }
  func.func @transform_21(%arg0: i32) -> (i32, i32) {
    %c0_i32 = arith.constant 0 : i32
    %c0_i32_0 = arith.constant 0 : i32
    %c0_i32_1 = arith.constant 0 : i32
    return %c0_i32, %c0_i32_0 : i32, i32
  }
  func.func @transform_22(%arg0: i32) -> (i32, i32) {
    %c0_i32 = arith.constant 0 : i32
    %c0_i32_0 = arith.constant 0 : i32
    %c0_i32_1 = arith.constant 0 : i32
    return %c0_i32, %c0_i32_0 : i32, i32
  }
  func.func @transform_23(%arg0: i32) -> (i32, i32) {
    %c0_i32 = arith.constant 0 : i32
    %c0_i32_0 = arith.constant 0 : i32
    %c0_i32_1 = arith.constant 0 : i32
    return %c0_i32, %c0_i32_0 : i32, i32
  }
  func.func @transform_24(%arg0: i32) -> (i32, i32) {
    %c0_i32 = arith.constant 0 : i32
    %c0_i32_0 = arith.constant 0 : i32
    return %c0_i32, %arg0 : i32, i32
  }
}

</mosaic_0001>

<llo_original>
// kernel: tpu_custom_call.1
$region0: #{tpu_custom_call.1}
  #allocation0 [shape = 'u32[]', space=smem, size = 0x4, offset = 0x4, fixed_abs, tag = 'smem constant byte address 0x4 - core index']
  #allocation1 [shape = 'u32[144,128]{1,0:T(1,128)}', space=vmem, size = 0x12000, scoped, tag = 'internal scratch']
  #allocation2 [shape = 'f32[1,1]{1,0:T(1,128)S(1)}', space=vmem, size = 0x200, scoped, tag = 'scoped memory for tpu_custom_call.1']
  #allocation3 [shape = 'f32[1,1]{1,0:T(1,128)S(1)}', space=vmem, size = 0x200, scoped, tag = 'scoped memory for tpu_custom_call.1']
  %s0 = inlined_call_operand.vmem [shape: f32[17,128], index: 0, kind: input, shape index: {}]
  %s1 = inlined_call_operand.vmem [shape: f32[60,17], index: 1, kind: input, shape index: {}]
  %s2 = inlined_call_operand.vmem [shape: f32[3,60,60], index: 2, kind: input, shape index: {}]
  %s3 = inlined_call_operand.vmem [shape: f32[32,60], index: 3, kind: input, shape index: {}]
  %s4 = inlined_call_operand.vmem [shape: f32[32,32], index: 4, kind: input, shape index: {}]
  %s5 = inlined_call_operand.vmem [shape: f32[32,1], index: 5, kind: input, shape index: {}]
  %s6 = inlined_call_operand.vmem [shape: f32[60,1], index: 6, kind: input, shape index: {}]
  %s7 = inlined_call_operand.vmem [shape: f32[60,3], index: 7, kind: input, shape index: {}]
  %s8 = inlined_call_operand.vmem [shape: f32[32,1], index: 8, kind: input, shape index: {}]
  %s9 = inlined_call_operand.vmem [shape: f32[32,1], index: 9, kind: input, shape index: {}]
  %s10 = inlined_call_operand.<no memory space> [shape: f32[1,1], index: 10, kind: input, shape index: {}]
  %s11 = inlined_call_operand.vmem [shape: f32[17,60], index: 11, kind: input, shape index: {}]
  %s12 = inlined_call_operand.vmem [shape: f32[3,60,60], index: 12, kind: input, shape index: {}]
  %s13 = inlined_call_operand.vmem [shape: f32[60,32], index: 13, kind: input, shape index: {}]
  %s14 = inlined_call_operand.vmem [shape: f32[32,32], index: 14, kind: input, shape index: {}]
  %s15 = inlined_call_operand.vmem [shape: f32[60,17], index: 15, kind: input, shape index: {}]
  %s16 = inlined_call_operand.vmem [shape: f32[60,1], index: 16, kind: input, shape index: {}]
  %s17 = inlined_call_operand.vmem [shape: f32[60,17], index: 17, kind: input, shape index: {}]
  %s18 = inlined_call_operand.vmem [shape: f32[60,60], index: 18, kind: input, shape index: {}]
  %s19 = inlined_call_operand.vmem [shape: f32[60,60], index: 19, kind: input, shape index: {}]
  %s20 = inlined_call_operand.vmem [shape: f32[60,1], index: 20, kind: input, shape index: {}]
  %s21 = inlined_call_operand.vmem [shape: f32[60,1], index: 21, kind: input, shape index: {}]
  %s22 = inlined_call_operand.vmem [shape: f32[60,2], index: 22, kind: input, shape index: {}]
  %s23 = inlined_call_operand.<no memory space> [shape: f32[1,1], index: 23, kind: input, shape index: {}]
  %s24 = inlined_call_operand.hbm [shape: f32[2,128], index: 24, kind: output, shape index: {}]
  %s25 = sld [smem:[#allocation0]]
  $region106: #{tpu_custom_call.1} parent=0
    _
  %s27 = ssub.s32 1, %s25
  %s28 = scalar_select 0, %s27, %s25
  %v29 = vstv %s10
  %30 = vst [vmem:[#allocation2] sm:$0x1] %v29
  %v31 = vstv %s23
  %32 = vst [vmem:[#allocation3] sm:$0x1] %v31
  $region1: #{tpu_custom_call.1} parent=0
    #allocation4 [shape = 'u8[1024]{0}', space=vmem, size = 0x400, scoped, tag = 'output window, operand 0, single buffered']
    #allocation5 [shape = 's32[1]{0}', space=sflag, size = 0x4, scoped, tag = 'scoped memory for tpu_custom_call.1']
    %33 = vsyncpa [#allocation5], 0
    // Predicated region
    $region2: #{tpu_custom_call.1} parent=1 // pred_check
      _
    $region3: #{tpu_custom_call.1} parent=1 // pred_check_branch
      %35 = sbr.rel (0) target = $region5
    $region4: #{tpu_custom_call.1} parent=1 // pred_region
      _
    $region5: #{tpu_custom_call.1} parent=1 // pred_fallthru
      _
    // Predicated region
    $region6: #{tpu_custom_call.1} parent=1 // pred_check
      _
    $region7: #{tpu_custom_call.1} parent=1 // pred_check_branch
      %37 = sbr.rel (0) target = $region9
    $region8: #{tpu_custom_call.1} parent=1 // pred_region
      _
    $region9: #{tpu_custom_call.1} parent=1 // pred_fallthru
      _
    // Predicated region
    $region10: #{tpu_custom_call.1} parent=1 // pred_check
      _
    $region11: #{tpu_custom_call.1} parent=1 // pred_check_branch
      %39 = sbr.rel (0) target = $region13
    $region12: #{tpu_custom_call.1} parent=1 // pred_region
      _
    $region13: #{tpu_custom_call.1} parent=1 // pred_fallthru
      _
    // Predicated region
    $region14: #{tpu_custom_call.1} parent=1 // pred_check
      _
    $region15: #{tpu_custom_call.1} parent=1 // pred_check_branch
      %41 = sbr.rel (0) target = $region17
    $region16: #{tpu_custom_call.1} parent=1 // pred_region
      _
    $region17: #{tpu_custom_call.1} parent=1 // pred_fallthru
      _
    // Predicated region
    $region18: #{tpu_custom_call.1} parent=1 // pred_check
      _
    $region19: #{tpu_custom_call.1} parent=1 // pred_check_branch
      %43 = sbr.rel (0) target = $region21
    $region20: #{tpu_custom_call.1} parent=1 // pred_region
      _
    $region21: #{tpu_custom_call.1} parent=1 // pred_fallthru
      _
    // Predicated region
    $region22: #{tpu_custom_call.1} parent=1 // pred_check
      _
    $region23: #{tpu_custom_call.1} parent=1 // pred_check_branch
      %45 = sbr.rel (0) target = $region25
    $region24: #{tpu_custom_call.1} parent=1 // pred_region
      _
    $region25: #{tpu_custom_call.1} parent=1 // pred_fallthru
      _
    // Predicated region
    $region26: #{tpu_custom_call.1} parent=1 // pred_check
      _
    $region27: #{tpu_custom_call.1} parent=1 // pred_check_branch
      %47 = sbr.rel (0) target = $region29
    $region28: #{tpu_custom_call.1} parent=1 // pred_region
      _
    $region29: #{tpu_custom_call.1} parent=1 // pred_fallthru
      _
    // Predicated region
    $region30: #{tpu_custom_call.1} parent=1 // pred_check
      _
    $region31: #{tpu_custom_call.1} parent=1 // pred_check_branch
      %49 = sbr.rel (0) target = $region33
    $region32: #{tpu_custom_call.1} parent=1 // pred_region
      _
    $region33: #{tpu_custom_call.1} parent=1 // pred_fallthru
      _
    // Predicated region
    $region34: #{tpu_custom_call.1} parent=1 // pred_check
      _
    $region35: #{tpu_custom_call.1} parent=1 // pred_check_branch
      %51 = sbr.rel (0) target = $region37
    $region36: #{tpu_custom_call.1} parent=1 // pred_region
      _
    $region37: #{tpu_custom_call.1} parent=1 // pred_fallthru
      _
    // Predicated region
    $region38: #{tpu_custom_call.1} parent=1 // pred_check
      _
    $region39: #{tpu_custom_call.1} parent=1 // pred_check_branch
      %53 = sbr.rel (0) target = $region41
    $region40: #{tpu_custom_call.1} parent=1 // pred_region
      _
    $region41: #{tpu_custom_call.1} parent=1 // pred_fallthru
      _
    // Predicated region
    $region42: #{tpu_custom_call.1} parent=1 // pred_check
      _
    $region43: #{tpu_custom_call.1} parent=1 // pred_check_branch
      %55 = sbr.rel (0) target = $region45
    $region44: #{tpu_custom_call.1} parent=1 // pred_region
      _
    $region45: #{tpu_custom_call.1} parent=1 // pred_fallthru
      _
    // Predicated region
    $region46: #{tpu_custom_call.1} parent=1 // pred_check
      _
    $region47: #{tpu_custom_call.1} parent=1 // pred_check_branch
      %57 = sbr.rel (0) target = $region49
    $region48: #{tpu_custom_call.1} parent=1 // pred_region
      _
    $region49: #{tpu_custom_call.1} parent=1 // pred_fallthru
      _
    // Predicated region
    $region50: #{tpu_custom_call.1} parent=1 // pred_check
      _
    $region51: #{tpu_custom_call.1} parent=1 // pred_check_branch
      %59 = sbr.rel (0) target = $region53
    $region52: #{tpu_custom_call.1} parent=1 // pred_region
      _
    $region53: #{tpu_custom_call.1} parent=1 // pred_fallthru
      _
    // Predicated region
    $region54: #{tpu_custom_call.1} parent=1 // pred_check
      _
    $region55: #{tpu_custom_call.1} parent=1 // pred_check_branch
      %61 = sbr.rel (0) target = $region57
    $region56: #{tpu_custom_call.1} parent=1 // pred_region
      _
    $region57: #{tpu_custom_call.1} parent=1 // pred_fallthru
      _
    // Predicated region
    $region58: #{tpu_custom_call.1} parent=1 // pred_check
      _
    $region59: #{tpu_custom_call.1} parent=1 // pred_check_branch
      %63 = sbr.rel (0) target = $region61
    $region60: #{tpu_custom_call.1} parent=1 // pred_region
      _
    $region61: #{tpu_custom_call.1} parent=1 // pred_fallthru
      _
    // Predicated region
    $region62: #{tpu_custom_call.1} parent=1 // pred_check
      _
    $region63: #{tpu_custom_call.1} parent=1 // pred_check_branch
      %65 = sbr.rel (0) target = $region65
    $region64: #{tpu_custom_call.1} parent=1 // pred_region
      _
    $region65: #{tpu_custom_call.1} parent=1 // pred_fallthru
      _
    // Predicated region
    $region66: #{tpu_custom_call.1} parent=1 // pred_check
      _
    $region67: #{tpu_custom_call.1} parent=1 // pred_check_branch
      %67 = sbr.rel (0) target = $region69
    $region68: #{tpu_custom_call.1} parent=1 // pred_region
      _
    $region69: #{tpu_custom_call.1} parent=1 // pred_fallthru
      _
    // Predicated region
    $region70: #{tpu_custom_call.1} parent=1 // pred_check
      _
    $region71: #{tpu_custom_call.1} parent=1 // pred_check_branch
      %69 = sbr.rel (0) target = $region73
    $region72: #{tpu_custom_call.1} parent=1 // pred_region
      _
    $region73: #{tpu_custom_call.1} parent=1 // pred_fallthru
      _
    // Predicated region
    $region74: #{tpu_custom_call.1} parent=1 // pred_check
      _
    $region75: #{tpu_custom_call.1} parent=1 // pred_check_branch
      %71 = sbr.rel (0) target = $region77
    $region76: #{tpu_custom_call.1} parent=1 // pred_region
      _
    $region77: #{tpu_custom_call.1} parent=1 // pred_fallthru
      _
    // Predicated region
    $region78: #{tpu_custom_call.1} parent=1 // pred_check
      _
    $region79: #{tpu_custom_call.1} parent=1 // pred_check_branch
      %73 = sbr.rel (0) target = $region81
    $region80: #{tpu_custom_call.1} parent=1 // pred_region
      _
    $region81: #{tpu_custom_call.1} parent=1 // pred_fallthru
      _
    // Predicated region
    $region82: #{tpu_custom_call.1} parent=1 // pred_check
      _
    $region83: #{tpu_custom_call.1} parent=1 // pred_check_branch
      %75 = sbr.rel (0) target = $region85
    $region84: #{tpu_custom_call.1} parent=1 // pred_region
      _
    $region85: #{tpu_custom_call.1} parent=1 // pred_fallthru
      _
    // Predicated region
    $region86: #{tpu_custom_call.1} parent=1 // pred_check
      _
    $region87: #{tpu_custom_call.1} parent=1 // pred_check_branch
      %77 = sbr.rel (0) target = $region89
    $region88: #{tpu_custom_call.1} parent=1 // pred_region
      _
    $region89: #{tpu_custom_call.1} parent=1 // pred_fallthru
      _
    // Predicated region
    $region90: #{tpu_custom_call.1} parent=1 // pred_check
      _
    $region91: #{tpu_custom_call.1} parent=1 // pred_check_branch
      %79 = sbr.rel (0) target = $region93
    $region92: #{tpu_custom_call.1} parent=1 // pred_region
      _
    $region93: #{tpu_custom_call.1} parent=1 // pred_fallthru
      _
    // Predicated region
    $region94: #{tpu_custom_call.1} parent=1 // pred_check
      _
    $region95: #{tpu_custom_call.1} parent=1 // pred_check_branch
      %81 = sbr.rel (0) target = $region97
    $region96: #{tpu_custom_call.1} parent=1 // pred_region
      _
    $region97: #{tpu_custom_call.1} parent=1 // pred_fallthru
      _
    %v82 = vld [vmem:[%s0] sm:$0xff]
    %v83 = vld [vmem:[%s0 + $0x8] sm:$0xff]
    %v84 = vld [vmem:[%s0 + $0x10] sm:$0x1]
    %v85 = vld [vmem:[%s1] sm:$0xff]
    %v86 = vld [vmem:[%s1 + $0x8] sm:$0xff]
    %v87 = vld [vmem:[%s1 + $0x10] sm:$0xff]
    %v88 = vld [vmem:[%s1 + $0x18] sm:$0xff]
    %v89 = vld [vmem:[%s1 + $0x20] sm:$0xff]
    %v90 = vld [vmem:[%s1 + $0x28] sm:$0xff]
    %v91 = vld [vmem:[%s1 + $0x30] sm:$0xff]
    %v92 = vld [vmem:[%s1 + $0x38] sm:$0xf]
    %v93 = vld [vmem:[%s6] sm:$0xff]
    %v94 = vld [vmem:[%s6 + $0x8] sm:$0xff]
    %v95 = vld [vmem:[%s6 + $0x10] sm:$0xff]
    %v96 = vld [vmem:[%s6 + $0x18] sm:$0xff]
    %v97 = vld [vmem:[%s6 + $0x20] sm:$0xff]
    %v98 = vld [vmem:[%s6 + $0x28] sm:$0xff]
    %v99 = vld [vmem:[%s6 + $0x30] sm:$0xff]
    %v100 = vld [vmem:[%s6 + $0x38] sm:$0xf]
    %102 = vset.pattern.permute.xlu0 0
    %103 = vperm.xlu0 %102, %v93
    %v104 = vpop.permute.xlu0 %103
    %107 = vset.pattern.permute.xlu0 0
    %108 = vperm.xlu0 %107, %v94
    %v109 = vpop.permute.xlu0 %108
    %112 = vset.pattern.permute.xlu0 0
    %113 = vperm.xlu0 %112, %v95
    %v114 = vpop.permute.xlu0 %113
    %117 = vset.pattern.permute.xlu0 0
    %118 = vperm.xlu0 %117, %v96
    %v119 = vpop.permute.xlu0 %118
    %122 = vset.pattern.permute.xlu0 0
    %123 = vperm.xlu0 %122, %v97
    %v124 = vpop.permute.xlu0 %123
    %127 = vset.pattern.permute.xlu0 0
    %128 = vperm.xlu0 %127, %v98
    %v129 = vpop.permute.xlu0 %128
    %132 = vset.pattern.permute.xlu0 0
    %133 = vperm.xlu0 %132, %v99
    %v134 = vpop.permute.xlu0 %133
    %137 = vset.pattern.permute.xlu0 0
    %138 = vperm.xlu0 %137, %v100
    %v139 = vpop.permute.xlu0 %138
    %vm141 = vcmask 138240
    %v143 = vsel %vm141, %v85, 0
    %v146 = vsel %vm141, %v86, 0
    %v149 = vsel %vm141, %v87, 0
    %v152 = vsel %vm141, %v88, 0
    %v155 = vsel %vm141, %v89, 0
    %v158 = vsel %vm141, %v90, 0
    %v161 = vsel %vm141, %v91, 0
    %v164 = vsel %vm141, %v92, 0
    %vm166 = vcmask 1040384
    %v168 = vsel %vm166, %v84, 0
    %170 = vmatprep.subr.mxu0 0.0
    %171 = vmatpush1.msra.mxu0 %v82
    %172 = vmatprep.subr.mxu0 0.0
    %173 = vmatpush1.msra.mxu0 %v83
    %174 = vmatprep.subr.mxu0 0.0
    %175 = vmatpush1.msra.mxu0 %v168
    %176 = vmatprep.subr.mxu0 0.0
    %177 = vmatpush1.msra.mxu0 0.0
    %178 = vmatprep.subr.mxu0 0.0
    %179 = vmatpush1.msra.mxu0 0.0
    %180 = vmatprep.subr.mxu0 0.0
    %181 = vmatpush1.msra.mxu0 0.0
    %182 = vmatprep.subr.mxu0 0.0
    %183 = vmatpush1.msra.mxu0 0.0
    %184 = vmatprep.subr.mxu0 0.0
    %185 = vmatpush1.msra.mxu0 0.0
    %186 = vmatprep.subr.mxu0 0.0
    %187 = vmatpush1.msra.mxu0 0.0
    %188 = vmatprep.subr.mxu0 0.0
    %189 = vmatpush1.msra.mxu0 0.0
    %190 = vmatprep.subr.mxu0 0.0
    %191 = vmatpush1.msra.mxu0 0.0
    %192 = vmatprep.subr.mxu0 0.0
    %193 = vmatpush1.msra.mxu0 0.0
    %194 = vmatprep.subr.mxu0 0.0
    %195 = vmatpush1.msra.mxu0 0.0
    %196 = vmatprep.subr.mxu0 0.0
    %197 = vmatpush1.msra.mxu0 0.0
    %198 = vmatprep.subr.mxu0 0.0
    %199 = vmatpush1.msra.mxu0 0.0
    %200 = vmatprep.subr.mxu0 0.0
    %201 = vmatpush1.msra.mxu0 0.0
    %202 = vmatprep.subr.mxu0 0.0
    %203 = vmatpush1.msra.mxu0 0.0
    %204 = vmatprep.subr.mxu0 0.0
    %205 = vmatpush1.msra.mxu0 0.0
    %206 = vmatprep.subr.mxu0 0.0
    %207 = vmatpush1.msra.mxu0 0.0
    %208 = vmatprep.subr.mxu0 0.0
    %209 = vmatpush1.msra.mxu0 0.0
    %210 = vmatprep.subr.mxu0 0.0
    %211 = vmatpush1.msra.mxu0 0.0
    %212 = vmatprep.subr.mxu0 0.0
    %213 = vmatpush1.msra.mxu0 0.0
    %214 = vmatprep.subr.mxu0 0.0
    %215 = vmatpush1.msra.mxu0 0.0
    %216 = vmatprep.subr.mxu0 0.0
    %217 = vmatpush1.msra.mxu0 0.0
    %218 = vmatprep.subr.mxu0 0.0
    %219 = vmatpush1.msra.mxu0 0.0
    %220 = vmatprep.subr.mxu0 0.0
    %221 = vmatpush1.msra.mxu0 0.0
    %222 = vmatprep.subr.mxu0 0.0
    %223 = vmatpush1.msra.mxu0 0.0
    %224 = vmatprep.subr.mxu0 0.0
    %225 = vmatpush1.msra.mxu0 0.0
    %226 = vmatprep.subr.mxu0 0.0
    %227 = vmatpush1.msra.mxu0 0.0
    %228 = vmatprep.subr.mxu0 0.0
    %229 = vmatpush1.msra.mxu0 0.0
    %230 = vmatprep.subr.mxu0 0.0
    %231 = vmatpush1.msra.mxu0 0.0
    %232 = vmatprep.subr.mxu0 0.0
    %233 = vmatpush1.msra.mxu0 0.0
    %234 = vmatprep.mubr.f32.mxu0 0.0
    %235 = vmatmul.mubr.f32.gmra.mrb[0].mxu0 %v143
    %v236 = vpop.f32.mrb[0].mxu0
    %v237 = vadd.f32 %v104, %v236
    %v238 = vpop.f32.mrb[0].mxu0
    %239 = vmatprep.mubr.f32.mxu0 0.0
    %240 = vmatmul.mubr.f32.gmra.mrb[0].mxu0 %v146
    %v241 = vpop.f32.mrb[0].mxu0
    %v242 = vadd.f32 %v109, %v241
    %v243 = vpop.f32.mrb[0].mxu0
    %244 = vmatprep.mubr.f32.mxu0 0.0
    %245 = vmatmul.mubr.f32.gmra.mrb[0].mxu0 %v149
    %v246 = vpop.f32.mrb[0].mxu0
    %v247 = vadd.f32 %v114, %v246
    %v248 = vpop.f32.mrb[0].mxu0
    %249 = vmatprep.mubr.f32.mxu0 0.0
    %250 = vmatmul.mubr.f32.gmra.mrb[0].mxu0 %v152
    %v251 = vpop.f32.mrb[0].mxu0
    %v252 = vadd.f32 %v119, %v251
    %v253 = vpop.f32.mrb[0].mxu0
    %254 = vmatprep.mubr.f32.mxu0 0.0
    %255 = vmatmul.mubr.f32.gmra.mrb[0].mxu0 %v155
    %v256 = vpop.f32.mrb[0].mxu0
    %v257 = vadd.f32 %v124, %v256
    %v258 = vpop.f32.mrb[0].mxu0
    %259 = vmatprep.mubr.f32.mxu0 0.0
    %260 = vmatmul.mubr.f32.gmra.mrb[0].mxu0 %v158
    %v261 = vpop.f32.mrb[0].mxu0
    %v262 = vadd.f32 %v129, %v261
    %v263 = vpop.f32.mrb[0].mxu0
    %264 = vmatprep.mubr.f32.mxu0 0.0
    %265 = vmatmul.mubr.f32.gmra.mrb[0].mxu0 %v161
    %v266 = vpop.f32.mrb[0].mxu0
    %v267 = vadd.f32 %v134, %v266
    %v268 = vpop.f32.mrb[0].mxu0
    %269 = vmatprep.mubr.f32.mxu0 0.0
    %270 = vmatmul.mubr.f32.gmra.mrb[0].mxu0 %v164
    %v271 = vpop.f32.mrb[0].mxu0
    %v272 = vadd.f32 %v139, %v271
    %v273 = vpop.f32.mrb[0].mxu0
    %274 = vdwg.mxu0
    %v275 = vmax.f32 %v237, 0.0
    %v276 = vmax.f32 %v242, 0.0
    %v277 = vmax.f32 %v247, 0.0
    %v278 = vmax.f32 %v252, 0.0
    %v279 = vmax.f32 %v257, 0.0
    %v280 = vmax.f32 %v262, 0.0
    %v281 = vmax.f32 %v267, 0.0
    %v282 = vmax.f32 %v272, 0.0
    %v283 = vld [vmem:[%s2] sm:$0xff]
    %v284 = vld [vmem:[%s2 + $0x8] sm:$0xff]
    %v285 = vld [vmem:[%s2 + $0x10] sm:$0xff]
    %v286 = vld [vmem:[%s2 + $0x18] sm:$0xff]
    %v287 = vld [vmem:[%s2 + $0x20] sm:$0xff]
    %v288 = vld [vmem:[%s2 + $0x28] sm:$0xff]
    %v289 = vld [vmem:[%s2 + $0x30] sm:$0xff]
    %v290 = vld [vmem:[%s2 + $0x38] sm:$0xf]
    %v291 = vld [vmem:[%s7] sm:$0xff]
    %v292 = vld [vmem:[%s7 + $0x8] sm:$0xff]
    %v293 = vld [vmem:[%s7 + $0x10] sm:$0xff]
    %v294 = vld [vmem:[%s7 + $0x18] sm:$0xff]
    %v295 = vld [vmem:[%s7 + $0x20] sm:$0xff]
    %v296 = vld [vmem:[%s7 + $0x28] sm:$0xff]
    %v297 = vld [vmem:[%s7 + $0x30] sm:$0xff]
    %v298 = vld [vmem:[%s7 + $0x38] sm:$0xf]
    %300 = vset.pattern.permute.xlu0 0
    %301 = vperm.xlu0 %300, %v291
    %v302 = vpop.permute.xlu0 %301
    %305 = vset.pattern.permute.xlu0 0
    %306 = vperm.xlu0 %305, %v292
    %v307 = vpop.permute.xlu0 %306
    %310 = vset.pattern.permute.xlu0 0
    %311 = vperm.xlu0 %310, %v293
    %v312 = vpop.permute.xlu0 %311
    %315 = vset.pattern.permute.xlu0 0
    %316 = vperm.xlu0 %315, %v294
    %v317 = vpop.permute.xlu0 %316
    %320 = vset.pattern.permute.xlu0 0
    %321 = vperm.xlu0 %320, %v295
    %v322 = vpop.permute.xlu0 %321
    %325 = vset.pattern.permute.xlu0 0
    %326 = vperm.xlu0 %325, %v296
    %v327 = vpop.permute.xlu0 %326
    %330 = vset.pattern.permute.xlu0 0
    %331 = vperm.xlu0 %330, %v297
    %v332 = vpop.permute.xlu0 %331
    %335 = vset.pattern.permute.xlu0 0
    %336 = vperm.xlu0 %335, %v298
    %v337 = vpop.permute.xlu0 %336
    %vm339 = vcmask 490496
    %v341 = vsel %vm339, %v283, 0
    %v344 = vsel %vm339, %v284, 0
    %v347 = vsel %vm339, %v285, 0
    %v350 = vsel %vm339, %v286, 0
    %v353 = vsel %vm339, %v287, 0
    %v356 = vsel %vm339, %v288, 0
    %v359 = vsel %vm339, %v289, 0
    %v362 = vsel %vm339, %v290, 0
    %vm364 = vcmask 1043456
    %v366 = vsel %vm364, %v282, 0
    %368 = vmatprep.subr.mxu0 0.0
    %369 = vmatpush1.msra.mxu0 %v275
    %370 = vmatprep.subr.mxu0 0.0
    %371 = vmatpush1.msra.mxu0 %v276
    %372 = vmatprep.subr.mxu0 0.0
    %373 = vmatpush1.msra.mxu0 %v277
    %374 = vmatprep.subr.mxu0 0.0
    %375 = vmatpush1.msra.mxu0 %v278
    %376 = vmatprep.subr.mxu0 0.0
    %377 = vmatpush1.msra.mxu0 %v279
    %378 = vmatprep.subr.mxu0 0.0
    %379 = vmatpush1.msra.mxu0 %v280
    %380 = vmatprep.subr.mxu0 0.0
    %381 = vmatpush1.msra.mxu0 %v281
    %382 = vmatprep.subr.mxu0 0.0
    %383 = vmatpush1.msra.mxu0 %v366
    %384 = vmatprep.subr.mxu0 0.0
    %385 = vmatpush1.msra.mxu0 0.0
    %386 = vmatprep.subr.mxu0 0.0
    %387 = vmatpush1.msra.mxu0 0.0
    %388 = vmatprep.subr.mxu0 0.0
    %389 = vmatpush1.msra.mxu0 0.0
    %390 = vmatprep.subr.mxu0 0.0
    %391 = vmatpush1.msra.mxu0 0.0
    %392 = vmatprep.subr.mxu0 0.0
    %393 = vmatpush1.msra.mxu0 0.0
    %394 = vmatprep.subr.mxu0 0.0
    %395 = vmatpush1.msra.mxu0 0.0
    %396 = vmatprep.subr.mxu0 0.0
    %397 = vmatpush1.msra.mxu0 0.0
    %398 = vmatprep.subr.mxu0 0.0
    %399 = vmatpush1.msra.mxu0 0.0
    %400 = vmatprep.subr.mxu0 0.0
    %401 = vmatpush1.msra.mxu0 0.0
    %402 = vmatprep.subr.mxu0 0.0
    %403 = vmatpush1.msra.mxu0 0.0
    %404 = vmatprep.subr.mxu0 0.0
    %405 = vmatpush1.msra.mxu0 0.0
    %406 = vmatprep.subr.mxu0 0.0
    %407 = vmatpush1.msra.mxu0 0.0
    %408 = vmatprep.subr.mxu0 0.0
    %409 = vmatpush1.msra.mxu0 0.0
    %410 = vmatprep.subr.mxu0 0.0
    %411 = vmatpush1.msra.mxu0 0.0
    %412 = vmatprep.subr.mxu0 0.0
    %413 = vmatpush1.msra.mxu0 0.0
    %414 = vmatprep.subr.mxu0 0.0
    %415 = vmatpush1.msra.mxu0 0.0
    %416 = vmatprep.subr.mxu0 0.0
    %417 = vmatpush1.msra.mxu0 0.0
    %418 = vmatprep.subr.mxu0 0.0
    %419 = vmatpush1.msra.mxu0 0.0
    %420 = vmatprep.subr.mxu0 0.0
    %421 = vmatpush1.msra.mxu0 0.0
    %422 = vmatprep.subr.mxu0 0.0
    %423 = vmatpush1.msra.mxu0 0.0
    %424 = vmatprep.subr.mxu0 0.0
    %425 = vmatpush1.msra.mxu0 0.0
    %426 = vmatprep.subr.mxu0 0.0
    %427 = vmatpush1.msra.mxu0 0.0
    %428 = vmatprep.subr.mxu0 0.0
    %429 = vmatpush1.msra.mxu0 0.0
    %430 = vmatprep.subr.mxu0 0.0
    %431 = vmatpush1.msra.mxu0 0.0
    %432 = vmatprep.mubr.f32.mxu0 0.0
    %433 = vmatmul.mubr.f32.gmra.mrb[0].mxu0 %v341
    %v434 = vpop.f32.mrb[0].mxu0
    %v435 = vadd.f32 %v302, %v434
    %v436 = vpop.f32.mrb[0].mxu0
    %437 = vmatprep.mubr.f32.mxu0 0.0
    %438 = vmatmul.mubr.f32.gmra.mrb[0].mxu0 %v344
    %v439 = vpop.f32.mrb[0].mxu0
    %v440 = vadd.f32 %v307, %v439
    %v441 = vpop.f32.mrb[0].mxu0
    %442 = vmatprep.mubr.f32.mxu0 0.0
    %443 = vmatmul.mubr.f32.gmra.mrb[0].mxu0 %v347
    %v444 = vpop.f32.mrb[0].mxu0
    %v445 = vadd.f32 %v312, %v444
    %v446 = vpop.f32.mrb[0].mxu0
    %447 = vmatprep.mubr.f32.mxu0 0.0
    %448 = vmatmul.mubr.f32.gmra.mrb[0].mxu0 %v350
    %v449 = vpop.f32.mrb[0].mxu0
    %v450 = vadd.f32 %v317, %v449
    %v451 = vpop.f32.mrb[0].mxu0
    %452 = vmatprep.mubr.f32.mxu0 0.0
    %453 = vmatmul.mubr.f32.gmra.mrb[0].mxu0 %v353
    %v454 = vpop.f32.mrb[0].mxu0
    %v455 = vadd.f32 %v322, %v454
    %v456 = vpop.f32.mrb[0].mxu0
    %457 = vmatprep.mubr.f32.mxu0 0.0
    %458 = vmatmul.mubr.f32.gmra.mrb[0].mxu0 %v356
    %v459 = vpop.f32.mrb[0].mxu0
    %v460 = vadd.f32 %v327, %v459
    %v461 = vpop.f32.mrb[0].mxu0
    %462 = vmatprep.mubr.f32.mxu0 0.0
    %463 = vmatmul.mubr.f32.gmra.mrb[0].mxu0 %v359
    %v464 = vpop.f32.mrb[0].mxu0
    %v465 = vadd.f32 %v332, %v464
    %v466 = vpop.f32.mrb[0].mxu0
    %467 = vmatprep.mubr.f32.mxu0 0.0
    %468 = vmatmul.mubr.f32.gmra.mrb[0].mxu0 %v362
    %v469 = vpop.f32.mrb[0].mxu0
    %v470 = vadd.f32 %v337, %v469
    %v471 = vpop.f32.mrb[0].mxu0
    %472 = vdwg.mxu0
    %v473 = vmax.f32 %v435, 0.0
    %v474 = vmax.f32 %v440, 0.0
    %v475 = vmax.f32 %v445, 0.0
    %v476 = vmax.f32 %v450, 0.0
    %v477 = vmax.f32 %v455, 0.0
    %v478 = vmax.f32 %v460, 0.0
    %v479 = vmax.f32 %v465, 0.0
    %v480 = vmax.f32 %v470, 0.0
    %s481 = scalar_lea.vmem %s2, 64
    %v482 = vld [vmem:[%s481] sm:$0xff]
    %v483 = vld [vmem:[%s481 + $0x8] sm:$0xff]
    %v484 = vld [vmem:[%s481 + $0x10] sm:$0xff]
    %v485 = vld [vmem:[%s481 + $0x18] sm:$0xff]
    %v486 = vld [vmem:[%s481 + $0x20] sm:$0xff]
    %v487 = vld [vmem:[%s481 + $0x28] sm:$0xff]
    %v488 = vld [vmem:[%s481 + $0x30] sm:$0xff]
    %v489 = vld [vmem:[%s481 + $0x38] sm:$0xf]
    %490 = vset.pattern.permute.xlu0 1
    %491 = vperm.xlu0 %490, %v291
    %v492 = vpop.permute.xlu0 %491
    %494 = vset.pattern.permute.xlu0 1
    %495 = vperm.xlu0 %494, %v292
    %v496 = vpop.permute.xlu0 %495
    %498 = vset.pattern.permute.xlu0 1
    %499 = vperm.xlu0 %498, %v293
    %v500 = vpop.permute.xlu0 %499
    %502 = vset.pattern.permute.xlu0 1
    %503 = vperm.xlu0 %502, %v294
    %v504 = vpop.permute.xlu0 %503
    %506 = vset.pattern.permute.xlu0 1
    %507 = vperm.xlu0 %506, %v295
    %v508 = vpop.permute.xlu0 %507
    %510 = vset.pattern.permute.xlu0 1
    %511 = vperm.xlu0 %510, %v296
    %v512 = vpop.permute.xlu0 %511
    %514 = vset.pattern.permute.xlu0 1
    %515 = vperm.xlu0 %514, %v297
    %v516 = vpop.permute.xlu0 %515
    %518 = vset.pattern.permute.xlu0 1
    %519 = vperm.xlu0 %518, %v298
    %v520 = vpop.permute.xlu0 %519
    %v523 = vsel %vm339, %v482, 0
    %v526 = vsel %vm339, %v483, 0
    %v529 = vsel %vm339, %v484, 0
    %v532 = vsel %vm339, %v485, 0
    %v535 = vsel %vm339, %v486, 0
    %v538 = vsel %vm339, %v487, 0
    %v541 = vsel %vm339, %v488, 0
    %v544 = vsel %vm339, %v489, 0
    %v547 = vsel %vm364, %v480, 0
    %549 = vmatprep.subr.mxu0 0.0
    %550 = vmatpush1.msra.mxu0 %v473
    %551 = vmatprep.subr.mxu0 0.0
    %552 = vmatpush1.msra.mxu0 %v474
    %553 = vmatprep.subr.mxu0 0.0
    %554 = vmatpush1.msra.mxu0 %v475
    %555 = vmatprep.subr.mxu0 0.0
    %556 = vmatpush1.msra.mxu0 %v476
    %557 = vmatprep.subr.mxu0 0.0
    %558 = vmatpush1.msra.mxu0 %v477
    %559 = vmatprep.subr.mxu0 0.0
    %560 = vmatpush1.msra.mxu0 %v478
    %561 = vmatprep.subr.mxu0 0.0
    %562 = vmatpush1.msra.mxu0 %v479
    %563 = vmatprep.subr.mxu0 0.0
    %564 = vmatpush1.msra.mxu0 %v547
    %565 = vmatprep.subr.mxu0 0.0
    %566 = vmatpush1.msra.mxu0 0.0
    %567 = vmatprep.subr.mxu0 0.0
    %568 = vmatpush1.msra.mxu0 0.0
    %569 = vmatprep.subr.mxu0 0.0
    %570 = vmatpush1.msra.mxu0 0.0
    %571 = vmatprep.subr.mxu0 0.0
    %572 = vmatpush1.msra.mxu0 0.0
    %573 = vmatprep.subr.mxu0 0.0
    %574 = vmatpush1.msra.mxu0 0.0
    %575 = vmatprep.subr.mxu0 0.0
    %576 = vmatpush1.msra.mxu0 0.0
    %577 = vmatprep.subr.mxu0 0.0
    %578 = vmatpush1.msra.mxu0 0.0
    %579 = vmatprep.subr.mxu0 0.0
    %580 = vmatpush1.msra.mxu0 0.0
    %581 = vmatprep.subr.mxu0 0.0
    %582 = vmatpush1.msra.mxu0 0.0
    %583 = vmatprep.subr.mxu0 0.0
    %584 = vmatpush1.msra.mxu0 0.0
    %585 = vmatprep.subr.mxu0 0.0
    %586 = vmatpush1.msra.mxu0 0.0
    %587 = vmatprep.subr.mxu0 0.0
    %588 = vmatpush1.msra.mxu0 0.0
    %589 = vmatprep.subr.mxu0 0.0
    %590 = vmatpush1.msra.mxu0 0.0
    %591 = vmatprep.subr.mxu0 0.0
    %592 = vmatpush1.msra.mxu0 0.0
    %593 = vmatprep.subr.mxu0 0.0
    %594 = vmatpush1.msra.mxu0 0.0
    %595 = vmatprep.subr.mxu0 0.0
    %596 = vmatpush1.msra.mxu0 0.0
    %597 = vmatprep.subr.mxu0 0.0
    %598 = vmatpush1.msra.mxu0 0.0
    %599 = vmatprep.subr.mxu0 0.0
    %600 = vmatpush1.msra.mxu0 0.0
    %601 = vmatprep.subr.mxu0 0.0
    %602 = vmatpush1.msra.mxu0 0.0
    %603 = vmatprep.subr.mxu0 0.0
    %604 = vmatpush1.msra.mxu0 0.0
    %605 = vmatprep.subr.mxu0 0.0
    %606 = vmatpush1.msra.mxu0 0.0
    %607 = vmatprep.subr.mxu0 0.0
    %608 = vmatpush1.msra.mxu0 0.0
    %609 = vmatprep.subr.mxu0 0.0
    %610 = vmatpush1.msra.mxu0 0.0
    %611 = vmatprep.subr.mxu0 0.0
    %612 = vmatpush1.msra.mxu0 0.0
    %613 = vmatprep.mubr.f32.mxu0 0.0
    %614 = vmatmul.mubr.f32.gmra.mrb[0].mxu0 %v523
    %v615 = vpop.f32.mrb[0].mxu0
    %v616 = vadd.f32 %v492, %v615
    %v617 = vpop.f32.mrb[0].mxu0
    %618 = vmatprep.mubr.f32.mxu0 0.0
    %619 = vmatmul.mubr.f32.gmra.mrb[0].mxu0 %v526
    %v620 = vpop.f32.mrb[0].mxu0
    %v621 = vadd.f32 %v496, %v620
    %v622 = vpop.f32.mrb[0].mxu0
    %623 = vmatprep.mubr.f32.mxu0 0.0
    %624 = vmatmul.mubr.f32.gmra.mrb[0].mxu0 %v529
    %v625 = vpop.f32.mrb[0].mxu0
    %v626 = vadd.f32 %v500, %v625
    %v627 = vpop.f32.mrb[0].mxu0
    %628 = vmatprep.mubr.f32.mxu0 0.0
    %629 = vmatmul.mubr.f32.gmra.mrb[0].mxu0 %v532
    %v630 = vpop.f32.mrb[0].mxu0
    %v631 = vadd.f32 %v504, %v630
    %v632 = vpop.f32.mrb[0].mxu0
    %633 = vmatprep.mubr.f32.mxu0 0.0
    %634 = vmatmul.mubr.f32.gmra.mrb[0].mxu0 %v535
    %v635 = vpop.f32.mrb[0].mxu0
    %v636 = vadd.f32 %v508, %v635
    %v637 = vpop.f32.mrb[0].mxu0
    %638 = vmatprep.mubr.f32.mxu0 0.0
    %639 = vmatmul.mubr.f32.gmra.mrb[0].mxu0 %v538
    %v640 = vpop.f32.mrb[0].mxu0
    %v641 = vadd.f32 %v512, %v640
    %v642 = vpop.f32.mrb[0].mxu0
    %643 = vmatprep.mubr.f32.mxu0 0.0
    %644 = vmatmul.mubr.f32.gmra.mrb[0].mxu0 %v541
    %v645 = vpop.f32.mrb[0].mxu0
    %v646 = vadd.f32 %v516, %v645
    %v647 = vpop.f32.mrb[0].mxu0
    %648 = vmatprep.mubr.f32.mxu0 0.0
    %649 = vmatmul.mubr.f32.gmra.mrb[0].mxu0 %v544
    %v650 = vpop.f32.mrb[0].mxu0
    %v651 = vadd.f32 %v520, %v650
    %v652 = vpop.f32.mrb[0].mxu0
    %653 = vdwg.mxu0
    %v654 = vmax.f32 %v616, 0.0
    %v655 = vmax.f32 %v621, 0.0
    %v656 = vmax.f32 %v626, 0.0
    %v657 = vmax.f32 %v631, 0.0
    %v658 = vmax.f32 %v636, 0.0
    %v659 = vmax.f32 %v641, 0.0
    %v660 = vmax.f32 %v646, 0.0
    %v661 = vmax.f32 %v651, 0.0
    %s662 = scalar_lea.vmem %s2, 128
    %v663 = vld [vmem:[%s662] sm:$0xff]
    %v664 = vld [vmem:[%s662 + $0x8] sm:$0xff]
    %v665 = vld [vmem:[%s662 + $0x10] sm:$0xff]
    %v666 = vld [vmem:[%s662 + $0x18] sm:$0xff]
    %v667 = vld [vmem:[%s662 + $0x20] sm:$0xff]
    %v668 = vld [vmem:[%s662 + $0x28] sm:$0xff]
    %v669 = vld [vmem:[%s662 + $0x30] sm:$0xff]
    %v670 = vld [vmem:[%s662 + $0x38] sm:$0xf]
    %671 = vset.pattern.permute.xlu0 2
    %672 = vperm.xlu0 %671, %v291
    %v673 = vpop.permute.xlu0 %672
    %675 = vset.pattern.permute.xlu0 2
    %676 = vperm.xlu0 %675, %v292
    %v677 = vpop.permute.xlu0 %676
    %679 = vset.pattern.permute.xlu0 2
    %680 = vperm.xlu0 %679, %v293
    %v681 = vpop.permute.xlu0 %680
    %683 = vset.pattern.permute.xlu0 2
    %684 = vperm.xlu0 %683, %v294
    %v685 = vpop.permute.xlu0 %684
    %687 = vset.pattern.permute.xlu0 2
    %688 = vperm.xlu0 %687, %v295
    %v689 = vpop.permute.xlu0 %688
    %691 = vset.pattern.permute.xlu0 2
    %692 = vperm.xlu0 %691, %v296
    %v693 = vpop.permute.xlu0 %692
    %695 = vset.pattern.permute.xlu0 2
    %696 = vperm.xlu0 %695, %v297
    %v697 = vpop.permute.xlu0 %696
    %699 = vset.pattern.permute.xlu0 2
    %700 = vperm.xlu0 %699, %v298
    %v701 = vpop.permute.xlu0 %700
    %v704 = vsel %vm339, %v663, 0
    %v707 = vsel %vm339, %v664, 0
    %v710 = vsel %vm339, %v665, 0
    %v713 = vsel %vm339, %v666, 0
    %v716 = vsel %vm339, %v667, 0
    %v719 = vsel %vm339, %v668, 0
    %v722 = vsel %vm339, %v669, 0
    %v725 = vsel %vm339, %v670, 0
    %v728 = vsel %vm364, %v661, 0
    %730 = vmatprep.subr.mxu0 0.0
    %731 = vmatpush1.msra.mxu0 %v654
    %732 = vmatprep.subr.mxu0 0.0
    %733 = vmatpush1.msra.mxu0 %v655
    %734 = vmatprep.subr.mxu0 0.0
    %735 = vmatpush1.msra.mxu0 %v656
    %736 = vmatprep.subr.mxu0 0.0
    %737 = vmatpush1.msra.mxu0 %v657
    %738 = vmatprep.subr.mxu0 0.0
    %739 = vmatpush1.msra.mxu0 %v658
    %740 = vmatprep.subr.mxu0 0.0
    %741 = vmatpush1.msra.mxu0 %v659
    %742 = vmatprep.subr.mxu0 0.0
    %743 = vmatpush1.msra.mxu0 %v660
    %744 = vmatprep.subr.mxu0 0.0
    %745 = vmatpush1.msra.mxu0 %v728
    %746 = vmatprep.subr.mxu0 0.0
    %747 = vmatpush1.msra.mxu0 0.0
    %748 = vmatprep.subr.mxu0 0.0
    %749 = vmatpush1.msra.mxu0 0.0
    %750 = vmatprep.subr.mxu0 0.0
    %751 = vmatpush1.msra.mxu0 0.0
    %752 = vmatprep.subr.mxu0 0.0
    %753 = vmatpush1.msra.mxu0 0.0
    %754 = vmatprep.subr.mxu0 0.0
    %755 = vmatpush1.msra.mxu0 0.0
    %756 = vmatprep.subr.mxu0 0.0
    %757 = vmatpush1.msra.mxu0 0.0
    %758 = vmatprep.subr.mxu0 0.0
    %759 = vmatpush1.msra.mxu0 0.0
    %760 = vmatprep.subr.mxu0 0.0
    %761 = vmatpush1.msra.mxu0 0.0
    %762 = vmatprep.subr.mxu0 0.0
    %763 = vmatpush1.msra.mxu0 0.0
    %764 = vmatprep.subr.mxu0 0.0
    %765 = vmatpush1.msra.mxu0 0.0
    %766 = vmatprep.subr.mxu0 0.0
    %767 = vmatpush1.msra.mxu0 0.0
    %768 = vmatprep.subr.mxu0 0.0
    %769 = vmatpush1.msra.mxu0 0.0
    %770 = vmatprep.subr.mxu0 0.0
    %771 = vmatpush1.msra.mxu0 0.0
    %772 = vmatprep.subr.mxu0 0.0
    %773 = vmatpush1.msra.mxu0 0.0
    %774 = vmatprep.subr.mxu0 0.0
    %775 = vmatpush1.msra.mxu0 0.0
    %776 = vmatprep.subr.mxu0 0.0
    %777 = vmatpush1.msra.mxu0 0.0
    %778 = vmatprep.subr.mxu0 0.0
    %779 = vmatpush1.msra.mxu0 0.0
    %780 = vmatprep.subr.mxu0 0.0
    %781 = vmatpush1.msra.mxu0 0.0
    %782 = vmatprep.subr.mxu0 0.0
    %783 = vmatpush1.msra.mxu0 0.0
    %784 = vmatprep.subr.mxu0 0.0
    %785 = vmatpush1.msra.mxu0 0.0
    %786 = vmatprep.subr.mxu0 0.0
    %787 = vmatpush1.msra.mxu0 0.0
    %788 = vmatprep.subr.mxu0 0.0
    %789 = vmatpush1.msra.mxu0 0.0
    %790 = vmatprep.subr.mxu0 0.0
    %791 = vmatpush1.msra.mxu0 0.0
    %792 = vmatprep.subr.mxu0 0.0
    %793 = vmatpush1.msra.mxu0 0.0
    %794 = vmatprep.mubr.f32.mxu0 0.0
    %795 = vmatmul.mubr.f32.gmra.mrb[0].mxu0 %v704
    %v796 = vpop.f32.mrb[0].mxu0
    %v797 = vadd.f32 %v673, %v796
    %v798 = vpop.f32.mrb[0].mxu0
    %799 = vmatprep.mubr.f32.mxu0 0.0
    %800 = vmatmul.mubr.f32.gmra.mrb[0].mxu0 %v707
    %v801 = vpop.f32.mrb[0].mxu0
    %v802 = vadd.f32 %v677, %v801
    %v803 = vpop.f32.mrb[0].mxu0
    %804 = vmatprep.mubr.f32.mxu0 0.0
    %805 = vmatmul.mubr.f32.gmra.mrb[0].mxu0 %v710
    %v806 = vpop.f32.mrb[0].mxu0
    %v807 = vadd.f32 %v681, %v806
    %v808 = vpop.f32.mrb[0].mxu0
    %809 = vmatprep.mubr.f32.mxu0 0.0
    %810 = vmatmul.mubr.f32.gmra.mrb[0].mxu0 %v713
    %v811 = vpop.f32.mrb[0].mxu0
    %v812 = vadd.f32 %v685, %v811
    %v813 = vpop.f32.mrb[0].mxu0
    %814 = vmatprep.mubr.f32.mxu0 0.0
    %815 = vmatmul.mubr.f32.gmra.mrb[0].mxu0 %v716
    %v816 = vpop.f32.mrb[0].mxu0
    %v817 = vadd.f32 %v689, %v816
    %v818 = vpop.f32.mrb[0].mxu0
    %819 = vmatprep.mubr.f32.mxu0 0.0
    %820 = vmatmul.mubr.f32.gmra.mrb[0].mxu0 %v719
    %v821 = vpop.f32.mrb[0].mxu0
    %v822 = vadd.f32 %v693, %v821
    %v823 = vpop.f32.mrb[0].mxu0
    %824 = vmatprep.mubr.f32.mxu0 0.0
    %825 = vmatmul.mubr.f32.gmra.mrb[0].mxu0 %v722
    %v826 = vpop.f32.mrb[0].mxu0
    %v827 = vadd.f32 %v697, %v826
    %v828 = vpop.f32.mrb[0].mxu0
    %829 = vmatprep.mubr.f32.mxu0 0.0
    %830 = vmatmul.mubr.f32.gmra.mrb[0].mxu0 %v725
    %v831 = vpop.f32.mrb[0].mxu0
    %v832 = vadd.f32 %v701, %v831
    %v833 = vpop.f32.mrb[0].mxu0
    %834 = vdwg.mxu0
    %v835 = vmax.f32 %v797, 0.0
    %v836 = vmax.f32 %v802, 0.0
    %v837 = vmax.f32 %v807, 0.0
    %v838 = vmax.f32 %v812, 0.0
    %v839 = vmax.f32 %v817, 0.0
    %v840 = vmax.f32 %v822, 0.0
    %v841 = vmax.f32 %v827, 0.0
    %v842 = vmax.f32 %v832, 0.0
    %v843 = vld [vmem:[%s3] sm:$0xff]
    %v844 = vld [vmem:[%s3 + $0x8] sm:$0xff]
    %v845 = vld [vmem:[%s3 + $0x10] sm:$0xff]
    %v846 = vld [vmem:[%s3 + $0x18] sm:$0xff]
    %v847 = vld [vmem:[%s8] sm:$0xff]
    %v848 = vld [vmem:[%s8 + $0x8] sm:$0xff]
    %v849 = vld [vmem:[%s8 + $0x10] sm:$0xff]
    %v850 = vld [vmem:[%s8 + $0x18] sm:$0xff]
    %852 = vset.pattern.permute.xlu0 0
    %853 = vperm.xlu0 %852, %v847
    %v854 = vpop.permute.xlu0 %853
    %857 = vset.pattern.permute.xlu0 0
    %858 = vperm.xlu0 %857, %v848
    %v859 = vpop.permute.xlu0 %858
    %862 = vset.pattern.permute.xlu0 0
    %863 = vperm.xlu0 %862, %v849
    %v864 = vpop.permute.xlu0 %863
    %867 = vset.pattern.permute.xlu0 0
    %868 = vperm.xlu0 %867, %v850
    %v869 = vpop.permute.xlu0 %868
    %v872 = vsel %vm339, %v843, 0
    %v875 = vsel %vm339, %v844, 0
    %v878 = vsel %vm339, %v845, 0
    %v881 = vsel %vm339, %v846, 0
    %v884 = vsel %vm364, %v842, 0
    %886 = vmatprep.subr.mxu0 0.0
    %887 = vmatpush1.msra.mxu0 %v835
    %888 = vmatprep.subr.mxu0 0.0
    %889 = vmatpush1.msra.mxu0 %v836
    %890 = vmatprep.subr.mxu0 0.0
    %891 = vmatpush1.msra.mxu0 %v837
    %892 = vmatprep.subr.mxu0 0.0
    %893 = vmatpush1.msra.mxu0 %v838
    %894 = vmatprep.subr.mxu0 0.0
    %895 = vmatpush1.msra.mxu0 %v839
    %896 = vmatprep.subr.mxu0 0.0
    %897 = vmatpush1.msra.mxu0 %v840
    %898 = vmatprep.subr.mxu0 0.0
    %899 = vmatpush1.msra.mxu0 %v841
    %900 = vmatprep.subr.mxu0 0.0
    %901 = vmatpush1.msra.mxu0 %v884
    %902 = vmatprep.subr.mxu0 0.0
    %903 = vmatpush1.msra.mxu0 0.0
    %904 = vmatprep.subr.mxu0 0.0
    %905 = vmatpush1.msra.mxu0 0.0
    %906 = vmatprep.subr.mxu0 0.0
    %907 = vmatpush1.msra.mxu0 0.0
    %908 = vmatprep.subr.mxu0 0.0
    %909 = vmatpush1.msra.mxu0 0.0
    %910 = vmatprep.subr.mxu0 0.0
    %911 = vmatpush1.msra.mxu0 0.0
    %912 = vmatprep.subr.mxu0 0.0
    %913 = vmatpush1.msra.mxu0 0.0
    %914 = vmatprep.subr.mxu0 0.0
    %915 = vmatpush1.msra.mxu0 0.0
    %916 = vmatprep.subr.mxu0 0.0
    %917 = vmatpush1.msra.mxu0 0.0
    %918 = vmatprep.subr.mxu0 0.0
    %919 = vmatpush1.msra.mxu0 0.0
    %920 = vmatprep.subr.mxu0 0.0
    %921 = vmatpush1.msra.mxu0 0.0
    %922 = vmatprep.subr.mxu0 0.0
    %923 = vmatpush1.msra.mxu0 0.0
    %924 = vmatprep.subr.mxu0 0.0
    %925 = vmatpush1.msra.mxu0 0.0
    %926 = vmatprep.subr.mxu0 0.0
    %927 = vmatpush1.msra.mxu0 0.0
    %928 = vmatprep.subr.mxu0 0.0
    %929 = vmatpush1.msra.mxu0 0.0
    %930 = vmatprep.subr.mxu0 0.0
    %931 = vmatpush1.msra.mxu0 0.0
    %932 = vmatprep.subr.mxu0 0.0
    %933 = vmatpush1.msra.mxu0 0.0
    %934 = vmatprep.subr.mxu0 0.0
    %935 = vmatpush1.msra.mxu0 0.0
    %936 = vmatprep.subr.mxu0 0.0
    %937 = vmatpush1.msra.mxu0 0.0
    %938 = vmatprep.subr.mxu0 0.0
    %939 = vmatpush1.msra.mxu0 0.0
    %940 = vmatprep.subr.mxu0 0.0
    %941 = vmatpush1.msra.mxu0 0.0
    %942 = vmatprep.subr.mxu0 0.0
    %943 = vmatpush1.msra.mxu0 0.0
    %944 = vmatprep.subr.mxu0 0.0
    %945 = vmatpush1.msra.mxu0 0.0
    %946 = vmatprep.subr.mxu0 0.0
    %947 = vmatpush1.msra.mxu0 0.0
    %948 = vmatprep.subr.mxu0 0.0
    %949 = vmatpush1.msra.mxu0 0.0
    %950 = vmatprep.mubr.f32.mxu0 0.0
    %951 = vmatmul.mubr.f32.gmra.mrb[0].mxu0 %v872
    %v952 = vpop.f32.mrb[0].mxu0
    %v953 = vadd.f32 %v854, %v952
    %v954 = vpop.f32.mrb[0].mxu0
    %955 = vmatprep.mubr.f32.mxu0 0.0
    %956 = vmatmul.mubr.f32.gmra.mrb[0].mxu0 %v875
    %v957 = vpop.f32.mrb[0].mxu0
    %v958 = vadd.f32 %v859, %v957
    %v959 = vpop.f32.mrb[0].mxu0
    %960 = vmatprep.mubr.f32.mxu0 0.0
    %961 = vmatmul.mubr.f32.gmra.mrb[0].mxu0 %v878
    %v962 = vpop.f32.mrb[0].mxu0
    %v963 = vadd.f32 %v864, %v962
    %v964 = vpop.f32.mrb[0].mxu0
    %965 = vmatprep.mubr.f32.mxu0 0.0
    %966 = vmatmul.mubr.f32.gmra.mrb[0].mxu0 %v881
    %v967 = vpop.f32.mrb[0].mxu0
    %v968 = vadd.f32 %v869, %v967
    %v969 = vpop.f32.mrb[0].mxu0
    %970 = vdwg.mxu0
    %v971 = vld [vmem:[%s4] sm:$0xff]
    %v972 = vld [vmem:[%s4 + $0x8] sm:$0xff]
    %v973 = vld [vmem:[%s4 + $0x10] sm:$0xff]
    %v974 = vld [vmem:[%s4 + $0x18] sm:$0xff]
    %v975 = vld [vmem:[%s9] sm:$0xff]
    %v976 = vld [vmem:[%s9 + $0x8] sm:$0xff]
    %v977 = vld [vmem:[%s9 + $0x10] sm:$0xff]
    %v978 = vld [vmem:[%s9 + $0x18] sm:$0xff]
    %980 = vset.pattern.permute.xlu0 0
    %981 = vperm.xlu0 %980, %v975
    %v982 = vpop.permute.xlu0 %981
    %985 = vset.pattern.permute.xlu0 0
    %986 = vperm.xlu0 %985, %v976
    %v987 = vpop.permute.xlu0 %986
    %990 = vset.pattern.permute.xlu0 0
    %991 = vperm.xlu0 %990, %v977
    %v992 = vpop.permute.xlu0 %991
    %995 = vset.pattern.permute.xlu0 0
    %996 = vperm.xlu0 %995, %v978
    %v997 = vpop.permute.xlu0 %996
    %vm999 = vcmask 261120
    %v1001 = vsel %vm999, %v971, 0
    %v1004 = vsel %vm999, %v972, 0
    %v1007 = vsel %vm999, %v973, 0
    %v1010 = vsel %vm999, %v974, 0
    %1012 = vmatprep.subr.mxu0 0.0
    %1013 = vmatpush1.msra.mxu0 %v953
    %1014 = vmatprep.subr.mxu0 0.0
    %1015 = vmatpush1.msra.mxu0 %v958
    %1016 = vmatprep.subr.mxu0 0.0
    %1017 = vmatpush1.msra.mxu0 %v963
    %1018 = vmatprep.subr.mxu0 0.0
    %1019 = vmatpush1.msra.mxu0 %v968
    %1020 = vmatprep.subr.mxu0 0.0
    %1021 = vmatpush1.msra.mxu0 0.0
    %1022 = vmatprep.subr.mxu0 0.0
    %1023 = vmatpush1.msra.mxu0 0.0
    %1024 = vmatprep.subr.mxu0 0.0
    %1025 = vmatpush1.msra.mxu0 0.0
    %1026 = vmatprep.subr.mxu0 0.0
    %1027 = vmatpush1.msra.mxu0 0.0
    %1028 = vmatprep.subr.mxu0 0.0
    %1029 = vmatpush1.msra.mxu0 0.0
    %1030 = vmatprep.subr.mxu0 0.0
    %1031 = vmatpush1.msra.mxu0 0.0
    %1032 = vmatprep.subr.mxu0 0.0
    %1033 = vmatpush1.msra.mxu0 0.0
    %1034 = vmatprep.subr.mxu0 0.0
    %1035 = vmatpush1.msra.mxu0 0.0
    %1036 = vmatprep.subr.mxu0 0.0
    %1037 = vmatpush1.msra.mxu0 0.0
    %1038 = vmatprep.subr.mxu0 0.0
    %1039 = vmatpush1.msra.mxu0 0.0
    %1040 = vmatprep.subr.mxu0 0.0
    %1041 = vmatpush1.msra.mxu0 0.0
    %1042 = vmatprep.subr.mxu0 0.0
    %1043 = vmatpush1.msra.mxu0 0.0
    %1044 = vmatprep.subr.mxu0 0.0
    %1045 = vmatpush1.msra.mxu0 0.0
    %1046 = vmatprep.subr.mxu0 0.0
    %1047 = vmatpush1.msra.mxu0 0.0
    %1048 = vmatprep.subr.mxu0 0.0
    %1049 = vmatpush1.msra.mxu0 0.0
    %1050 = vmatprep.subr.mxu0 0.0
    %1051 = vmatpush1.msra.mxu0 0.0
    %1052 = vmatprep.subr.mxu0 0.0
    %1053 = vmatpush1.msra.mxu0 0.0
    %1054 = vmatprep.subr.mxu0 0.0
    %1055 = vmatpush1.msra.mxu0 0.0
    %1056 = vmatprep.subr.mxu0 0.0
    %1057 = vmatpush1.msra.mxu0 0.0
    %1058 = vmatprep.subr.mxu0 0.0
    %1059 = vmatpush1.msra.mxu0 0.0
    %1060 = vmatprep.subr.mxu0 0.0
    %1061 = vmatpush1.msra.mxu0 0.0
    %1062 = vmatprep.subr.mxu0 0.0
    %1063 = vmatpush1.msra.mxu0 0.0
    %1064 = vmatprep.subr.mxu0 0.0
    %1065 = vmatpush1.msra.mxu0 0.0
    %1066 = vmatprep.subr.mxu0 0.0
    %1067 = vmatpush1.msra.mxu0 0.0
    %1068 = vmatprep.subr.mxu0 0.0
    %1069 = vmatpush1.msra.mxu0 0.0
    %1070 = vmatprep.subr.mxu0 0.0
    %1071 = vmatpush1.msra.mxu0 0.0
    %1072 = vmatprep.subr.mxu0 0.0
    %1073 = vmatpush1.msra.mxu0 0.0
    %1074 = vmatprep.subr.mxu0 0.0
    %1075 = vmatpush1.msra.mxu0 0.0
    %1076 = vmatprep.mubr.f32.mxu0 0.0
    %1077 = vmatmul.mubr.f32.gmra.mrb[0].mxu0 %v1001
    %v1078 = vpop.f32.mrb[0].mxu0
    %v1079 = vadd.f32 %v982, %v1078
    %v1080 = vpop.f32.mrb[0].mxu0
    %1081 = vmatprep.mubr.f32.mxu0 0.0
    %1082 = vmatmul.mubr.f32.gmra.mrb[0].mxu0 %v1004
    %v1083 = vpop.f32.mrb[0].mxu0
    %v1084 = vadd.f32 %v987, %v1083
    %v1085 = vpop.f32.mrb[0].mxu0
    %1086 = vmatprep.mubr.f32.mxu0 0.0
    %1087 = vmatmul.mubr.f32.gmra.mrb[0].mxu0 %v1007
    %v1088 = vpop.f32.mrb[0].mxu0
    %v1089 = vadd.f32 %v992, %v1088
    %v1090 = vpop.f32.mrb[0].mxu0
    %1091 = vmatprep.mubr.f32.mxu0 0.0
    %1092 = vmatmul.mubr.f32.gmra.mrb[0].mxu0 %v1010
    %v1093 = vpop.f32.mrb[0].mxu0
    %v1094 = vadd.f32 %v997, %v1093
    %v1095 = vpop.f32.mrb[0].mxu0
    %1096 = vdwg.mxu0
    %v1097 = vmax.f32 %v1079, 0.0
    %v1098 = vmax.f32 %v1084, 0.0
    %v1099 = vmax.f32 %v1089, 0.0
    %v1100 = vmax.f32 %v1094, 0.0
    %v1101 = vld [vmem:[%s5] sm:$0xff]
    %v1102 = vld [vmem:[%s5 + $0x8] sm:$0xff]
    %v1103 = vld [vmem:[%s5 + $0x10] sm:$0xff]
    %v1104 = vld [vmem:[%s5 + $0x18] sm:$0xff]
    %1106 = vset.pattern.permute.xlu0 0
    %1107 = vperm.xlu0 %1106, %v1101
    %v1108 = vpop.permute.xlu0 %1107
    %1111 = vset.pattern.permute.xlu0 0
    %1112 = vperm.xlu0 %1111, %v1102
    %v1113 = vpop.permute.xlu0 %1112
    %1116 = vset.pattern.permute.xlu0 0
    %1117 = vperm.xlu0 %1116, %v1103
    %v1118 = vpop.permute.xlu0 %1117
    %1121 = vset.pattern.permute.xlu0 0
    %1122 = vperm.xlu0 %1121, %v1104
    %v1123 = vpop.permute.xlu0 %1122
    %v1125 = vmul.f32 %v1108, %v1097
    %v1126 = vmul.f32 %v1113, %v1098
    %v1127 = vmul.f32 %v1118, %v1099
    %v1128 = vmul.f32 %v1123, %v1100
    %v1129 = vadd.f32 %v1125, %v1126
    %v1130 = vadd.f32 %v1129, %v1127
    %v1131 = vadd.f32 %v1130, %v1128
    %v1132 = vrot.slane %v1131, 4
    %v1133 = vadd.f32 %v1131, %v1132
    %v1134 = vrot.slane %v1133, 2
    %v1135 = vadd.f32 %v1133, %v1134
    %v1136 = vrot.slane %v1135, 1
    %v1137 = vadd.f32 %v1135, %v1136
    %v1138 = vld [vmem:[#allocation2] sm:$0x1]
    %1140 = vset.pattern.permute.xlu0 0
    %1141 = vperm.xlu0 %1140, %v1138
    %v1142 = vpop.permute.xlu0 %1141
    %v1144 = vlaneseq
    %v1145 = vshrl.u32 %v1144, 7
    %v1146 = vsub.s32 0, %v1145
    %v1147 = vrot.slane %v1142, %v1146
    %v1148 = vadd.f32 %v1137, %v1147
    %vm1149 = vcmp.gt.f32.partialorder %v1097, 0.0
    %vm1150 = vcmp.gt.f32.partialorder %v1098, 0.0
    %vm1151 = vcmp.gt.f32.partialorder %v1099, 0.0
    %vm1152 = vcmp.gt.f32.partialorder %v1100, 0.0
    %v1153 = vsel %vm1149, %v1108, 0.0
    %v1154 = vsel %vm1150, %v1113, 0.0
    %v1155 = vsel %vm1151, %v1118, 0.0
    %v1156 = vsel %vm1152, %v1123, 0.0
    %v1157 = vld [vmem:[%s14] sm:$0xff]
    %v1158 = vld [vmem:[%s14 + $0x8] sm:$0xff]
    %v1159 = vld [vmem:[%s14 + $0x10] sm:$0xff]
    %v1160 = vld [vmem:[%s14 + $0x18] sm:$0xff]
    %v1162 = vsel %vm999, %v1157, 0
    %v1165 = vsel %vm999, %v1158, 0
    %v1168 = vsel %vm999, %v1159, 0
    %v1171 = vsel %vm999, %v1160, 0
    %1173 = vmatprep.subr.mxu0 0.0
    %1174 = vmatpush1.msra.mxu0 %v1153
    %1175 = vmatprep.subr.mxu0 0.0
    %1176 = vmatpush1.msra.mxu0 %v1154
    %1177 = vmatprep.subr.mxu0 0.0
    %1178 = vmatpush1.msra.mxu0 %v1155
    %1179 = vmatprep.subr.mxu0 0.0
    %1180 = vmatpush1.msra.mxu0 %v1156
    %1181 = vmatprep.subr.mxu0 0.0
    %1182 = vmatpush1.msra.mxu0 0.0
    %1183 = vmatprep.subr.mxu0 0.0
    %1184 = vmatpush1.msra.mxu0 0.0
    %1185 = vmatprep.subr.mxu0 0.0
    %1186 = vmatpush1.msra.mxu0 0.0
    %1187 = vmatprep.subr.mxu0 0.0
    %1188 = vmatpush1.msra.mxu0 0.0
    %1189 = vmatprep.subr.mxu0 0.0
    %1190 = vmatpush1.msra.mxu0 0.0
    %1191 = vmatprep.subr.mxu0 0.0
    %1192 = vmatpush1.msra.mxu0 0.0
    %1193 = vmatprep.subr.mxu0 0.0
    %1194 = vmatpush1.msra.mxu0 0.0
    %1195 = vmatprep.subr.mxu0 0.0
    %1196 = vmatpush1.msra.mxu0 0.0
    %1197 = vmatprep.subr.mxu0 0.0
    %1198 = vmatpush1.msra.mxu0 0.0
    %1199 = vmatprep.subr.mxu0 0.0
    %1200 = vmatpush1.msra.mxu0 0.0
    %1201 = vmatprep.subr.mxu0 0.0
    %1202 = vmatpush1.msra.mxu0 0.0
    %1203 = vmatprep.subr.mxu0 0.0
    %1204 = vmatpush1.msra.mxu0 0.0
    %1205 = vmatprep.subr.mxu0 0.0
    %1206 = vmatpush1.msra.mxu0 0.0
    %1207 = vmatprep.subr.mxu0 0.0
    %1208 = vmatpush1.msra.mxu0 0.0
    %1209 = vmatprep.subr.mxu0 0.0
    %1210 = vmatpush1.msra.mxu0 0.0
    %1211 = vmatprep.subr.mxu0 0.0
    %1212 = vmatpush1.msra.mxu0 0.0
    %1213 = vmatprep.subr.mxu0 0.0
    %1214 = vmatpush1.msra.mxu0 0.0
    %1215 = vmatprep.subr.mxu0 0.0
    %1216 = vmatpush1.msra.mxu0 0.0
    %1217 = vmatprep.subr.mxu0 0.0
    %1218 = vmatpush1.msra.mxu0 0.0
    %1219 = vmatprep.subr.mxu0 0.0
    %1220 = vmatpush1.msra.mxu0 0.0
    %1221 = vmatprep.subr.mxu0 0.0
    %1222 = vmatpush1.msra.mxu0 0.0
    %1223 = vmatprep.subr.mxu0 0.0
    %1224 = vmatpush1.msra.mxu0 0.0
    %1225 = vmatprep.subr.mxu0 0.0
    %1226 = vmatpush1.msra.mxu0 0.0
    %1227 = vmatprep.subr.mxu0 0.0
    %1228 = vmatpush1.msra.mxu0 0.0
    %1229 = vmatprep.subr.mxu0 0.0
    %1230 = vmatpush1.msra.mxu0 0.0
    %1231 = vmatprep.subr.mxu0 0.0
    %1232 = vmatpush1.msra.mxu0 0.0
    %1233 = vmatprep.subr.mxu0 0.0
    %1234 = vmatpush1.msra.mxu0 0.0
    %1235 = vmatprep.subr.mxu0 0.0
    %1236 = vmatpush1.msra.mxu0 0.0
    %1237 = vmatprep.mubr.f32.mxu0 0.0
    %1238 = vmatmul.mubr.f32.gmra.mrb[0].mxu0 %v1162
    %v1239 = vpop.f32.mrb[0].mxu0
    %v1240 = vadd.f32 0.0, %v1239
    %v1241 = vpop.f32.mrb[0].mxu0
    %1242 = vmatprep.mubr.f32.mxu0 0.0
    %1243 = vmatmul.mubr.f32.gmra.mrb[0].mxu0 %v1165
    %v1244 = vpop.f32.mrb[0].mxu0
    %v1245 = vadd.f32 0.0, %v1244
    %v1246 = vpop.f32.mrb[0].mxu0
    %1247 = vmatprep.mubr.f32.mxu0 0.0
    %1248 = vmatmul.mubr.f32.gmra.mrb[0].mxu0 %v1168
    %v1249 = vpop.f32.mrb[0].mxu0
    %v1250 = vadd.f32 0.0, %v1249
    %v1251 = vpop.f32.mrb[0].mxu0
    %1252 = vmatprep.mubr.f32.mxu0 0.0
    %1253 = vmatmul.mubr.f32.gmra.mrb[0].mxu0 %v1171
    %v1254 = vpop.f32.mrb[0].mxu0
    %v1255 = vadd.f32 0.0, %v1254
    %v1256 = vpop.f32.mrb[0].mxu0
    %1257 = vdwg.mxu0
    %vm1258 = vcmp.gt.f32.partialorder %v835, 0.0
    %vm1259 = vcmp.gt.f32.partialorder %v836, 0.0
    %vm1260 = vcmp.gt.f32.partialorder %v837, 0.0
    %vm1261 = vcmp.gt.f32.partialorder %v838, 0.0
    %vm1262 = vcmp.gt.f32.partialorder %v839, 0.0
    %vm1263 = vcmp.gt.f32.partialorder %v840, 0.0
    %vm1264 = vcmp.gt.f32.partialorder %v841, 0.0
    %vm1265 = vcmp.gt.f32.partialorder %v842, 0.0
    %v1266 = vld [vmem:[%s13] sm:$0xff]
    %v1267 = vld [vmem:[%s13 + $0x8] sm:$0xff]
    %v1268 = vld [vmem:[%s13 + $0x10] sm:$0xff]
    %v1269 = vld [vmem:[%s13 + $0x18] sm:$0xff]
    %v1270 = vld [vmem:[%s13 + $0x20] sm:$0xff]
    %v1271 = vld [vmem:[%s13 + $0x28] sm:$0xff]
    %v1272 = vld [vmem:[%s13 + $0x30] sm:$0xff]
    %v1273 = vld [vmem:[%s13 + $0x38] sm:$0xf]
    %v1275 = vsel %vm999, %v1266, 0
    %v1278 = vsel %vm999, %v1267, 0
    %v1281 = vsel %vm999, %v1268, 0
    %v1284 = vsel %vm999, %v1269, 0
    %v1287 = vsel %vm999, %v1270, 0
    %v1290 = vsel %vm999, %v1271, 0
    %v1293 = vsel %vm999, %v1272, 0
    %v1296 = vsel %vm999, %v1273, 0
    %1298 = vmatprep.subr.mxu0 0.0
    %1299 = vmatpush1.msra.mxu0 %v1240
    %1300 = vmatprep.subr.mxu0 0.0
    %1301 = vmatpush1.msra.mxu0 %v1245
    %1302 = vmatprep.subr.mxu0 0.0
    %1303 = vmatpush1.msra.mxu0 %v1250
    %1304 = vmatprep.subr.mxu0 0.0
    %1305 = vmatpush1.msra.mxu0 %v1255
    %1306 = vmatprep.subr.mxu0 0.0
    %1307 = vmatpush1.msra.mxu0 0.0
    %1308 = vmatprep.subr.mxu0 0.0
    %1309 = vmatpush1.msra.mxu0 0.0
    %1310 = vmatprep.subr.mxu0 0.0
    %1311 = vmatpush1.msra.mxu0 0.0
    %1312 = vmatprep.subr.mxu0 0.0
    %1313 = vmatpush1.msra.mxu0 0.0
    %1314 = vmatprep.subr.mxu0 0.0
    %1315 = vmatpush1.msra.mxu0 0.0
    %1316 = vmatprep.subr.mxu0 0.0
    %1317 = vmatpush1.msra.mxu0 0.0
    %1318 = vmatprep.subr.mxu0 0.0
    %1319 = vmatpush1.msra.mxu0 0.0
    %1320 = vmatprep.subr.mxu0 0.0
    %1321 = vmatpush1.msra.mxu0 0.0
    %1322 = vmatprep.subr.mxu0 0.0
    %1323 = vmatpush1.msra.mxu0 0.0
    %1324 = vmatprep.subr.mxu0 0.0
    %1325 = vmatpush1.msra.mxu0 0.0
    %1326 = vmatprep.subr.mxu0 0.0
    %1327 = vmatpush1.msra.mxu0 0.0
    %1328 = vmatprep.subr.mxu0 0.0
    %1329 = vmatpush1.msra.mxu0 0.0
    %1330 = vmatprep.subr.mxu0 0.0
    %1331 = vmatpush1.msra.mxu0 0.0
    %1332 = vmatprep.subr.mxu0 0.0
    %1333 = vmatpush1.msra.mxu0 0.0
    %1334 = vmatprep.subr.mxu0 0.0
    %1335 = vmatpush1.msra.mxu0 0.0
    %1336 = vmatprep.subr.mxu0 0.0
    %1337 = vmatpush1.msra.mxu0 0.0
    %1338 = vmatprep.subr.mxu0 0.0
    %1339 = vmatpush1.msra.mxu0 0.0
    %1340 = vmatprep.subr.mxu0 0.0
    %1341 = vmatpush1.msra.mxu0 0.0
    %1342 = vmatprep.subr.mxu0 0.0
    %1343 = vmatpush1.msra.mxu0 0.0
    %1344 = vmatprep.subr.mxu0 0.0
    %1345 = vmatpush1.msra.mxu0 0.0
    %1346 = vmatprep.subr.mxu0 0.0
    %1347 = vmatpush1.msra.mxu0 0.0
    %1348 = vmatprep.subr.mxu0 0.0
    %1349 = vmatpush1.msra.mxu0 0.0
    %1350 = vmatprep.subr.mxu0 0.0
    %1351 = vmatpush1.msra.mxu0 0.0
    %1352 = vmatprep.subr.mxu0 0.0
    %1353 = vmatpush1.msra.mxu0 0.0
    %1354 = vmatprep.subr.mxu0 0.0
    %1355 = vmatpush1.msra.mxu0 0.0
    %1356 = vmatprep.subr.mxu0 0.0
    %1357 = vmatpush1.msra.mxu0 0.0
    %1358 = vmatprep.subr.mxu0 0.0
    %1359 = vmatpush1.msra.mxu0 0.0
    %1360 = vmatprep.subr.mxu0 0.0
    %1361 = vmatpush1.msra.mxu0 0.0
    %1362 = vmatprep.mubr.f32.mxu0 0.0
    %1363 = vmatmul.mubr.f32.gmra.mrb[0].mxu0 %v1275
    %v1364 = vpop.f32.mrb[0].mxu0
    %v1365 = vadd.f32 0.0, %v1364
    %v1366 = vpop.f32.mrb[0].mxu0
    %1367 = vmatprep.mubr.f32.mxu0 0.0
    %1368 = vmatmul.mubr.f32.gmra.mrb[0].mxu0 %v1278
    %v1369 = vpop.f32.mrb[0].mxu0
    %v1370 = vadd.f32 0.0, %v1369
    %v1371 = vpop.f32.mrb[0].mxu0
    %1372 = vmatprep.mubr.f32.mxu0 0.0
    %1373 = vmatmul.mubr.f32.gmra.mrb[0].mxu0 %v1281
    %v1374 = vpop.f32.mrb[0].mxu0
    %v1375 = vadd.f32 0.0, %v1374
    %v1376 = vpop.f32.mrb[0].mxu0
    %1377 = vmatprep.mubr.f32.mxu0 0.0
    %1378 = vmatmul.mubr.f32.gmra.mrb[0].mxu0 %v1284
    %v1379 = vpop.f32.mrb[0].mxu0
    %v1380 = vadd.f32 0.0, %v1379
    %v1381 = vpop.f32.mrb[0].mxu0
    %1382 = vmatprep.mubr.f32.mxu0 0.0
    %1383 = vmatmul.mubr.f32.gmra.mrb[0].mxu0 %v1287
    %v1384 = vpop.f32.mrb[0].mxu0
    %v1385 = vadd.f32 0.0, %v1384
    %v1386 = vpop.f32.mrb[0].mxu0
    %1387 = vmatprep.mubr.f32.mxu0 0.0
    %1388 = vmatmul.mubr.f32.gmra.mrb[0].mxu0 %v1290
    %v1389 = vpop.f32.mrb[0].mxu0
    %v1390 = vadd.f32 0.0, %v1389
    %v1391 = vpop.f32.mrb[0].mxu0
    %1392 = vmatprep.mubr.f32.mxu0 0.0
    %1393 = vmatmul.mubr.f32.gmra.mrb[0].mxu0 %v1293
    %v1394 = vpop.f32.mrb[0].mxu0
    %v1395 = vadd.f32 0.0, %v1394
    %v1396 = vpop.f32.mrb[0].mxu0
    %1397 = vmatprep.mubr.f32.mxu0 0.0
    %1398 = vmatmul.mubr.f32.gmra.mrb[0].mxu0 %v1296
    %v1399 = vpop.f32.mrb[0].mxu0
    %v1400 = vadd.f32 0.0, %v1399
    %v1401 = vpop.f32.mrb[0].mxu0
    %1402 = vdwg.mxu0
    %v1403 = vsel %vm1258, %v1365, 0.0
    %v1404 = vsel %vm1259, %v1370, 0.0
    %v1405 = vsel %vm1260, %v1375, 0.0
    %v1406 = vsel %vm1261, %v1380, 0.0
    %v1407 = vsel %vm1262, %v1385, 0.0
    %v1408 = vsel %vm1263, %v1390, 0.0
    %v1409 = vsel %vm1264, %v1395, 0.0
    %v1410 = vsel %vm1265, %v1400, 0.0
    %vm1411 = vcmp.gt.f32.partialorder %v654, 0.0
    %vm1412 = vcmp.gt.f32.partialorder %v655, 0.0
    %vm1413 = vcmp.gt.f32.partialorder %v656, 0.0
    %vm1414 = vcmp.gt.f32.partialorder %v657, 0.0
    %vm1415 = vcmp.gt.f32.partialorder %v658, 0.0
    %vm1416 = vcmp.gt.f32.partialorder %v659, 0.0
    %vm1417 = vcmp.gt.f32.partialorder %v660, 0.0
    %vm1418 = vcmp.gt.f32.partialorder %v661, 0.0
    %s1419 = scalar_lea.vmem %s12, 128
    %v1420 = vld [vmem:[%s1419] sm:$0xff]
    %v1421 = vld [vmem:[%s1419 + $0x8] sm:$0xff]
    %v1422 = vld [vmem:[%s1419 + $0x10] sm:$0xff]
    %v1423 = vld [vmem:[%s1419 + $0x18] sm:$0xff]
    %v1424 = vld [vmem:[%s1419 + $0x20] sm:$0xff]
    %v1425 = vld [vmem:[%s1419 + $0x28] sm:$0xff]
    %v1426 = vld [vmem:[%s1419 + $0x30] sm:$0xff]
    %v1427 = vld [vmem:[%s1419 + $0x38] sm:$0xf]
    %v1429 = vsel %vm339, %v1420, 0
    %v1432 = vsel %vm339, %v1421, 0
    %v1435 = vsel %vm339, %v1422, 0
    %v1438 = vsel %vm339, %v1423, 0
    %v1441 = vsel %vm339, %v1424, 0
    %v1444 = vsel %vm339, %v1425, 0
    %v1447 = vsel %vm339, %v1426, 0
    %v1450 = vsel %vm339, %v1427, 0
    %v1453 = vsel %vm364, %v1410, 0
    %1455 = vmatprep.subr.mxu0 0.0
    %1456 = vmatpush1.msra.mxu0 %v1403
    %1457 = vmatprep.subr.mxu0 0.0
    %1458 = vmatpush1.msra.mxu0 %v1404
    %1459 = vmatprep.subr.mxu0 0.0
    %1460 = vmatpush1.msra.mxu0 %v1405
    %1461 = vmatprep.subr.mxu0 0.0
    %1462 = vmatpush1.msra.mxu0 %v1406
    %1463 = vmatprep.subr.mxu0 0.0
    %1464 = vmatpush1.msra.mxu0 %v1407
    %1465 = vmatprep.subr.mxu0 0.0
    %1466 = vmatpush1.msra.mxu0 %v1408
    %1467 = vmatprep.subr.mxu0 0.0
    %1468 = vmatpush1.msra.mxu0 %v1409
    %1469 = vmatprep.subr.mxu0 0.0
    %1470 = vmatpush1.msra.mxu0 %v1453
    %1471 = vmatprep.subr.mxu0 0.0
    %1472 = vmatpush1.msra.mxu0 0.0
    %1473 = vmatprep.subr.mxu0 0.0
    %1474 = vmatpush1.msra.mxu0 0.0
    %1475 = vmatprep.subr.mxu0 0.0
    %1476 = vmatpush1.msra.mxu0 0.0
    %1477 = vmatprep.subr.mxu0 0.0
    %1478 = vmatpush1.msra.mxu0 0.0
    %1479 = vmatprep.subr.mxu0 0.0
    %1480 = vmatpush1.msra.mxu0 0.0
    %1481 = vmatprep.subr.mxu0 0.0
    %1482 = vmatpush1.msra.mxu0 0.0
    %1483 = vmatprep.subr.mxu0 0.0
    %1484 = vmatpush1.msra.mxu0 0.0
    %1485 = vmatprep.subr.mxu0 0.0
    %1486 = vmatpush1.msra.mxu0 0.0
    %1487 = vmatprep.subr.mxu0 0.0
    %1488 = vmatpush1.msra.mxu0 0.0
    %1489 = vmatprep.subr.mxu0 0.0
    %1490 = vmatpush1.msra.mxu0 0.0
    %1491 = vmatprep.subr.mxu0 0.0
    %1492 = vmatpush1.msra.mxu0 0.0
    %1493 = vmatprep.subr.mxu0 0.0
    %1494 = vmatpush1.msra.mxu0 0.0
    %1495 = vmatprep.subr.mxu0 0.0
    %1496 = vmatpush1.msra.mxu0 0.0
    %1497 = vmatprep.subr.mxu0 0.0
    %1498 = vmatpush1.msra.mxu0 0.0
    %1499 = vmatprep.subr.mxu0 0.0
    %1500 = vmatpush1.msra.mxu0 0.0
    %1501 = vmatprep.subr.mxu0 0.0
    %1502 = vmatpush1.msra.mxu0 0.0
    %1503 = vmatprep.subr.mxu0 0.0
    %1504 = vmatpush1.msra.mxu0 0.0
    %1505 = vmatprep.subr.mxu0 0.0
    %1506 = vmatpush1.msra.mxu0 0.0
    %1507 = vmatprep.subr.mxu0 0.0
    %1508 = vmatpush1.msra.mxu0 0.0
    %1509 = vmatprep.subr.mxu0 0.0
    %1510 = vmatpush1.msra.mxu0 0.0
    %1511 = vmatprep.subr.mxu0 0.0
    %1512 = vmatpush1.msra.mxu0 0.0
    %1513 = vmatprep.subr.mxu0 0.0
    %1514 = vmatpush1.msra.mxu0 0.0
    %1515 = vmatprep.subr.mxu0 0.0
    %1516 = vmatpush1.msra.mxu0 0.0
    %1517 = vmatprep.subr.mxu0 0.0
    %1518 = vmatpush1.msra.mxu0 0.0
    %1519 = vmatprep.mubr.f32.mxu0 0.0
    %1520 = vmatmul.mubr.f32.gmra.mrb[0].mxu0 %v1429
    %v1521 = vpop.f32.mrb[0].mxu0
    %v1522 = vadd.f32 0.0, %v1521
    %v1523 = vpop.f32.mrb[0].mxu0
    %1524 = vmatprep.mubr.f32.mxu0 0.0
    %1525 = vmatmul.mubr.f32.gmra.mrb[0].mxu0 %v1432
    %v1526 = vpop.f32.mrb[0].mxu0
    %v1527 = vadd.f32 0.0, %v1526
    %v1528 = vpop.f32.mrb[0].mxu0
    %1529 = vmatprep.mubr.f32.mxu0 0.0
    %1530 = vmatmul.mubr.f32.gmra.mrb[0].mxu0 %v1435
    %v1531 = vpop.f32.mrb[0].mxu0
    %v1532 = vadd.f32 0.0, %v1531
    %v1533 = vpop.f32.mrb[0].mxu0
    %1534 = vmatprep.mubr.f32.mxu0 0.0
    %1535 = vmatmul.mubr.f32.gmra.mrb[0].mxu0 %v1438
    %v1536 = vpop.f32.mrb[0].mxu0
    %v1537 = vadd.f32 0.0, %v1536
    %v1538 = vpop.f32.mrb[0].mxu0
    %1539 = vmatprep.mubr.f32.mxu0 0.0
    %1540 = vmatmul.mubr.f32.gmra.mrb[0].mxu0 %v1441
    %v1541 = vpop.f32.mrb[0].mxu0
    %v1542 = vadd.f32 0.0, %v1541
    %v1543 = vpop.f32.mrb[0].mxu0
    %1544 = vmatprep.mubr.f32.mxu0 0.0
    %1545 = vmatmul.mubr.f32.gmra.mrb[0].mxu0 %v1444
    %v1546 = vpop.f32.mrb[0].mxu0
    %v1547 = vadd.f32 0.0, %v1546
    %v1548 = vpop.f32.mrb[0].mxu0
    %1549 = vmatprep.mubr.f32.mxu0 0.0
    %1550 = vmatmul.mubr.f32.gmra.mrb[0].mxu0 %v1447
    %v1551 = vpop.f32.mrb[0].mxu0
    %v1552 = vadd.f32 0.0, %v1551
    %v1553 = vpop.f32.mrb[0].mxu0
    %1554 = vmatprep.mubr.f32.mxu0 0.0
    %1555 = vmatmul.mubr.f32.gmra.mrb[0].mxu0 %v1450
    %v1556 = vpop.f32.mrb[0].mxu0
    %v1557 = vadd.f32 0.0, %v1556
    %v1558 = vpop.f32.mrb[0].mxu0
    %1559 = vdwg.mxu0
    %v1560 = vsel %vm1411, %v1522, 0.0
    %v1561 = vsel %vm1412, %v1527, 0.0
    %v1562 = vsel %vm1413, %v1532, 0.0
    %v1563 = vsel %vm1414, %v1537, 0.0
    %v1564 = vsel %vm1415, %v1542, 0.0
    %v1565 = vsel %vm1416, %v1547, 0.0
    %v1566 = vsel %vm1417, %v1552, 0.0
    %v1567 = vsel %vm1418, %v1557, 0.0
    %vm1568 = vcmp.gt.f32.partialorder %v473, 0.0
    %vm1569 = vcmp.gt.f32.partialorder %v474, 0.0
    %vm1570 = vcmp.gt.f32.partialorder %v475, 0.0
    %vm1571 = vcmp.gt.f32.partialorder %v476, 0.0
    %vm1572 = vcmp.gt.f32.partialorder %v477, 0.0
    %vm1573 = vcmp.gt.f32.partialorder %v478, 0.0
    %vm1574 = vcmp.gt.f32.partialorder %v479, 0.0
    %vm1575 = vcmp.gt.f32.partialorder %v480, 0.0
    %s1576 = scalar_lea.vmem %s12, 64
    %v1577 = vld [vmem:[%s1576] sm:$0xff]
    %v1578 = vld [vmem:[%s1576 + $0x8] sm:$0xff]
    %v1579 = vld [vmem:[%s1576 + $0x10] sm:$0xff]
    %v1580 = vld [vmem:[%s1576 + $0x18] sm:$0xff]
    %v1581 = vld [vmem:[%s1576 + $0x20] sm:$0xff]
    %v1582 = vld [vmem:[%s1576 + $0x28] sm:$0xff]
    %v1583 = vld [vmem:[%s1576 + $0x30] sm:$0xff]
    %v1584 = vld [vmem:[%s1576 + $0x38] sm:$0xf]
    %v1586 = vsel %vm339, %v1577, 0
    %v1589 = vsel %vm339, %v1578, 0
    %v1592 = vsel %vm339, %v1579, 0
    %v1595 = vsel %vm339, %v1580, 0
    %v1598 = vsel %vm339, %v1581, 0
    %v1601 = vsel %vm339, %v1582, 0
    %v1604 = vsel %vm339, %v1583, 0
    %v1607 = vsel %vm339, %v1584, 0
    %v1610 = vsel %vm364, %v1567, 0
    %1612 = vmatprep.subr.mxu0 0.0
    %1613 = vmatpush1.msra.mxu0 %v1560
    %1614 = vmatprep.subr.mxu0 0.0
    %1615 = vmatpush1.msra.mxu0 %v1561
    %1616 = vmatprep.subr.mxu0 0.0
    %1617 = vmatpush1.msra.mxu0 %v1562
    %1618 = vmatprep.subr.mxu0 0.0
    %1619 = vmatpush1.msra.mxu0 %v1563
    %1620 = vmatprep.subr.mxu0 0.0
    %1621 = vmatpush1.msra.mxu0 %v1564
    %1622 = vmatprep.subr.mxu0 0.0
    %1623 = vmatpush1.msra.mxu0 %v1565
    %1624 = vmatprep.subr.mxu0 0.0
    %1625 = vmatpush1.msra.mxu0 %v1566
    %1626 = vmatprep.subr.mxu0 0.0
    %1627 = vmatpush1.msra.mxu0 %v1610
    %1628 = vmatprep.subr.mxu0 0.0
    %1629 = vmatpush1.msra.mxu0 0.0
    %1630 = vmatprep.subr.mxu0 0.0
    %1631 = vmatpush1.msra.mxu0 0.0
    %1632 = vmatprep.subr.mxu0 0.0
    %1633 = vmatpush1.msra.mxu0 0.0
    %1634 = vmatprep.subr.mxu0 0.0
    %1635 = vmatpush1.msra.mxu0 0.0
    %1636 = vmatprep.subr.mxu0 0.0
    %1637 = vmatpush1.msra.mxu0 0.0
    %1638 = vmatprep.subr.mxu0 0.0
    %1639 = vmatpush1.msra.mxu0 0.0
    %1640 = vmatprep.subr.mxu0 0.0
    %1641 = vmatpush1.msra.mxu0 0.0
    %1642 = vmatprep.subr.mxu0 0.0
    %1643 = vmatpush1.msra.mxu0 0.0
    %1644 = vmatprep.subr.mxu0 0.0
    %1645 = vmatpush1.msra.mxu0 0.0
    %1646 = vmatprep.subr.mxu0 0.0
    %1647 = vmatpush1.msra.mxu0 0.0
    %1648 = vmatprep.subr.mxu0 0.0
    %1649 = vmatpush1.msra.mxu0 0.0
    %1650 = vmatprep.subr.mxu0 0.0
    %1651 = vmatpush1.msra.mxu0 0.0
    %1652 = vmatprep.subr.mxu0 0.0
    %1653 = vmatpush1.msra.mxu0 0.0
    %1654 = vmatprep.subr.mxu0 0.0
    %1655 = vmatpush1.msra.mxu0 0.0
    %1656 = vmatprep.subr.mxu0 0.0
    %1657 = vmatpush1.msra.mxu0 0.0
    %1658 = vmatprep.subr.mxu0 0.0
    %1659 = vmatpush1.msra.mxu0 0.0
    %1660 = vmatprep.subr.mxu0 0.0
    %1661 = vmatpush1.msra.mxu0 0.0
    %1662 = vmatprep.subr.mxu0 0.0
    %1663 = vmatpush1.msra.mxu0 0.0
    %1664 = vmatprep.subr.mxu0 0.0
    %1665 = vmatpush1.msra.mxu0 0.0
    %1666 = vmatprep.subr.mxu0 0.0
    %1667 = vmatpush1.msra.mxu0 0.0
    %1668 = vmatprep.subr.mxu0 0.0
    %1669 = vmatpush1.msra.mxu0 0.0
    %1670 = vmatprep.subr.mxu0 0.0
    %1671 = vmatpush1.msra.mxu0 0.0
    %1672 = vmatprep.subr.mxu0 0.0
    %1673 = vmatpush1.msra.mxu0 0.0
    %1674 = vmatprep.subr.mxu0 0.0
    %1675 = vmatpush1.msra.mxu0 0.0
    %1676 = vmatprep.mubr.f32.mxu0 0.0
    %1677 = vmatmul.mubr.f32.gmra.mrb[0].mxu0 %v1586
    %v1678 = vpop.f32.mrb[0].mxu0
    %v1679 = vadd.f32 0.0, %v1678
    %v1680 = vpop.f32.mrb[0].mxu0
    %1681 = vmatprep.mubr.f32.mxu0 0.0
    %1682 = vmatmul.mubr.f32.gmra.mrb[0].mxu0 %v1589
    %v1683 = vpop.f32.mrb[0].mxu0
    %v1684 = vadd.f32 0.0, %v1683
    %v1685 = vpop.f32.mrb[0].mxu0
    %1686 = vmatprep.mubr.f32.mxu0 0.0
    %1687 = vmatmul.mubr.f32.gmra.mrb[0].mxu0 %v1592
    %v1688 = vpop.f32.mrb[0].mxu0
    %v1689 = vadd.f32 0.0, %v1688
    %v1690 = vpop.f32.mrb[0].mxu0
    %1691 = vmatprep.mubr.f32.mxu0 0.0
    %1692 = vmatmul.mubr.f32.gmra.mrb[0].mxu0 %v1595
    %v1693 = vpop.f32.mrb[0].mxu0
    %v1694 = vadd.f32 0.0, %v1693
    %v1695 = vpop.f32.mrb[0].mxu0
    %1696 = vmatprep.mubr.f32.mxu0 0.0
    %1697 = vmatmul.mubr.f32.gmra.mrb[0].mxu0 %v1598
    %v1698 = vpop.f32.mrb[0].mxu0
    %v1699 = vadd.f32 0.0, %v1698
    %v1700 = vpop.f32.mrb[0].mxu0
    %1701 = vmatprep.mubr.f32.mxu0 0.0
    %1702 = vmatmul.mubr.f32.gmra.mrb[0].mxu0 %v1601
    %v1703 = vpop.f32.mrb[0].mxu0
    %v1704 = vadd.f32 0.0, %v1703
    %v1705 = vpop.f32.mrb[0].mxu0
    %1706 = vmatprep.mubr.f32.mxu0 0.0
    %1707 = vmatmul.mubr.f32.gmra.mrb[0].mxu0 %v1604
    %v1708 = vpop.f32.mrb[0].mxu0
    %v1709 = vadd.f32 0.0, %v1708
    %v1710 = vpop.f32.mrb[0].mxu0
    %1711 = vmatprep.mubr.f32.mxu0 0.0
    %1712 = vmatmul.mubr.f32.gmra.mrb[0].mxu0 %v1607
    %v1713 = vpop.f32.mrb[0].mxu0
    %v1714 = vadd.f32 0.0, %v1713
    %v1715 = vpop.f32.mrb[0].mxu0
    %1716 = vdwg.mxu0
    %v1717 = vsel %vm1568, %v1679, 0.0
    %v1718 = vsel %vm1569, %v1684, 0.0
    %v1719 = vsel %vm1570, %v1689, 0.0
    %v1720 = vsel %vm1571, %v1694, 0.0
    %v1721 = vsel %vm1572, %v1699, 0.0
    %v1722 = vsel %vm1573, %v1704, 0.0
    %v1723 = vsel %vm1574, %v1709, 0.0
    %v1724 = vsel %vm1575, %v1714, 0.0
    %vm1725 = vcmp.gt.f32.partialorder %v275, 0.0
    %vm1726 = vcmp.gt.f32.partialorder %v276, 0.0
    %vm1727 = vcmp.gt.f32.partialorder %v277, 0.0
    %vm1728 = vcmp.gt.f32.partialorder %v278, 0.0
    %vm1729 = vcmp.gt.f32.partialorder %v279, 0.0
    %vm1730 = vcmp.gt.f32.partialorder %v280, 0.0
    %vm1731 = vcmp.gt.f32.partialorder %v281, 0.0
    %vm1732 = vcmp.gt.f32.partialorder %v282, 0.0
    %v1733 = vld [vmem:[%s12] sm:$0xff]
    %v1734 = vld [vmem:[%s12 + $0x8] sm:$0xff]
    %v1735 = vld [vmem:[%s12 + $0x10] sm:$0xff]
    %v1736 = vld [vmem:[%s12 + $0x18] sm:$0xff]
    %v1737 = vld [vmem:[%s12 + $0x20] sm:$0xff]
    %v1738 = vld [vmem:[%s12 + $0x28] sm:$0xff]
    %v1739 = vld [vmem:[%s12 + $0x30] sm:$0xff]
    %v1740 = vld [vmem:[%s12 + $0x38] sm:$0xf]
    %v1742 = vsel %vm339, %v1733, 0
    %v1745 = vsel %vm339, %v1734, 0
    %v1748 = vsel %vm339, %v1735, 0
    %v1751 = vsel %vm339, %v1736, 0
    %v1754 = vsel %vm339, %v1737, 0
    %v1757 = vsel %vm339, %v1738, 0
    %v1760 = vsel %vm339, %v1739, 0
    %v1763 = vsel %vm339, %v1740, 0
    %v1766 = vsel %vm364, %v1724, 0
    %1768 = vmatprep.subr.mxu0 0.0
    %1769 = vmatpush1.msra.mxu0 %v1717
    %1770 = vmatprep.subr.mxu0 0.0
    %1771 = vmatpush1.msra.mxu0 %v1718
    %1772 = vmatprep.subr.mxu0 0.0
    %1773 = vmatpush1.msra.mxu0 %v1719
    %1774 = vmatprep.subr.mxu0 0.0
    %1775 = vmatpush1.msra.mxu0 %v1720
    %1776 = vmatprep.subr.mxu0 0.0
    %1777 = vmatpush1.msra.mxu0 %v1721
    %1778 = vmatprep.subr.mxu0 0.0
    %1779 = vmatpush1.msra.mxu0 %v1722
    %1780 = vmatprep.subr.mxu0 0.0
    %1781 = vmatpush1.msra.mxu0 %v1723
    %1782 = vmatprep.subr.mxu0 0.0
    %1783 = vmatpush1.msra.mxu0 %v1766
    %1784 = vmatprep.subr.mxu0 0.0
    %1785 = vmatpush1.msra.mxu0 0.0
    %1786 = vmatprep.subr.mxu0 0.0
    %1787 = vmatpush1.msra.mxu0 0.0
    %1788 = vmatprep.subr.mxu0 0.0
    %1789 = vmatpush1.msra.mxu0 0.0
    %1790 = vmatprep.subr.mxu0 0.0
    %1791 = vmatpush1.msra.mxu0 0.0
    %1792 = vmatprep.subr.mxu0 0.0
    %1793 = vmatpush1.msra.mxu0 0.0
    %1794 = vmatprep.subr.mxu0 0.0
    %1795 = vmatpush1.msra.mxu0 0.0
    %1796 = vmatprep.subr.mxu0 0.0
    %1797 = vmatpush1.msra.mxu0 0.0
    %1798 = vmatprep.subr.mxu0 0.0
    %1799 = vmatpush1.msra.mxu0 0.0
    %1800 = vmatprep.subr.mxu0 0.0
    %1801 = vmatpush1.msra.mxu0 0.0
    %1802 = vmatprep.subr.mxu0 0.0
    %1803 = vmatpush1.msra.mxu0 0.0
    %1804 = vmatprep.subr.mxu0 0.0
    %1805 = vmatpush1.msra.mxu0 0.0
    %1806 = vmatprep.subr.mxu0 0.0
    %1807 = vmatpush1.msra.mxu0 0.0
    %1808 = vmatprep.subr.mxu0 0.0
    %1809 = vmatpush1.msra.mxu0 0.0
    %1810 = vmatprep.subr.mxu0 0.0
    %1811 = vmatpush1.msra.mxu0 0.0
    %1812 = vmatprep.subr.mxu0 0.0
    %1813 = vmatpush1.msra.mxu0 0.0
    %1814 = vmatprep.subr.mxu0 0.0
    %1815 = vmatpush1.msra.mxu0 0.0
    %1816 = vmatprep.subr.mxu0 0.0
    %1817 = vmatpush1.msra.mxu0 0.0
    %1818 = vmatprep.subr.mxu0 0.0
    %1819 = vmatpush1.msra.mxu0 0.0
    %1820 = vmatprep.subr.mxu0 0.0
    %1821 = vmatpush1.msra.mxu0 0.0
    %1822 = vmatprep.subr.mxu0 0.0
    %1823 = vmatpush1.msra.mxu0 0.0
    %1824 = vmatprep.subr.mxu0 0.0
    %1825 = vmatpush1.msra.mxu0 0.0
    %1826 = vmatprep.subr.mxu0 0.0
    %1827 = vmatpush1.msra.mxu0 0.0
    %1828 = vmatprep.subr.mxu0 0.0
    %1829 = vmatpush1.msra.mxu0 0.0
    %1830 = vmatprep.subr.mxu0 0.0
    %1831 = vmatpush1.msra.mxu0 0.0
    %1832 = vmatprep.mubr.f32.mxu0 0.0
    %1833 = vmatmul.mubr.f32.gmra.mrb[0].mxu0 %v1742
    %v1834 = vpop.f32.mrb[0].mxu0
    %v1835 = vadd.f32 0.0, %v1834
    %v1836 = vpop.f32.mrb[0].mxu0
    %1837 = vmatprep.mubr.f32.mxu0 0.0
    %1838 = vmatmul.mubr.f32.gmra.mrb[0].mxu0 %v1745
    %v1839 = vpop.f32.mrb[0].mxu0
    %v1840 = vadd.f32 0.0, %v1839
    %v1841 = vpop.f32.mrb[0].mxu0
    %1842 = vmatprep.mubr.f32.mxu0 0.0
    %1843 = vmatmul.mubr.f32.gmra.mrb[0].mxu0 %v1748
    %v1844 = vpop.f32.mrb[0].mxu0
    %v1845 = vadd.f32 0.0, %v1844
    %v1846 = vpop.f32.mrb[0].mxu0
    %1847 = vmatprep.mubr.f32.mxu0 0.0
    %1848 = vmatmul.mubr.f32.gmra.mrb[0].mxu0 %v1751
    %v1849 = vpop.f32.mrb[0].mxu0
    %v1850 = vadd.f32 0.0, %v1849
    %v1851 = vpop.f32.mrb[0].mxu0
    %1852 = vmatprep.mubr.f32.mxu0 0.0
    %1853 = vmatmul.mubr.f32.gmra.mrb[0].mxu0 %v1754
    %v1854 = vpop.f32.mrb[0].mxu0
    %v1855 = vadd.f32 0.0, %v1854
    %v1856 = vpop.f32.mrb[0].mxu0
    %1857 = vmatprep.mubr.f32.mxu0 0.0
    %1858 = vmatmul.mubr.f32.gmra.mrb[0].mxu0 %v1757
    %v1859 = vpop.f32.mrb[0].mxu0
    %v1860 = vadd.f32 0.0, %v1859
    %v1861 = vpop.f32.mrb[0].mxu0
    %1862 = vmatprep.mubr.f32.mxu0 0.0
    %1863 = vmatmul.mubr.f32.gmra.mrb[0].mxu0 %v1760
    %v1864 = vpop.f32.mrb[0].mxu0
    %v1865 = vadd.f32 0.0, %v1864
    %v1866 = vpop.f32.mrb[0].mxu0
    %1867 = vmatprep.mubr.f32.mxu0 0.0
    %1868 = vmatmul.mubr.f32.gmra.mrb[0].mxu0 %v1763
    %v1869 = vpop.f32.mrb[0].mxu0
    %v1870 = vadd.f32 0.0, %v1869
    %v1871 = vpop.f32.mrb[0].mxu0
    %1872 = vdwg.mxu0
    %v1873 = vsel %vm1725, %v1835, 0.0
    %v1874 = vsel %vm1726, %v1840, 0.0
    %v1875 = vsel %vm1727, %v1845, 0.0
    %v1876 = vsel %vm1728, %v1850, 0.0
    %v1877 = vsel %vm1729, %v1855, 0.0
    %v1878 = vsel %vm1730, %v1860, 0.0
    %v1879 = vsel %vm1731, %v1865, 0.0
    %v1880 = vsel %vm1732, %v1870, 0.0
    %v1881 = vld [vmem:[%s11] sm:$0xff]
    %v1882 = vld [vmem:[%s11 + $0x8] sm:$0xff]
    %v1883 = vld [vmem:[%s11 + $0x10] sm:$0x1]
    %v1885 = vsel %vm339, %v1881, 0
    %v1888 = vsel %vm339, %v1882, 0
    %v1891 = vsel %vm339, %v1883, 0
    %v1894 = vsel %vm364, %v1880, 0
    %1896 = vmatprep.subr.mxu0 0.0
    %1897 = vmatpush1.msra.mxu0 %v1873
    %1898 = vmatprep.subr.mxu0 0.0
    %1899 = vmatpush1.msra.mxu0 %v1874
    %1900 = vmatprep.subr.mxu0 0.0
    %1901 = vmatpush1.msra.mxu0 %v1875
    %1902 = vmatprep.subr.mxu0 0.0
    %1903 = vmatpush1.msra.mxu0 %v1876
    %1904 = vmatprep.subr.mxu0 0.0
    %1905 = vmatpush1.msra.mxu0 %v1877
    %1906 = vmatprep.subr.mxu0 0.0
    %1907 = vmatpush1.msra.mxu0 %v1878
    %1908 = vmatprep.subr.mxu0 0.0
    %1909 = vmatpush1.msra.mxu0 %v1879
    %1910 = vmatprep.subr.mxu0 0.0
    %1911 = vmatpush1.msra.mxu0 %v1894
    %1912 = vmatprep.subr.mxu0 0.0
    %1913 = vmatpush1.msra.mxu0 0.0
    %1914 = vmatprep.subr.mxu0 0.0
    %1915 = vmatpush1.msra.mxu0 0.0
    %1916 = vmatprep.subr.mxu0 0.0
    %1917 = vmatpush1.msra.mxu0 0.0
    %1918 = vmatprep.subr.mxu0 0.0
    %1919 = vmatpush1.msra.mxu0 0.0
    %1920 = vmatprep.subr.mxu0 0.0
    %1921 = vmatpush1.msra.mxu0 0.0
    %1922 = vmatprep.subr.mxu0 0.0
    %1923 = vmatpush1.msra.mxu0 0.0
    %1924 = vmatprep.subr.mxu0 0.0
    %1925 = vmatpush1.msra.mxu0 0.0
    %1926 = vmatprep.subr.mxu0 0.0
    %1927 = vmatpush1.msra.mxu0 0.0
    %1928 = vmatprep.subr.mxu0 0.0
    %1929 = vmatpush1.msra.mxu0 0.0
    %1930 = vmatprep.subr.mxu0 0.0
    %1931 = vmatpush1.msra.mxu0 0.0
    %1932 = vmatprep.subr.mxu0 0.0
    %1933 = vmatpush1.msra.mxu0 0.0
    %1934 = vmatprep.subr.mxu0 0.0
    %1935 = vmatpush1.msra.mxu0 0.0
    %1936 = vmatprep.subr.mxu0 0.0
    %1937 = vmatpush1.msra.mxu0 0.0
    %1938 = vmatprep.subr.mxu0 0.0
    %1939 = vmatpush1.msra.mxu0 0.0
    %1940 = vmatprep.subr.mxu0 0.0
    %1941 = vmatpush1.msra.mxu0 0.0
    %1942 = vmatprep.subr.mxu0 0.0
    %1943 = vmatpush1.msra.mxu0 0.0
    %1944 = vmatprep.subr.mxu0 0.0
    %1945 = vmatpush1.msra.mxu0 0.0
    %1946 = vmatprep.subr.mxu0 0.0
    %1947 = vmatpush1.msra.mxu0 0.0
    %1948 = vmatprep.subr.mxu0 0.0
    %1949 = vmatpush1.msra.mxu0 0.0
    %1950 = vmatprep.subr.mxu0 0.0
    %1951 = vmatpush1.msra.mxu0 0.0
    %1952 = vmatprep.subr.mxu0 0.0
    %1953 = vmatpush1.msra.mxu0 0.0
    %1954 = vmatprep.subr.mxu0 0.0
    %1955 = vmatpush1.msra.mxu0 0.0
    %1956 = vmatprep.subr.mxu0 0.0
    %1957 = vmatpush1.msra.mxu0 0.0
    %1958 = vmatprep.subr.mxu0 0.0
    %1959 = vmatpush1.msra.mxu0 0.0
    %1960 = vmatprep.mubr.f32.mxu0 0.0
    %1961 = vmatmul.mubr.f32.gmra.mrb[0].mxu0 %v1885
    %v1962 = vpop.f32.mrb[0].mxu0
    %v1963 = vadd.f32 0.0, %v1962
    %v1964 = vpop.f32.mrb[0].mxu0
    %1965 = vmatprep.mubr.f32.mxu0 0.0
    %1966 = vmatmul.mubr.f32.gmra.mrb[0].mxu0 %v1888
    %v1967 = vpop.f32.mrb[0].mxu0
    %v1968 = vadd.f32 0.0, %v1967
    %v1969 = vpop.f32.mrb[0].mxu0
    %1970 = vmatprep.mubr.f32.mxu0 0.0
    %1971 = vmatmul.mubr.f32.gmra.mrb[0].mxu0 %v1891
    %v1972 = vpop.f32.mrb[0].mxu0
    %v1973 = vadd.f32 0.0, %v1972
    %v1974 = vpop.f32.mrb[0].mxu0
    %1975 = vdwg.mxu0
    %v1976 = vld [vmem:[%s15] sm:$0xff]
    %v1977 = vld [vmem:[%s15 + $0x8] sm:$0xff]
    %v1978 = vld [vmem:[%s15 + $0x10] sm:$0xff]
    %v1979 = vld [vmem:[%s15 + $0x18] sm:$0xff]
    %v1980 = vld [vmem:[%s15 + $0x20] sm:$0xff]
    %v1981 = vld [vmem:[%s15 + $0x28] sm:$0xff]
    %v1982 = vld [vmem:[%s15 + $0x30] sm:$0xff]
    %v1983 = vld [vmem:[%s15 + $0x38] sm:$0xf]
    %v1984 = vld [vmem:[%s17] sm:$0xff]
    %v1985 = vld [vmem:[%s17 + $0x8] sm:$0xff]
    %v1986 = vld [vmem:[%s17 + $0x10] sm:$0xff]
    %v1987 = vld [vmem:[%s17 + $0x18] sm:$0xff]
    %v1988 = vld [vmem:[%s17 + $0x20] sm:$0xff]
    %v1989 = vld [vmem:[%s17 + $0x28] sm:$0xff]
    %v1990 = vld [vmem:[%s17 + $0x30] sm:$0xff]
    %v1991 = vld [vmem:[%s17 + $0x38] sm:$0xf]
    %v1993 = vsel %vm141, %v1984, 0
    %v1996 = vsel %vm141, %v1985, 0
    %v1999 = vsel %vm141, %v1986, 0
    %v2002 = vsel %vm141, %v1987, 0
    %v2005 = vsel %vm141, %v1988, 0
    %v2008 = vsel %vm141, %v1989, 0
    %v2011 = vsel %vm141, %v1990, 0
    %v2014 = vsel %vm141, %v1991, 0
    %v2017 = vsel %vm166, %v1973, 0
    %2019 = vmatprep.subr.mxu0 0.0
    %2020 = vmatpush1.msra.mxu0 %v1963
    %2021 = vmatprep.subr.mxu0 0.0
    %2022 = vmatpush1.msra.mxu0 %v1968
    %2023 = vmatprep.subr.mxu0 0.0
    %2024 = vmatpush1.msra.mxu0 %v2017
    %2025 = vmatprep.subr.mxu0 0.0
    %2026 = vmatpush1.msra.mxu0 0.0
    %2027 = vmatprep.subr.mxu0 0.0
    %2028 = vmatpush1.msra.mxu0 0.0
    %2029 = vmatprep.subr.mxu0 0.0
    %2030 = vmatpush1.msra.mxu0 0.0
    %2031 = vmatprep.subr.mxu0 0.0
    %2032 = vmatpush1.msra.mxu0 0.0
    %2033 = vmatprep.subr.mxu0 0.0
    %2034 = vmatpush1.msra.mxu0 0.0
    %2035 = vmatprep.subr.mxu0 0.0
    %2036 = vmatpush1.msra.mxu0 0.0
    %2037 = vmatprep.subr.mxu0 0.0
    %2038 = vmatpush1.msra.mxu0 0.0
    %2039 = vmatprep.subr.mxu0 0.0
    %2040 = vmatpush1.msra.mxu0 0.0
    %2041 = vmatprep.subr.mxu0 0.0
    %2042 = vmatpush1.msra.mxu0 0.0
    %2043 = vmatprep.subr.mxu0 0.0
    %2044 = vmatpush1.msra.mxu0 0.0
    %2045 = vmatprep.subr.mxu0 0.0
    %2046 = vmatpush1.msra.mxu0 0.0
    %2047 = vmatprep.subr.mxu0 0.0
    %2048 = vmatpush1.msra.mxu0 0.0
    %2049 = vmatprep.subr.mxu0 0.0
    %2050 = vmatpush1.msra.mxu0 0.0
    %2051 = vmatprep.subr.mxu0 0.0
    %2052 = vmatpush1.msra.mxu0 0.0
    %2053 = vmatprep.subr.mxu0 0.0
    %2054 = vmatpush1.msra.mxu0 0.0
    %2055 = vmatprep.subr.mxu0 0.0
    %2056 = vmatpush1.msra.mxu0 0.0
    %2057 = vmatprep.subr.mxu0 0.0
    %2058 = vmatpush1.msra.mxu0 0.0
    %2059 = vmatprep.subr.mxu0 0.0
    %2060 = vmatpush1.msra.mxu0 0.0
    %2061 = vmatprep.subr.mxu0 0.0
    %2062 = vmatpush1.msra.mxu0 0.0
    %2063 = vmatprep.subr.mxu0 0.0
    %2064 = vmatpush1.msra.mxu0 0.0
    %2065 = vmatprep.subr.mxu0 0.0
    %2066 = vmatpush1.msra.mxu0 0.0
    %2067 = vmatprep.subr.mxu0 0.0
    %2068 = vmatpush1.msra.mxu0 0.0
    %2069 = vmatprep.subr.mxu0 0.0
    %2070 = vmatpush1.msra.mxu0 0.0
    %2071 = vmatprep.subr.mxu0 0.0
    %2072 = vmatpush1.msra.mxu0 0.0
    %2073 = vmatprep.subr.mxu0 0.0
    %2074 = vmatpush1.msra.mxu0 0.0
    %2075 = vmatprep.subr.mxu0 0.0
    %2076 = vmatpush1.msra.mxu0 0.0
    %2077 = vmatprep.subr.mxu0 0.0
    %2078 = vmatpush1.msra.mxu0 0.0
    %2079 = vmatprep.subr.mxu0 0.0
    %2080 = vmatpush1.msra.mxu0 0.0
    %2081 = vmatprep.subr.mxu0 0.0
    %2082 = vmatpush1.msra.mxu0 0.0
    %2083 = vmatprep.mubr.f32.mxu0 0.0
    %2084 = vmatmul.mubr.f32.gmra.mrb[0].mxu0 %v1993
    %v2085 = vpop.f32.mrb[0].mxu0
    %v2086 = vadd.f32 0.0, %v2085
    %v2087 = vpop.f32.mrb[0].mxu0
    %2088 = vmatprep.mubr.f32.mxu0 0.0
    %2089 = vmatmul.mubr.f32.gmra.mrb[0].mxu0 %v1996
    %v2090 = vpop.f32.mrb[0].mxu0
    %v2091 = vadd.f32 0.0, %v2090
    %v2092 = vpop.f32.mrb[0].mxu0
    %2093 = vmatprep.mubr.f32.mxu0 0.0
    %2094 = vmatmul.mubr.f32.gmra.mrb[0].mxu0 %v1999
    %v2095 = vpop.f32.mrb[0].mxu0
    %v2096 = vadd.f32 0.0, %v2095
    %v2097 = vpop.f32.mrb[0].mxu0
    %2098 = vmatprep.mubr.f32.mxu0 0.0
    %2099 = vmatmul.mubr.f32.gmra.mrb[0].mxu0 %v2002
    %v2100 = vpop.f32.mrb[0].mxu0
    %v2101 = vadd.f32 0.0, %v2100
    %v2102 = vpop.f32.mrb[0].mxu0
    %2103 = vmatprep.mubr.f32.mxu0 0.0
    %2104 = vmatmul.mubr.f32.gmra.mrb[0].mxu0 %v2005
    %v2105 = vpop.f32.mrb[0].mxu0
    %v2106 = vadd.f32 0.0, %v2105
    %v2107 = vpop.f32.mrb[0].mxu0
    %2108 = vmatprep.mubr.f32.mxu0 0.0
    %2109 = vmatmul.mubr.f32.gmra.mrb[0].mxu0 %v2008
    %v2110 = vpop.f32.mrb[0].mxu0
    %v2111 = vadd.f32 0.0, %v2110
    %v2112 = vpop.f32.mrb[0].mxu0
    %2113 = vmatprep.mubr.f32.mxu0 0.0
    %2114 = vmatmul.mubr.f32.gmra.mrb[0].mxu0 %v2011
    %v2115 = vpop.f32.mrb[0].mxu0
    %v2116 = vadd.f32 0.0, %v2115
    %v2117 = vpop.f32.mrb[0].mxu0
    %2118 = vmatprep.mubr.f32.mxu0 0.0
    %2119 = vmatmul.mubr.f32.gmra.mrb[0].mxu0 %v2014
    %v2120 = vpop.f32.mrb[0].mxu0
    %v2121 = vadd.f32 0.0, %v2120
    %v2122 = vpop.f32.mrb[0].mxu0
    %2123 = vdwg.mxu0
    %v2125 = vsel %vm141, %v1976, 0
    %v2128 = vsel %vm141, %v1977, 0
    %v2131 = vsel %vm141, %v1978, 0
    %v2134 = vsel %vm141, %v1979, 0
    %v2137 = vsel %vm141, %v1980, 0
    %v2140 = vsel %vm141, %v1981, 0
    %v2143 = vsel %vm141, %v1982, 0
    %v2146 = vsel %vm141, %v1983, 0
    %2148 = vmatprep.subr.mxu0 0.0
    %2149 = vmatpush1.msra.mxu0 %v82
    %2150 = vmatprep.subr.mxu0 0.0
    %2151 = vmatpush1.msra.mxu0 %v83
    %2152 = vmatprep.subr.mxu0 0.0
    %2153 = vmatpush1.msra.mxu0 %v168
    %2154 = vmatprep.subr.mxu0 0.0
    %2155 = vmatpush1.msra.mxu0 0.0
    %2156 = vmatprep.subr.mxu0 0.0
    %2157 = vmatpush1.msra.mxu0 0.0
    %2158 = vmatprep.subr.mxu0 0.0
    %2159 = vmatpush1.msra.mxu0 0.0
    %2160 = vmatprep.subr.mxu0 0.0
    %2161 = vmatpush1.msra.mxu0 0.0
    %2162 = vmatprep.subr.mxu0 0.0
    %2163 = vmatpush1.msra.mxu0 0.0
    %2164 = vmatprep.subr.mxu0 0.0
    %2165 = vmatpush1.msra.mxu0 0.0
    %2166 = vmatprep.subr.mxu0 0.0
    %2167 = vmatpush1.msra.mxu0 0.0
    %2168 = vmatprep.subr.mxu0 0.0
    %2169 = vmatpush1.msra.mxu0 0.0
    %2170 = vmatprep.subr.mxu0 0.0
    %2171 = vmatpush1.msra.mxu0 0.0
    %2172 = vmatprep.subr.mxu0 0.0
    %2173 = vmatpush1.msra.mxu0 0.0
    %2174 = vmatprep.subr.mxu0 0.0
    %2175 = vmatpush1.msra.mxu0 0.0
    %2176 = vmatprep.subr.mxu0 0.0
    %2177 = vmatpush1.msra.mxu0 0.0
    %2178 = vmatprep.subr.mxu0 0.0
    %2179 = vmatpush1.msra.mxu0 0.0
    %2180 = vmatprep.subr.mxu0 0.0
    %2181 = vmatpush1.msra.mxu0 0.0
    %2182 = vmatprep.subr.mxu0 0.0
    %2183 = vmatpush1.msra.mxu0 0.0
    %2184 = vmatprep.subr.mxu0 0.0
    %2185 = vmatpush1.msra.mxu0 0.0
    %2186 = vmatprep.subr.mxu0 0.0
    %2187 = vmatpush1.msra.mxu0 0.0
    %2188 = vmatprep.subr.mxu0 0.0
    %2189 = vmatpush1.msra.mxu0 0.0
    %2190 = vmatprep.subr.mxu0 0.0
    %2191 = vmatpush1.msra.mxu0 0.0
    %2192 = vmatprep.subr.mxu0 0.0
    %2193 = vmatpush1.msra.mxu0 0.0
    %2194 = vmatprep.subr.mxu0 0.0
    %2195 = vmatpush1.msra.mxu0 0.0
    %2196 = vmatprep.subr.mxu0 0.0
    %2197 = vmatpush1.msra.mxu0 0.0
    %2198 = vmatprep.subr.mxu0 0.0
    %2199 = vmatpush1.msra.mxu0 0.0
    %2200 = vmatprep.subr.mxu0 0.0
    %2201 = vmatpush1.msra.mxu0 0.0
    %2202 = vmatprep.subr.mxu0 0.0
    %2203 = vmatpush1.msra.mxu0 0.0
    %2204 = vmatprep.subr.mxu0 0.0
    %2205 = vmatpush1.msra.mxu0 0.0
    %2206 = vmatprep.subr.mxu0 0.0
    %2207 = vmatpush1.msra.mxu0 0.0
    %2208 = vmatprep.subr.mxu0 0.0
    %2209 = vmatpush1.msra.mxu0 0.0
    %2210 = vmatprep.subr.mxu0 0.0
    %2211 = vmatpush1.msra.mxu0 0.0
    %2212 = vmatprep.mubr.f32.mxu0 0.0
    %2213 = vmatmul.mubr.f32.gmra.mrb[0].mxu0 %v2125
    %v2214 = vpop.f32.mrb[0].mxu0
    %v2215 = vadd.f32 %v2086, %v2214
    %v2216 = vpop.f32.mrb[0].mxu0
    %2217 = vmatprep.mubr.f32.mxu0 0.0
    %2218 = vmatmul.mubr.f32.gmra.mrb[0].mxu0 %v2128
    %v2219 = vpop.f32.mrb[0].mxu0
    %v2220 = vadd.f32 %v2091, %v2219
    %v2221 = vpop.f32.mrb[0].mxu0
    %2222 = vmatprep.mubr.f32.mxu0 0.0
    %2223 = vmatmul.mubr.f32.gmra.mrb[0].mxu0 %v2131
    %v2224 = vpop.f32.mrb[0].mxu0
    %v2225 = vadd.f32 %v2096, %v2224
    %v2226 = vpop.f32.mrb[0].mxu0
    %2227 = vmatprep.mubr.f32.mxu0 0.0
    %2228 = vmatmul.mubr.f32.gmra.mrb[0].mxu0 %v2134
    %v2229 = vpop.f32.mrb[0].mxu0
    %v2230 = vadd.f32 %v2101, %v2229
    %v2231 = vpop.f32.mrb[0].mxu0
    %2232 = vmatprep.mubr.f32.mxu0 0.0
    %2233 = vmatmul.mubr.f32.gmra.mrb[0].mxu0 %v2137
    %v2234 = vpop.f32.mrb[0].mxu0
    %v2235 = vadd.f32 %v2106, %v2234
    %v2236 = vpop.f32.mrb[0].mxu0
    %2237 = vmatprep.mubr.f32.mxu0 0.0
    %2238 = vmatmul.mubr.f32.gmra.mrb[0].mxu0 %v2140
    %v2239 = vpop.f32.mrb[0].mxu0
    %v2240 = vadd.f32 %v2111, %v2239
    %v2241 = vpop.f32.mrb[0].mxu0
    %2242 = vmatprep.mubr.f32.mxu0 0.0
    %2243 = vmatmul.mubr.f32.gmra.mrb[0].mxu0 %v2143
    %v2244 = vpop.f32.mrb[0].mxu0
    %v2245 = vadd.f32 %v2116, %v2244
    %v2246 = vpop.f32.mrb[0].mxu0
    %2247 = vmatprep.mubr.f32.mxu0 0.0
    %2248 = vmatmul.mubr.f32.gmra.mrb[0].mxu0 %v2146
    %v2249 = vpop.f32.mrb[0].mxu0
    %v2250 = vadd.f32 %v2121, %v2249
    %v2251 = vpop.f32.mrb[0].mxu0
    %2252 = vdwg.mxu0
    %v2253 = vld [vmem:[%s16] sm:$0xff]
    %v2254 = vld [vmem:[%s16 + $0x8] sm:$0xff]
    %v2255 = vld [vmem:[%s16 + $0x10] sm:$0xff]
    %v2256 = vld [vmem:[%s16 + $0x18] sm:$0xff]
    %v2257 = vld [vmem:[%s16 + $0x20] sm:$0xff]
    %v2258 = vld [vmem:[%s16 + $0x28] sm:$0xff]
    %v2259 = vld [vmem:[%s16 + $0x30] sm:$0xff]
    %v2260 = vld [vmem:[%s16 + $0x38] sm:$0xf]
    %2262 = vset.pattern.permute.xlu0 0
    %2263 = vperm.xlu0 %2262, %v2253
    %v2264 = vpop.permute.xlu0 %2263
    %2267 = vset.pattern.permute.xlu0 0
    %2268 = vperm.xlu0 %2267, %v2254
    %v2269 = vpop.permute.xlu0 %2268
    %2272 = vset.pattern.permute.xlu0 0
    %2273 = vperm.xlu0 %2272, %v2255
    %v2274 = vpop.permute.xlu0 %2273
    %2277 = vset.pattern.permute.xlu0 0
    %2278 = vperm.xlu0 %2277, %v2256
    %v2279 = vpop.permute.xlu0 %2278
    %2282 = vset.pattern.permute.xlu0 0
    %2283 = vperm.xlu0 %2282, %v2257
    %v2284 = vpop.permute.xlu0 %2283
    %2287 = vset.pattern.permute.xlu0 0
    %2288 = vperm.xlu0 %2287, %v2258
    %v2289 = vpop.permute.xlu0 %2288
    %2292 = vset.pattern.permute.xlu0 0
    %2293 = vperm.xlu0 %2292, %v2259
    %v2294 = vpop.permute.xlu0 %2293
    %2297 = vset.pattern.permute.xlu0 0
    %2298 = vperm.xlu0 %2297, %v2260
    %v2299 = vpop.permute.xlu0 %2298
    %v2301 = vmul.f32 %v2264, %v1148
    %v2302 = vmul.f32 %v2269, %v1148
    %v2303 = vmul.f32 %v2274, %v1148
    %v2304 = vmul.f32 %v2279, %v1148
    %v2305 = vmul.f32 %v2284, %v1148
    %v2306 = vmul.f32 %v2289, %v1148
    %v2307 = vmul.f32 %v2294, %v1148
    %v2308 = vmul.f32 %v2299, %v1148
    %v2309 = vadd.f32 %v2215, %v2301
    %v2310 = vadd.f32 %v2220, %v2302
    %v2311 = vadd.f32 %v2225, %v2303
    %v2312 = vadd.f32 %v2230, %v2304
    %v2313 = vadd.f32 %v2235, %v2305
    %v2314 = vadd.f32 %v2240, %v2306
    %v2315 = vadd.f32 %v2245, %v2307
    %v2316 = vadd.f32 %v2250, %v2308
    %v2317 = vld [vmem:[%s21] sm:$0xff]
    %v2318 = vld [vmem:[%s21 + $0x8] sm:$0xff]
    %v2319 = vld [vmem:[%s21 + $0x10] sm:$0xff]
    %v2320 = vld [vmem:[%s21 + $0x18] sm:$0xff]
    %v2321 = vld [vmem:[%s21 + $0x20] sm:$0xff]
    %v2322 = vld [vmem:[%s21 + $0x28] sm:$0xff]
    %v2323 = vld [vmem:[%s21 + $0x30] sm:$0xff]
    %v2324 = vld [vmem:[%s21 + $0x38] sm:$0xf]
    %2326 = vset.pattern.permute.xlu0 0
    %2327 = vperm.xlu0 %2326, %v2317
    %v2328 = vpop.permute.xlu0 %2327
    %2331 = vset.pattern.permute.xlu0 0
    %2332 = vperm.xlu0 %2331, %v2318
    %v2333 = vpop.permute.xlu0 %2332
    %2336 = vset.pattern.permute.xlu0 0
    %2337 = vperm.xlu0 %2336, %v2319
    %v2338 = vpop.permute.xlu0 %2337
    %2341 = vset.pattern.permute.xlu0 0
    %2342 = vperm.xlu0 %2341, %v2320
    %v2343 = vpop.permute.xlu0 %2342
    %2346 = vset.pattern.permute.xlu0 0
    %2347 = vperm.xlu0 %2346, %v2321
    %v2348 = vpop.permute.xlu0 %2347
    %2351 = vset.pattern.permute.xlu0 0
    %2352 = vperm.xlu0 %2351, %v2322
    %v2353 = vpop.permute.xlu0 %2352
    %2356 = vset.pattern.permute.xlu0 0
    %2357 = vperm.xlu0 %2356, %v2323
    %v2358 = vpop.permute.xlu0 %2357
    %2361 = vset.pattern.permute.xlu0 0
    %2362 = vperm.xlu0 %2361, %v2324
    %v2363 = vpop.permute.xlu0 %2362
    %v2365 = vadd.f32 %v2309, %v2328
    %v2366 = vadd.f32 %v2310, %v2333
    %v2367 = vadd.f32 %v2311, %v2338
    %v2368 = vadd.f32 %v2312, %v2343
    %v2369 = vadd.f32 %v2313, %v2348
    %v2370 = vadd.f32 %v2314, %v2353
    %v2371 = vadd.f32 %v2315, %v2358
    %v2372 = vadd.f32 %v2316, %v2363
    %v2373 = vmax.f32 %v2365, 0.0
    %v2374 = vmax.f32 %v2366, 0.0
    %v2375 = vmax.f32 %v2367, 0.0
    %v2376 = vmax.f32 %v2368, 0.0
    %v2377 = vmax.f32 %v2369, 0.0
    %v2378 = vmax.f32 %v2370, 0.0
    %v2379 = vmax.f32 %v2371, 0.0
    %v2380 = vmax.f32 %v2372, 0.0
    %v2381 = vld [vmem:[%s18] sm:$0xff]
    %v2382 = vld [vmem:[%s18 + $0x8] sm:$0xff]
    %v2383 = vld [vmem:[%s18 + $0x10] sm:$0xff]
    %v2384 = vld [vmem:[%s18 + $0x18] sm:$0xff]
    %v2385 = vld [vmem:[%s18 + $0x20] sm:$0xff]
    %v2386 = vld [vmem:[%s18 + $0x28] sm:$0xff]
    %v2387 = vld [vmem:[%s18 + $0x30] sm:$0xff]
    %v2388 = vld [vmem:[%s18 + $0x38] sm:$0xf]
    %v2389 = vld [vmem:[%s22] sm:$0xff]
    %v2390 = vld [vmem:[%s22 + $0x8] sm:$0xff]
    %v2391 = vld [vmem:[%s22 + $0x10] sm:$0xff]
    %v2392 = vld [vmem:[%s22 + $0x18] sm:$0xff]
    %v2393 = vld [vmem:[%s22 + $0x20] sm:$0xff]
    %v2394 = vld [vmem:[%s22 + $0x28] sm:$0xff]
    %v2395 = vld [vmem:[%s22 + $0x30] sm:$0xff]
    %v2396 = vld [vmem:[%s22 + $0x38] sm:$0xf]
    %2398 = vset.pattern.permute.xlu0 0
    %2399 = vperm.xlu0 %2398, %v2389
    %v2400 = vpop.permute.xlu0 %2399
    %2403 = vset.pattern.permute.xlu0 0
    %2404 = vperm.xlu0 %2403, %v2390
    %v2405 = vpop.permute.xlu0 %2404
    %2408 = vset.pattern.permute.xlu0 0
    %2409 = vperm.xlu0 %2408, %v2391
    %v2410 = vpop.permute.xlu0 %2409
    %2413 = vset.pattern.permute.xlu0 0
    %2414 = vperm.xlu0 %2413, %v2392
    %v2415 = vpop.permute.xlu0 %2414
    %2418 = vset.pattern.permute.xlu0 0
    %2419 = vperm.xlu0 %2418, %v2393
    %v2420 = vpop.permute.xlu0 %2419
    %2423 = vset.pattern.permute.xlu0 0
    %2424 = vperm.xlu0 %2423, %v2394
    %v2425 = vpop.permute.xlu0 %2424
    %2428 = vset.pattern.permute.xlu0 0
    %2429 = vperm.xlu0 %2428, %v2395
    %v2430 = vpop.permute.xlu0 %2429
    %2433 = vset.pattern.permute.xlu0 0
    %2434 = vperm.xlu0 %2433, %v2396
    %v2435 = vpop.permute.xlu0 %2434
    %v2438 = vsel %vm339, %v2381, 0
    %v2441 = vsel %vm339, %v2382, 0
    %v2444 = vsel %vm339, %v2383, 0
    %v2447 = vsel %vm339, %v2384, 0
    %v2450 = vsel %vm339, %v2385, 0
    %v2453 = vsel %vm339, %v2386, 0
    %v2456 = vsel %vm339, %v2387, 0
    %v2459 = vsel %vm339, %v2388, 0
    %v2462 = vsel %vm364, %v2380, 0
    %2464 = vmatprep.subr.mxu0 0.0
    %2465 = vmatpush1.msra.mxu0 %v2373
    %2466 = vmatprep.subr.mxu0 0.0
    %2467 = vmatpush1.msra.mxu0 %v2374
    %2468 = vmatprep.subr.mxu0 0.0
    %2469 = vmatpush1.msra.mxu0 %v2375
    %2470 = vmatprep.subr.mxu0 0.0
    %2471 = vmatpush1.msra.mxu0 %v2376
    %2472 = vmatprep.subr.mxu0 0.0
    %2473 = vmatpush1.msra.mxu0 %v2377
    %2474 = vmatprep.subr.mxu0 0.0
    %2475 = vmatpush1.msra.mxu0 %v2378
    %2476 = vmatprep.subr.mxu0 0.0
    %2477 = vmatpush1.msra.mxu0 %v2379
    %2478 = vmatprep.subr.mxu0 0.0
    %2479 = vmatpush1.msra.mxu0 %v2462
    %2480 = vmatprep.subr.mxu0 0.0
    %2481 = vmatpush1.msra.mxu0 0.0
    %2482 = vmatprep.subr.mxu0 0.0
    %2483 = vmatpush1.msra.mxu0 0.0
    %2484 = vmatprep.subr.mxu0 0.0
    %2485 = vmatpush1.msra.mxu0 0.0
    %2486 = vmatprep.subr.mxu0 0.0
    %2487 = vmatpush1.msra.mxu0 0.0
    %2488 = vmatprep.subr.mxu0 0.0
    %2489 = vmatpush1.msra.mxu0 0.0
    %2490 = vmatprep.subr.mxu0 0.0
    %2491 = vmatpush1.msra.mxu0 0.0
    %2492 = vmatprep.subr.mxu0 0.0
    %2493 = vmatpush1.msra.mxu0 0.0
    %2494 = vmatprep.subr.mxu0 0.0
    %2495 = vmatpush1.msra.mxu0 0.0
    %2496 = vmatprep.subr.mxu0 0.0
    %2497 = vmatpush1.msra.mxu0 0.0
    %2498 = vmatprep.subr.mxu0 0.0
    %2499 = vmatpush1.msra.mxu0 0.0
    %2500 = vmatprep.subr.mxu0 0.0
    %2501 = vmatpush1.msra.mxu0 0.0
    %2502 = vmatprep.subr.mxu0 0.0
    %2503 = vmatpush1.msra.mxu0 0.0
    %2504 = vmatprep.subr.mxu0 0.0
    %2505 = vmatpush1.msra.mxu0 0.0
    %2506 = vmatprep.subr.mxu0 0.0
    %2507 = vmatpush1.msra.mxu0 0.0
    %2508 = vmatprep.subr.mxu0 0.0
    %2509 = vmatpush1.msra.mxu0 0.0
    %2510 = vmatprep.subr.mxu0 0.0
    %2511 = vmatpush1.msra.mxu0 0.0
    %2512 = vmatprep.subr.mxu0 0.0
    %2513 = vmatpush1.msra.mxu0 0.0
    %2514 = vmatprep.subr.mxu0 0.0
    %2515 = vmatpush1.msra.mxu0 0.0
    %2516 = vmatprep.subr.mxu0 0.0
    %2517 = vmatpush1.msra.mxu0 0.0
    %2518 = vmatprep.subr.mxu0 0.0
    %2519 = vmatpush1.msra.mxu0 0.0
    %2520 = vmatprep.subr.mxu0 0.0
    %2521 = vmatpush1.msra.mxu0 0.0
    %2522 = vmatprep.subr.mxu0 0.0
    %2523 = vmatpush1.msra.mxu0 0.0
    %2524 = vmatprep.subr.mxu0 0.0
    %2525 = vmatpush1.msra.mxu0 0.0
    %2526 = vmatprep.subr.mxu0 0.0
    %2527 = vmatpush1.msra.mxu0 0.0
    %2528 = vmatprep.mubr.f32.mxu0 0.0
    %2529 = vmatmul.mubr.f32.gmra.mrb[0].mxu0 %v2438
    %v2530 = vpop.f32.mrb[0].mxu0
    %v2531 = vadd.f32 %v2400, %v2530
    %v2532 = vpop.f32.mrb[0].mxu0
    %2533 = vmatprep.mubr.f32.mxu0 0.0
    %2534 = vmatmul.mubr.f32.gmra.mrb[0].mxu0 %v2441
    %v2535 = vpop.f32.mrb[0].mxu0
    %v2536 = vadd.f32 %v2405, %v2535
    %v2537 = vpop.f32.mrb[0].mxu0
    %2538 = vmatprep.mubr.f32.mxu0 0.0
    %2539 = vmatmul.mubr.f32.gmra.mrb[0].mxu0 %v2444
    %v2540 = vpop.f32.mrb[0].mxu0
    %v2541 = vadd.f32 %v2410, %v2540
    %v2542 = vpop.f32.mrb[0].mxu0
    %2543 = vmatprep.mubr.f32.mxu0 0.0
    %2544 = vmatmul.mubr.f32.gmra.mrb[0].mxu0 %v2447
    %v2545 = vpop.f32.mrb[0].mxu0
    %v2546 = vadd.f32 %v2415, %v2545
    %v2547 = vpop.f32.mrb[0].mxu0
    %2548 = vmatprep.mubr.f32.mxu0 0.0
    %2549 = vmatmul.mubr.f32.gmra.mrb[0].mxu0 %v2450
    %v2550 = vpop.f32.mrb[0].mxu0
    %v2551 = vadd.f32 %v2420, %v2550
    %v2552 = vpop.f32.mrb[0].mxu0
    %2553 = vmatprep.mubr.f32.mxu0 0.0
    %2554 = vmatmul.mubr.f32.gmra.mrb[0].mxu0 %v2453
    %v2555 = vpop.f32.mrb[0].mxu0
    %v2556 = vadd.f32 %v2425, %v2555
    %v2557 = vpop.f32.mrb[0].mxu0
    %2558 = vmatprep.mubr.f32.mxu0 0.0
    %2559 = vmatmul.mubr.f32.gmra.mrb[0].mxu0 %v2456
    %v2560 = vpop.f32.mrb[0].mxu0
    %v2561 = vadd.f32 %v2430, %v2560
    %v2562 = vpop.f32.mrb[0].mxu0
    %2563 = vmatprep.mubr.f32.mxu0 0.0
    %2564 = vmatmul.mubr.f32.gmra.mrb[0].mxu0 %v2459
    %v2565 = vpop.f32.mrb[0].mxu0
    %v2566 = vadd.f32 %v2435, %v2565
    %v2567 = vpop.f32.mrb[0].mxu0
    %2568 = vdwg.mxu0
    %v2569 = vmax.f32 %v2531, 0.0
    %v2570 = vmax.f32 %v2536, 0.0
    %v2571 = vmax.f32 %v2541, 0.0
    %v2572 = vmax.f32 %v2546, 0.0
    %v2573 = vmax.f32 %v2551, 0.0
    %v2574 = vmax.f32 %v2556, 0.0
    %v2575 = vmax.f32 %v2561, 0.0
    %v2576 = vmax.f32 %v2566, 0.0
    %v2577 = vld [vmem:[%s19] sm:$0xff]
    %v2578 = vld [vmem:[%s19 + $0x8] sm:$0xff]
    %v2579 = vld [vmem:[%s19 + $0x10] sm:$0xff]
    %v2580 = vld [vmem:[%s19 + $0x18] sm:$0xff]
    %v2581 = vld [vmem:[%s19 + $0x20] sm:$0xff]
    %v2582 = vld [vmem:[%s19 + $0x28] sm:$0xff]
    %v2583 = vld [vmem:[%s19 + $0x30] sm:$0xff]
    %v2584 = vld [vmem:[%s19 + $0x38] sm:$0xf]
    %2585 = vset.pattern.permute.xlu0 1
    %2586 = vperm.xlu0 %2585, %v2389
    %v2587 = vpop.permute.xlu0 %2586
    %2589 = vset.pattern.permute.xlu0 1
    %2590 = vperm.xlu0 %2589, %v2390
    %v2591 = vpop.permute.xlu0 %2590
    %2593 = vset.pattern.permute.xlu0 1
    %2594 = vperm.xlu0 %2593, %v2391
    %v2595 = vpop.permute.xlu0 %2594
    %2597 = vset.pattern.permute.xlu0 1
    %2598 = vperm.xlu0 %2597, %v2392
    %v2599 = vpop.permute.xlu0 %2598
    %2601 = vset.pattern.permute.xlu0 1
    %2602 = vperm.xlu0 %2601, %v2393
    %v2603 = vpop.permute.xlu0 %2602
    %2605 = vset.pattern.permute.xlu0 1
    %2606 = vperm.xlu0 %2605, %v2394
    %v2607 = vpop.permute.xlu0 %2606
    %2609 = vset.pattern.permute.xlu0 1
    %2610 = vperm.xlu0 %2609, %v2395
    %v2611 = vpop.permute.xlu0 %2610
    %2613 = vset.pattern.permute.xlu0 1
    %2614 = vperm.xlu0 %2613, %v2396
    %v2615 = vpop.permute.xlu0 %2614
    %v2618 = vsel %vm339, %v2577, 0
    %v2621 = vsel %vm339, %v2578, 0
    %v2624 = vsel %vm339, %v2579, 0
    %v2627 = vsel %vm339, %v2580, 0
    %v2630 = vsel %vm339, %v2581, 0
    %v2633 = vsel %vm339, %v2582, 0
    %v2636 = vsel %vm339, %v2583, 0
    %v2639 = vsel %vm339, %v2584, 0
    %v2642 = vsel %vm364, %v2576, 0
    %2644 = vmatprep.subr.mxu0 0.0
    %2645 = vmatpush1.msra.mxu0 %v2569
    %2646 = vmatprep.subr.mxu0 0.0
    %2647 = vmatpush1.msra.mxu0 %v2570
    %2648 = vmatprep.subr.mxu0 0.0
    %2649 = vmatpush1.msra.mxu0 %v2571
    %2650 = vmatprep.subr.mxu0 0.0
    %2651 = vmatpush1.msra.mxu0 %v2572
    %2652 = vmatprep.subr.mxu0 0.0
    %2653 = vmatpush1.msra.mxu0 %v2573
    %2654 = vmatprep.subr.mxu0 0.0
    %2655 = vmatpush1.msra.mxu0 %v2574
    %2656 = vmatprep.subr.mxu0 0.0
    %2657 = vmatpush1.msra.mxu0 %v2575
    %2658 = vmatprep.subr.mxu0 0.0
    %2659 = vmatpush1.msra.mxu0 %v2642
    %2660 = vmatprep.subr.mxu0 0.0
    %2661 = vmatpush1.msra.mxu0 0.0
    %2662 = vmatprep.subr.mxu0 0.0
    %2663 = vmatpush1.msra.mxu0 0.0
    %2664 = vmatprep.subr.mxu0 0.0
    %2665 = vmatpush1.msra.mxu0 0.0
    %2666 = vmatprep.subr.mxu0 0.0
    %2667 = vmatpush1.msra.mxu0 0.0
    %2668 = vmatprep.subr.mxu0 0.0
    %2669 = vmatpush1.msra.mxu0 0.0
    %2670 = vmatprep.subr.mxu0 0.0
    %2671 = vmatpush1.msra.mxu0 0.0
    %2672 = vmatprep.subr.mxu0 0.0
    %2673 = vmatpush1.msra.mxu0 0.0
    %2674 = vmatprep.subr.mxu0 0.0
    %2675 = vmatpush1.msra.mxu0 0.0
    %2676 = vmatprep.subr.mxu0 0.0
    %2677 = vmatpush1.msra.mxu0 0.0
    %2678 = vmatprep.subr.mxu0 0.0
    %2679 = vmatpush1.msra.mxu0 0.0
    %2680 = vmatprep.subr.mxu0 0.0
    %2681 = vmatpush1.msra.mxu0 0.0
    %2682 = vmatprep.subr.mxu0 0.0
    %2683 = vmatpush1.msra.mxu0 0.0
    %2684 = vmatprep.subr.mxu0 0.0
    %2685 = vmatpush1.msra.mxu0 0.0
    %2686 = vmatprep.subr.mxu0 0.0
    %2687 = vmatpush1.msra.mxu0 0.0
    %2688 = vmatprep.subr.mxu0 0.0
    %2689 = vmatpush1.msra.mxu0 0.0
    %2690 = vmatprep.subr.mxu0 0.0
    %2691 = vmatpush1.msra.mxu0 0.0
    %2692 = vmatprep.subr.mxu0 0.0
    %2693 = vmatpush1.msra.mxu0 0.0
    %2694 = vmatprep.subr.mxu0 0.0
    %2695 = vmatpush1.msra.mxu0 0.0
    %2696 = vmatprep.subr.mxu0 0.0
    %2697 = vmatpush1.msra.mxu0 0.0
    %2698 = vmatprep.subr.mxu0 0.0
    %2699 = vmatpush1.msra.mxu0 0.0
    %2700 = vmatprep.subr.mxu0 0.0
    %2701 = vmatpush1.msra.mxu0 0.0
    %2702 = vmatprep.subr.mxu0 0.0
    %2703 = vmatpush1.msra.mxu0 0.0
    %2704 = vmatprep.subr.mxu0 0.0
    %2705 = vmatpush1.msra.mxu0 0.0
    %2706 = vmatprep.subr.mxu0 0.0
    %2707 = vmatpush1.msra.mxu0 0.0
    %2708 = vmatprep.mubr.f32.mxu0 0.0
    %2709 = vmatmul.mubr.f32.gmra.mrb[0].mxu0 %v2618
    %v2710 = vpop.f32.mrb[0].mxu0
    %v2711 = vadd.f32 %v2587, %v2710
    %v2712 = vpop.f32.mrb[0].mxu0
    %2713 = vmatprep.mubr.f32.mxu0 0.0
    %2714 = vmatmul.mubr.f32.gmra.mrb[0].mxu0 %v2621
    %v2715 = vpop.f32.mrb[0].mxu0
    %v2716 = vadd.f32 %v2591, %v2715
    %v2717 = vpop.f32.mrb[0].mxu0
    %2718 = vmatprep.mubr.f32.mxu0 0.0
    %2719 = vmatmul.mubr.f32.gmra.mrb[0].mxu0 %v2624
    %v2720 = vpop.f32.mrb[0].mxu0
    %v2721 = vadd.f32 %v2595, %v2720
    %v2722 = vpop.f32.mrb[0].mxu0
    %2723 = vmatprep.mubr.f32.mxu0 0.0
    %2724 = vmatmul.mubr.f32.gmra.mrb[0].mxu0 %v2627
    %v2725 = vpop.f32.mrb[0].mxu0
    %v2726 = vadd.f32 %v2599, %v2725
    %v2727 = vpop.f32.mrb[0].mxu0
    %2728 = vmatprep.mubr.f32.mxu0 0.0
    %2729 = vmatmul.mubr.f32.gmra.mrb[0].mxu0 %v2630
    %v2730 = vpop.f32.mrb[0].mxu0
    %v2731 = vadd.f32 %v2603, %v2730
    %v2732 = vpop.f32.mrb[0].mxu0
    %2733 = vmatprep.mubr.f32.mxu0 0.0
    %2734 = vmatmul.mubr.f32.gmra.mrb[0].mxu0 %v2633
    %v2735 = vpop.f32.mrb[0].mxu0
    %v2736 = vadd.f32 %v2607, %v2735
    %v2737 = vpop.f32.mrb[0].mxu0
    %2738 = vmatprep.mubr.f32.mxu0 0.0
    %2739 = vmatmul.mubr.f32.gmra.mrb[0].mxu0 %v2636
    %v2740 = vpop.f32.mrb[0].mxu0
    %v2741 = vadd.f32 %v2611, %v2740
    %v2742 = vpop.f32.mrb[0].mxu0
    %2743 = vmatprep.mubr.f32.mxu0 0.0
    %2744 = vmatmul.mubr.f32.gmra.mrb[0].mxu0 %v2639
    %v2745 = vpop.f32.mrb[0].mxu0
    %v2746 = vadd.f32 %v2615, %v2745
    %v2747 = vpop.f32.mrb[0].mxu0
    %2748 = vdwg.mxu0
    %v2749 = vmax.f32 %v2711, 0.0
    %v2750 = vmax.f32 %v2716, 0.0
    %v2751 = vmax.f32 %v2721, 0.0
    %v2752 = vmax.f32 %v2726, 0.0
    %v2753 = vmax.f32 %v2731, 0.0
    %v2754 = vmax.f32 %v2736, 0.0
    %v2755 = vmax.f32 %v2741, 0.0
    %v2756 = vmax.f32 %v2746, 0.0
    %v2757 = vld [vmem:[%s20] sm:$0xff]
    %v2758 = vld [vmem:[%s20 + $0x8] sm:$0xff]
    %v2759 = vld [vmem:[%s20 + $0x10] sm:$0xff]
    %v2760 = vld [vmem:[%s20 + $0x18] sm:$0xff]
    %v2761 = vld [vmem:[%s20 + $0x20] sm:$0xff]
    %v2762 = vld [vmem:[%s20 + $0x28] sm:$0xff]
    %v2763 = vld [vmem:[%s20 + $0x30] sm:$0xff]
    %v2764 = vld [vmem:[%s20 + $0x38] sm:$0xf]
    %2766 = vset.pattern.permute.xlu0 0
    %2767 = vperm.xlu0 %2766, %v2757
    %v2768 = vpop.permute.xlu0 %2767
    %2771 = vset.pattern.permute.xlu0 0
    %2772 = vperm.xlu0 %2771, %v2758
    %v2773 = vpop.permute.xlu0 %2772
    %2776 = vset.pattern.permute.xlu0 0
    %2777 = vperm.xlu0 %2776, %v2759
    %v2778 = vpop.permute.xlu0 %2777
    %2781 = vset.pattern.permute.xlu0 0
    %2782 = vperm.xlu0 %2781, %v2760
    %v2783 = vpop.permute.xlu0 %2782
    %2786 = vset.pattern.permute.xlu0 0
    %2787 = vperm.xlu0 %2786, %v2761
    %v2788 = vpop.permute.xlu0 %2787
    %2791 = vset.pattern.permute.xlu0 0
    %2792 = vperm.xlu0 %2791, %v2762
    %v2793 = vpop.permute.xlu0 %2792
    %2796 = vset.pattern.permute.xlu0 0
    %2797 = vperm.xlu0 %2796, %v2763
    %v2798 = vpop.permute.xlu0 %2797
    %2801 = vset.pattern.permute.xlu0 0
    %2802 = vperm.xlu0 %2801, %v2764
    %v2803 = vpop.permute.xlu0 %2802
    %v2805 = vmul.f32 %v2768, %v2749
    %v2806 = vmul.f32 %v2773, %v2750
    %v2807 = vmul.f32 %v2778, %v2751
    %v2808 = vmul.f32 %v2783, %v2752
    %v2809 = vmul.f32 %v2788, %v2753
    %v2810 = vmul.f32 %v2793, %v2754
    %v2811 = vmul.f32 %v2798, %v2755
    %v2812 = vmul.f32 %v2803, %v2756
    %v2813 = vadd.f32 %v2805, %v2806
    %v2814 = vadd.f32 %v2813, %v2807
    %v2815 = vadd.f32 %v2814, %v2808
    %v2816 = vadd.f32 %v2815, %v2809
    %v2817 = vadd.f32 %v2816, %v2810
    %v2818 = vadd.f32 %v2817, %v2811
    %v2819 = vsel %vm364, %v2812, 0.0
    %v2820 = vadd.f32 %v2818, %v2819
    %v2821 = vrot.slane %v2820, 4
    %v2822 = vadd.f32 %v2820, %v2821
    %v2823 = vrot.slane %v2822, 2
    %v2824 = vadd.f32 %v2822, %v2823
    %v2825 = vrot.slane %v2824, 1
    %v2826 = vadd.f32 %v2824, %v2825
    %v2827 = vld [vmem:[#allocation3] sm:$0x1]
    %2829 = vset.pattern.permute.xlu0 0
    %2830 = vperm.xlu0 %2829, %v2827
    %v2831 = vpop.permute.xlu0 %2830
    %v2833 = vlaneseq
    %v2834 = vshrl.u32 %v2833, 7
    %v2835 = vsub.s32 0, %v2834
    %v2836 = vrot.slane %v2831, %v2835
    %v2837 = vadd.f32 %v2826, %v2836
    %v2838 = vsub.f32 %v1973, %v2837
    %v2840 = vrot.slane %v2838, 7
    %v2842 = vsel %vm166, %v1148, %v2840
    %2843 = vst [vmem:[#allocation4] sm:$0x3] %v2842
    // Predicated region
    $region98: #{tpu_custom_call.1} parent=1 // pred_check
      _
    $region99: #{tpu_custom_call.1} parent=1 // pred_check_branch
      %2845 = sbr.rel (0) target = $region101
    $region100: #{tpu_custom_call.1} parent=1 // pred_region
      %s2847 = ssub.s32 32, 32
      %2848 = vsyncadd [#allocation5], %s2847
      %s2850 = sshll.u32 [#allocation4], 4
      %s2851 = int_to_ptr.vmem [resolvable:$true] %s2850
      %2853 = dma.vmem_to_hbm [thread:$0]  %s2851, 32, %s24, [#allocation5]
    $region101: #{tpu_custom_call.1} parent=1 // pred_fallthru
      _
    // Predicated region
    $region102: #{tpu_custom_call.1} parent=1 // pred_check
      _
    $region103: #{tpu_custom_call.1} parent=1 // pred_check_branch
      %2855 = sbr.rel (0) target = $region105
    $region104: #{tpu_custom_call.1} parent=1 // pred_region
      %2856 = dma.done [#allocation5], 32
    $region105: #{tpu_custom_call.1} parent=1 // pred_fallthru
      _
    %2857 = vsyncpa [#allocation5], 1

</llo_original>
